<compile_context>
chip_gen: v6e
topology: v6e:2x2x1
jax: 0.10.0
libtpu: 0.0.40
codegen_flags: <defaults>
</compile_context>

<pallas_src>
import jax
import jax.numpy as jnp
from jax.experimental import pallas as pl
from jax.experimental.pallas import tpu as pltpu

THRESH = 0.5   # TODO(synk): `thresh` is not defined in the reference snippet; standard SNN value assumed.
DECAY = 0.2
# `lens` only affects ActFun.backward (surrogate gradient); this is a forward-only kernel.


def ssiamese_forward(params, input1, input2, *, batch_tile=2):
    """input1 / input2: (T, N, H, W, 1) float32. Returns (N, 1) float32."""
    T, N, H, W, _ = input1.shape
    w1 = params["conv1_w"]    # (C1, 1, K1, K1)   PyTorch conv layout
    b1 = params["conv1_b"]    # (C1,)
    w2 = params["conv2_w"]    # (C2, C1, K2, K2)
    b2 = params["conv2_b"]    # (C2,)
    wl = params["liner_w"]    # (HD, F), F ordered (c2, ph2, pw2)  (PyTorch CHW flatten)
    bl = params["liner_b"]    # (HD,)
    wo = params["out_w"]      # (1, HD)
    bo = params["out_b"]      # (1,)

    C1, _, K1, _ = w1.shape
    C2, _, K2, _ = w2.shape
    HD = wl.shape[0]

    OH1, OW1 = H - K1 + 1, W - K1 + 1            # conv1 output spatial
    PH1, PW1 = OH1 // 2, OW1 // 2                # after 2x2 avg pool
    OH2, OW2 = PH1 - K2 + 1, PW1 - K2 + 1        # conv2 output spatial
    PH2, PW2 = OH2 // 2, OW2 // 2                # after 2x2 avg pool
    assert OH1 % 2 == 0 and OW1 % 2 == 0 and OH2 % 2 == 0 and OW2 % 2 == 0
    assert wl.shape[1] == C2 * PH2 * PW2

    B2 = 2 * N                                   # both siamese branches batched together
    TB = batch_tile                              # images per grid tile (parallel axis)
    assert B2 % TB == 0
    NBT = B2 // TB                               # number of batch tiles
    KK1, MP1 = K1 * K1, PH1 * PW1                # conv1 contraction / pooled positions per image
    LW1 = TB * MP1                               # conv1 lane width per grid step
    KKC2, P2 = K2 * K2 * C1, PH2 * PW2           # conv2 contraction / pooled positions per image
    M2 = B2 * P2                                 # conv2 columns, ordered (branch, ph2, pw2, n)

    # ---------------- weight re-layout (once, outside the kernels) ----------------
    w1t = w1.reshape(C1, KK1).astype(jnp.float32)                      # cols ordered (di, dj)
    b1t = b1.reshape(C1, 1).astype(jnp.float32)
    w2t = w2.transpose(0, 2, 3, 1).reshape(C2, KKC2).astype(jnp.float32)   # cols (di, dj, cin)
    b2t = b2.reshape(C2, 1).astype(jnp.float32)
    wlt = wl.reshape(HD, C2, PH2, PW2).transpose(2, 3, 0, 1).reshape(P2, HD, C2).astype(jnp.float32)
    blt = bl.reshape(HD, 1).astype(jnp.float32)
    wot = wo.reshape(1, HD).T.astype(jnp.float32)                      # (HD, 1)
    bot = bo.reshape(1, 1).astype(jnp.float32)

    # ------- conv1 im2col for ALL time steps & both branches (raw input, built once) -------
    # Per batch tile, the lane axis carries (image-in-tile, ph1, pw1); the 2x2 pool cell
    # (i1, j1) is a leading axis of size 4 so the pool is fused in the kernel epilogue.
    x_all = jnp.concatenate([input1[..., 0], input2[..., 0]], axis=1).astype(jnp.float32)  # (T, 2N, H, W)
    cols = []
    for di in range(K1):
        for dj in range(K1):
            cols.append(x_all[:, :, di:di + OH1, dj:dj + OW1])
    p1 = jnp.stack(cols, axis=2)                               # (T, 2N, KK1, OH1, OW1)
    p1 = p1.reshape(T, NBT, TB, KK1, PH1, 2, PW1, 2)           # oh1=(ph1,i1), ow1=(pw1,j1)
    p1 = p1.transpose(0, 1, 5, 7, 3, 2, 4, 6)                  # (T, bt, i1, j1, KK1, TB, PH1, PW1)
    p1 = p1.reshape(T, NBT, 4, KK1, LW1)

    # ---------------- kernel A: conv1 + mem update + spike + fused 2x2 pool ----------------
    def conv1_kernel(p_ref, w_ref, b_ref, o_ref, mem_ref, spk_ref):
        t = pl.program_id(1)

        @pl.when(t == 0)
        def _():
            mem_ref[...] = jnp.zeros_like(mem_ref)
            spk_ref[...] = jnp.zeros_like(spk_ref)

        pooled = jnp.zeros((C1, LW1), jnp.float32)
        for g in range(4):                         # 2x2 pool cell as a leading axis
            z = jnp.dot(w_ref[...], p_ref[0, 0, g],
                        preferred_element_type=jnp.float32) + b_ref[...]
            m = mem_ref[g] * DECAY * (1.0 - spk_ref[g]) + z
            s = (m > THRESH).astype(jnp.float32)
            mem_ref[g] = m
            spk_ref[g] = s
            pooled = pooled + 0.25 * s             # F.avg_pool2d(spike, 2) fused in epilogue
        o_ref[0, 0] = pooled

    pooled1 = pl.pallas_call(
        conv1_kernel,
        out_shape=jax.ShapeDtypeStruct((T, NBT, C1, LW1), jnp.float32),
        grid_spec=pltpu.PrefetchScalarGridSpec(
            num_scalar_prefetch=0,
            grid=(NBT, T),
            in_specs=[
                pl.BlockSpec((1, 1, 4, KK1, LW1), lambda b, t: (t, b, 0, 0, 0)),
                pl.BlockSpec((C1, KK1), lambda b, t: (0, 0)),
                pl.BlockSpec((C1, 1), lambda b, t: (0, 0)),
            ],
            out_specs=pl.BlockSpec((1, 1, C1, LW1), lambda b, t: (t, b, 0, 0)),
            scratch_shapes=[pltpu.VMEM((4, C1, LW1), jnp.float32),
                            pltpu.VMEM((4, C1, LW1), jnp.float32)],
        ),
        compiler_params=pltpu.CompilerParams(
            dimension_semantics=("parallel", "arbitrary")),
    )(p1, w1t, b1t)                                 # (T, NBT, C1, TB*MP1), lanes (i, ph1, pw1)

    # --------- conv2 im2col on the pooled conv1 spikes (all T at once, small maps) ---------
    q = pooled1.reshape(T, NBT, C1, TB, PH1, PW1)
    q = q.transpose(0, 1, 3, 2, 4, 5).reshape(T, 2, N, C1, PH1, PW1)   # (T, branch, n, C1, PH1, PW1)
    cols = []
    for di in range(K2):
        for dj in range(K2):
            cols.append(q[:, :, :, :, di:di + OH2, dj:dj + OW2])
    p2 = jnp.stack(cols, axis=3)                    # (T, br, n, KK2, C1, OH2, OW2)
    p2 = p2.reshape(T, 2, N, K2 * K2, C1, PH2, 2, PW2, 2)
    p2 = p2.transpose(0, 6, 8, 3, 4, 1, 5, 7, 2)    # (T, i2, j2, KK2, C1, br, PH2, PW2, n)
    p2 = p2.reshape(T, 4, KKC2, M2)

    # -------- kernel B: conv2 + pool + |x2-x1| + liner + spike + out, accumulated over T --------
    def head_kernel(p_ref, w2_ref, b2_ref, wl_ref, bl_ref, wo_ref, bo_ref, out_ref,
                    mem2_ref, spk2_ref, memh_ref, spkh_ref):
        t = pl.program_id(0)

        @pl.when(t == 0)
        def _():
            mem2_ref[...] = jnp.zeros_like(mem2_ref)
            spk2_ref[...] = jnp.zeros_like(spk2_ref)
            memh_ref[...] = jnp.zeros_like(memh_ref)
            spkh_ref[...] = jnp.zeros_like(spkh_ref)
            out_ref[...] = jnp.zeros_like(out_ref)

        # conv2 + membrane update + spike; 2x2 avg-pool fused over the 4 pool groups
        pooled = jnp.zeros((C2, M2), jnp.float32)
        for g in range(4):
            z = jnp.dot(w2_ref[...], p_ref[0, g],
                        preferred_element_type=jnp.float32) + b2_ref[...]
            m = mem2_ref[g] * DECAY * (1.0 - spk2_ref[g]) + z
            s = (m > THRESH).astype(jnp.float32)
            mem2_ref[g] = m
            spk2_ref[g] = s
            pooled = pooled + 0.25 * s               # cols ordered (branch, ph2, pw2, n)

        # siamese branch split + |x2 - x1|
        half = N * P2
        diff = jnp.abs(pooled[:, half:] - pooled[:, :half])     # (C2, P2*N), cols (p, n)

        # liner: contract over (c2, p) with one small matmul per pooled spatial position p
        acc = jnp.zeros((HD, N), jnp.float32)
        for p in range(P2):
            acc = acc + jnp.dot(wl_ref[p], diff[:, p * N:(p + 1) * N],
                                preferred_element_type=jnp.float32)
        zl = acc + bl_ref[...]
        mh = memh_ref[...] * DECAY * (1.0 - spkh_ref[...]) + zl
        sh = (mh > THRESH).astype(jnp.float32)
        memh_ref[...] = mh
        spkh_ref[...] = sh

        # out layer as a VPU multiply + sublane reduction (no 1-column MXU matmul),
        # accumulated over T into the resident output block.
        contrib = jnp.sum(sh * wo_ref[...], axis=0, keepdims=True) + bo_ref[...]   # (1, N)
        out_ref[...] = out_ref[...] + contrib

    out = pl.pallas_call(
        head_kernel,
        out_shape=jax.ShapeDtypeStruct((1, N), jnp.float32),
        grid_spec=pltpu.PrefetchScalarGridSpec(
            num_scalar_prefetch=0,
            grid=(T,),
            in_specs=[
                pl.BlockSpec((1, 4, KKC2, M2), lambda t: (t, 0, 0, 0)),
                pl.BlockSpec((C2, KKC2), lambda t: (0, 0)),
                pl.BlockSpec((C2, 1), lambda t: (0, 0)),
                pl.BlockSpec((P2, HD, C2), lambda t: (0, 0, 0)),
                pl.BlockSpec((HD, 1), lambda t: (0, 0)),
                pl.BlockSpec((HD, 1), lambda t: (0, 0)),
                pl.BlockSpec((1, 1), lambda t: (0, 0)),
            ],
            out_specs=pl.BlockSpec((1, N), lambda t: (0, 0)),
            scratch_shapes=[pltpu.VMEM((4, C2, M2), jnp.float32),
                            pltpu.VMEM((4, C2, M2), jnp.float32),
                            pltpu.VMEM((HD, N), jnp.float32),
                            pltpu.VMEM((HD, N), jnp.float32)],
        ),
        compiler_params=pltpu.CompilerParams(
            dimension_semantics=("arbitrary",)),
    )(p2, w2t, b2t, wlt, blt, wot, bot)              # (1, N)

    return out.T                                     # (N, 1)


if __name__ == "__main__":
    # Small shapes consistent with the module's architecture:
    #   conv1: 1->C1, k=10 ; avgpool 2 ; conv2: C1->C2, k=7 ; avgpool 2 ; liner -> HD ; out -> 1
    T, N, H, W = 2, 2, 29, 29
    C1, C2, HD = 8, 16, 32
    K1, K2 = 10, 7
    OH1 = H - K1 + 1          # 20
    PH1 = OH1 // 2            # 10
    OH2 = PH1 - K2 + 1        # 4
    PH2 = OH2 // 2            # 2
    F = C2 * PH2 * PH2        # 64 flattened features fed to `liner` (CHW order, as in PyTorch)

    key = jax.random.PRNGKey(0)
    ks = jax.random.split(key, 10)
    params = dict(
        conv1_w=0.10 * jax.random.normal(ks[0], (C1, 1, K1, K1), jnp.float32),
        conv1_b=0.10 * jax.random.normal(ks[1], (C1,), jnp.float32),
        conv2_w=0.05 * jax.random.normal(ks[2], (C2, C1, K2, K2), jnp.float32),
        conv2_b=0.10 * jax.random.normal(ks[3], (C2,), jnp.float32),
        liner_w=0.05 * jax.random.normal(ks[4], (HD, F), jnp.float32),
        liner_b=0.10 * jax.random.normal(ks[5], (HD,), jnp.float32),
        out_w=0.10 * jax.random.normal(ks[6], (1, HD), jnp.float32),
        out_b=0.10 * jax.random.normal(ks[7], (1,), jnp.float32),
    )

    input1 = jax.random.uniform(ks[8], (T, N, H, W, 1), jnp.float32)
    input2 = jax.random.uniform(ks[9], (T, N, H, W, 1), jnp.float32)

    out = jax.jit(ssiamese_forward)(params, input1, input2)
    jax.block_until_ready(out)
    assert out.shape == (N, 1) and out.dtype == jnp.float32
    print("KERNEL_OK")
</pallas_src>

<mosaic_0001>
module attributes {stable_mosaic.version = 11 : i64} {
  func.func @conv1_kernel(%arg0: i32, %arg1: i32, %arg2: memref<1x1x4x100x200xf32, #tpu.memory_space<vmem>>, %arg3: memref<8x100xf32, #tpu.memory_space<vmem>>, %arg4: memref<8x1xf32, #tpu.memory_space<vmem>>, %arg5: memref<1x1x8x200xf32, #tpu.memory_space<vmem>>, %arg6: memref<4x8x200xf32, #tpu.memory_space<vmem>>, %arg7: memref<4x8x200xf32, #tpu.memory_space<vmem>>) attributes {dimension_semantics = [#tpu.dimension_semantics<parallel>, #tpu.dimension_semantics<arbitrary>], iteration_bounds = array<i64: 2, 2>, scalar_prefetch = 0 : i64, scratch_operands = 2 : i64, tpu.core_type = #tpu.core_type<tc>, window_params = [{transform_indices = @transform_0, window_bounds = array<i64: 1, 1, 4, 100, 200>}, {pipeline_mode = #tpu.pipeline_mode<synchronous>, transform_indices = @transform_1, window_bounds = array<i64: 8, 100>}, {pipeline_mode = #tpu.pipeline_mode<synchronous>, transform_indices = @transform_2, window_bounds = array<i64: 8, 1>}, {transform_indices = @transform_3, window_bounds = array<i64: 1, 1, 8, 200>}]} {
    %c0_i32 = arith.constant 0 : i32
    %0 = arith.cmpi eq, %arg1, %c0_i32 : i32
    %1 = arith.extui %0 : i1 to i32
    %c0_i32_0 = arith.constant 0 : i32
    %2 = arith.cmpi ne, %1, %c0_i32_0 : i32
    scf.if %2 {
      %cst_105 = arith.constant 0.000000e+00 : f32
      %127 = vector.broadcast %cst_105 : f32 to vector<4x8x200xf32>
      %c0_106 = arith.constant 0 : index
      %c0_107 = arith.constant 0 : index
      %c0_108 = arith.constant 0 : index
      %128 = vector.load %arg6[%c0_106, %c0_107, %c0_108] : memref<4x8x200xf32, #tpu.memory_space<vmem>>, vector<4x8x200xf32>
      tpu.vector_store %arg6[%c0_106, %c0_107, %c0_108], %127 {strides = array<i32>} : memref<4x8x200xf32, #tpu.memory_space<vmem>>, vector<4x8x200xf32>,
      %cst_109 = arith.constant 0.000000e+00 : f32
      %129 = vector.broadcast %cst_109 : f32 to vector<4x8x200xf32>
      %c0_110 = arith.constant 0 : index
      %c0_111 = arith.constant 0 : index
      %c0_112 = arith.constant 0 : index
      %130 = vector.load %arg7[%c0_110, %c0_111, %c0_112] : memref<4x8x200xf32, #tpu.memory_space<vmem>>, vector<4x8x200xf32>
      tpu.vector_store %arg7[%c0_110, %c0_111, %c0_112], %129 {strides = array<i32>} : memref<4x8x200xf32, #tpu.memory_space<vmem>>, vector<4x8x200xf32>,
    } else {
    }
    %cst = arith.constant 0.000000e+00 : f32
    %3 = vector.broadcast %cst : f32 to vector<8x200xf32>
    %c0 = arith.constant 0 : index
    %c0_1 = arith.constant 0 : index
    %4 = vector.load %arg3[%c0, %c0_1] : memref<8x100xf32, #tpu.memory_space<vmem>>, vector<8x100xf32>
    %c0_2 = arith.constant 0 : index
    %c0_3 = arith.constant 0 : index
    %c0_4 = arith.constant 0 : index
    %c0_5 = arith.constant 0 : index
    %c0_6 = arith.constant 0 : index
    %5 = vector.load %arg2[%c0_2, %c0_3, %c0_4, %c0_5, %c0_6] : memref<1x1x4x100x200xf32, #tpu.memory_space<vmem>>, vector<1x1x1x100x200xf32>
    %6 = vector.shape_cast %5 : vector<1x1x1x100x200xf32> to vector<100x200xf32>
    %cst_7 = arith.constant dense<0.000000e+00> : vector<8x200xf32>
    %7 = tpu.matmul %4, %6, %cst_7 {dimension_numbers = #tpu.dot_dimension_numbers<[1], [0], [0], [1], [0, 0, 1, 1], [], []>} : vector<8x100xf32>, vector<100x200xf32>, vector<8x200xf32> -> vector<8x200xf32>
    %c0_8 = arith.constant 0 : index
    %c0_9 = arith.constant 0 : index
    %8 = vector.load %arg4[%c0_8, %c0_9] : memref<8x1xf32, #tpu.memory_space<vmem>>, vector<8x1xf32>
    %9 = vector.broadcast %8 : vector<8x1xf32> to vector<8x200xf32>
    %10 = arith.addf %7, %9 : vector<8x200xf32>
    %c0_10 = arith.constant 0 : index
    %c0_11 = arith.constant 0 : index
    %c0_12 = arith.constant 0 : index
    %11 = vector.load %arg6[%c0_10, %c0_11, %c0_12] : memref<4x8x200xf32, #tpu.memory_space<vmem>>, vector<1x8x200xf32>
    %12 = vector.shape_cast %11 : vector<1x8x200xf32> to vector<8x200xf32>
    %cst_13 = arith.constant 2.000000e-01 : f32
    %13 = vector.broadcast %cst_13 : f32 to vector<8x200xf32>
    %14 = arith.mulf %12, %13 : vector<8x200xf32>
    %c0_14 = arith.constant 0 : index
    %c0_15 = arith.constant 0 : index
    %c0_16 = arith.constant 0 : index
    %15 = vector.load %arg7[%c0_14, %c0_15, %c0_16] : memref<4x8x200xf32, #tpu.memory_space<vmem>>, vector<1x8x200xf32>
    %16 = vector.shape_cast %15 : vector<1x8x200xf32> to vector<8x200xf32>
    %cst_17 = arith.constant 1.000000e+00 : f32
    %17 = vector.broadcast %cst_17 : f32 to vector<8x200xf32>
    %18 = arith.subf %17, %16 : vector<8x200xf32>
    %19 = arith.mulf %14, %18 : vector<8x200xf32>
    %20 = arith.addf %19, %10 : vector<8x200xf32>
    %cst_18 = arith.constant 5.000000e-01 : f32
    %21 = vector.broadcast %cst_18 : f32 to vector<8x200xf32>
    %22 = arith.cmpf ogt, %20, %21 : vector<8x200xf32>
    %23 = arith.extui %22 : vector<8x200xi1> to vector<8x200xi32>
    %24 = arith.sitofp %23 : vector<8x200xi32> to vector<8x200xf32>
    %c0_19 = arith.constant 0 : index
    %c0_20 = arith.constant 0 : index
    %c0_21 = arith.constant 0 : index
    %25 = vector.load %arg6[%c0_19, %c0_20, %c0_21] : memref<4x8x200xf32, #tpu.memory_space<vmem>>, vector<1x8x200xf32>
    %26 = vector.shape_cast %25 : vector<1x8x200xf32> to vector<8x200xf32>
    %27 = vector.shape_cast %20 : vector<8x200xf32> to vector<1x8x200xf32>
    tpu.vector_store %arg6[%c0_19, %c0_20, %c0_21], %27 {strides = array<i32>} : memref<4x8x200xf32, #tpu.memory_space<vmem>>, vector<1x8x200xf32>,
    %c0_22 = arith.constant 0 : index
    %c0_23 = arith.constant 0 : index
    %c0_24 = arith.constant 0 : index
    %28 = vector.load %arg7[%c0_22, %c0_23, %c0_24] : memref<4x8x200xf32, #tpu.memory_space<vmem>>, vector<1x8x200xf32>
    %29 = vector.shape_cast %28 : vector<1x8x200xf32> to vector<8x200xf32>
    %30 = vector.shape_cast %24 : vector<8x200xf32> to vector<1x8x200xf32>
    tpu.vector_store %arg7[%c0_22, %c0_23, %c0_24], %30 {strides = array<i32>} : memref<4x8x200xf32, #tpu.memory_space<vmem>>, vector<1x8x200xf32>,
    %cst_25 = arith.constant 2.500000e-01 : f32
    %31 = vector.broadcast %cst_25 : f32 to vector<8x200xf32>
    %32 = arith.mulf %31, %24 : vector<8x200xf32>
    %33 = arith.addf %3, %32 : vector<8x200xf32>
    %c0_26 = arith.constant 0 : index
    %c0_27 = arith.constant 0 : index
    %34 = vector.load %arg3[%c0_26, %c0_27] : memref<8x100xf32, #tpu.memory_space<vmem>>, vector<8x100xf32>
    %c0_28 = arith.constant 0 : index
    %c0_29 = arith.constant 0 : index
    %c1 = arith.constant 1 : index
    %c0_30 = arith.constant 0 : index
    %c0_31 = arith.constant 0 : index
    %35 = vector.load %arg2[%c0_28, %c0_29, %c1, %c0_30, %c0_31] : memref<1x1x4x100x200xf32, #tpu.memory_space<vmem>>, vector<1x1x1x100x200xf32>
    %36 = vector.shape_cast %35 : vector<1x1x1x100x200xf32> to vector<100x200xf32>
    %cst_32 = arith.constant dense<0.000000e+00> : vector<8x200xf32>
    %37 = tpu.matmul %34, %36, %cst_32 {dimension_numbers = #tpu.dot_dimension_numbers<[1], [0], [0], [1], [0, 0, 1, 1], [], []>} : vector<8x100xf32>, vector<100x200xf32>, vector<8x200xf32> -> vector<8x200xf32>
    %c0_33 = arith.constant 0 : index
    %c0_34 = arith.constant 0 : index
    %38 = vector.load %arg4[%c0_33, %c0_34] : memref<8x1xf32, #tpu.memory_space<vmem>>, vector<8x1xf32>
    %39 = vector.broadcast %38 : vector<8x1xf32> to vector<8x200xf32>
    %40 = arith.addf %37, %39 : vector<8x200xf32>
    %c1_35 = arith.constant 1 : index
    %c0_36 = arith.constant 0 : index
    %c0_37 = arith.constant 0 : index
    %41 = vector.load %arg6[%c1_35, %c0_36, %c0_37] : memref<4x8x200xf32, #tpu.memory_space<vmem>>, vector<1x8x200xf32>
    %42 = vector.shape_cast %41 : vector<1x8x200xf32> to vector<8x200xf32>
    %cst_38 = arith.constant 2.000000e-01 : f32
    %43 = vector.broadcast %cst_38 : f32 to vector<8x200xf32>
    %44 = arith.mulf %42, %43 : vector<8x200xf32>
    %c1_39 = arith.constant 1 : index
    %c0_40 = arith.constant 0 : index
    %c0_41 = arith.constant 0 : index
    %45 = vector.load %arg7[%c1_39, %c0_40, %c0_41] : memref<4x8x200xf32, #tpu.memory_space<vmem>>, vector<1x8x200xf32>
    %46 = vector.shape_cast %45 : vector<1x8x200xf32> to vector<8x200xf32>
    %cst_42 = arith.constant 1.000000e+00 : f32
    %47 = vector.broadcast %cst_42 : f32 to vector<8x200xf32>
    %48 = arith.subf %47, %46 : vector<8x200xf32>
    %49 = arith.mulf %44, %48 : vector<8x200xf32>
    %50 = arith.addf %49, %40 : vector<8x200xf32>
    %cst_43 = arith.constant 5.000000e-01 : f32
    %51 = vector.broadcast %cst_43 : f32 to vector<8x200xf32>
    %52 = arith.cmpf ogt, %50, %51 : vector<8x200xf32>
    %53 = arith.extui %52 : vector<8x200xi1> to vector<8x200xi32>
    %54 = arith.sitofp %53 : vector<8x200xi32> to vector<8x200xf32>
    %c1_44 = arith.constant 1 : index
    %c0_45 = arith.constant 0 : index
    %c0_46 = arith.constant 0 : index
    %55 = vector.load %arg6[%c1_44, %c0_45, %c0_46] : memref<4x8x200xf32, #tpu.memory_space<vmem>>, vector<1x8x200xf32>
    %56 = vector.shape_cast %55 : vector<1x8x200xf32> to vector<8x200xf32>
    %57 = vector.shape_cast %50 : vector<8x200xf32> to vector<1x8x200xf32>
    tpu.vector_store %arg6[%c1_44, %c0_45, %c0_46], %57 {strides = array<i32>} : memref<4x8x200xf32, #tpu.memory_space<vmem>>, vector<1x8x200xf32>,
    %c1_47 = arith.constant 1 : index
    %c0_48 = arith.constant 0 : index
    %c0_49 = arith.constant 0 : index
    %58 = vector.load %arg7[%c1_47, %c0_48, %c0_49] : memref<4x8x200xf32, #tpu.memory_space<vmem>>, vector<1x8x200xf32>
    %59 = vector.shape_cast %58 : vector<1x8x200xf32> to vector<8x200xf32>
    %60 = vector.shape_cast %54 : vector<8x200xf32> to vector<1x8x200xf32>
    tpu.vector_store %arg7[%c1_47, %c0_48, %c0_49], %60 {strides = array<i32>} : memref<4x8x200xf32, #tpu.memory_space<vmem>>, vector<1x8x200xf32>,
    %cst_50 = arith.constant 2.500000e-01 : f32
    %61 = vector.broadcast %cst_50 : f32 to vector<8x200xf32>
    %62 = arith.mulf %61, %54 : vector<8x200xf32>
    %63 = arith.addf %33, %62 : vector<8x200xf32>
    %c0_51 = arith.constant 0 : index
    %c0_52 = arith.constant 0 : index
    %64 = vector.load %arg3[%c0_51, %c0_52] : memref<8x100xf32, #tpu.memory_space<vmem>>, vector<8x100xf32>
    %c0_53 = arith.constant 0 : index
    %c0_54 = arith.constant 0 : index
    %c2 = arith.constant 2 : index
    %c0_55 = arith.constant 0 : index
    %c0_56 = arith.constant 0 : index
    %65 = vector.load %arg2[%c0_53, %c0_54, %c2, %c0_55, %c0_56] : memref<1x1x4x100x200xf32, #tpu.memory_space<vmem>>, vector<1x1x1x100x200xf32>
    %66 = vector.shape_cast %65 : vector<1x1x1x100x200xf32> to vector<100x200xf32>
    %cst_57 = arith.constant dense<0.000000e+00> : vector<8x200xf32>
    %67 = tpu.matmul %64, %66, %cst_57 {dimension_numbers = #tpu.dot_dimension_numbers<[1], [0], [0], [1], [0, 0, 1, 1], [], []>} : vector<8x100xf32>, vector<100x200xf32>, vector<8x200xf32> -> vector<8x200xf32>
    %c0_58 = arith.constant 0 : index
    %c0_59 = arith.constant 0 : index
    %68 = vector.load %arg4[%c0_58, %c0_59] : memref<8x1xf32, #tpu.memory_space<vmem>>, vector<8x1xf32>
    %69 = vector.broadcast %68 : vector<8x1xf32> to vector<8x200xf32>
    %70 = arith.addf %67, %69 : vector<8x200xf32>
    %c2_60 = arith.constant 2 : index
    %c0_61 = arith.constant 0 : index
    %c0_62 = arith.constant 0 : index
    %71 = vector.load %arg6[%c2_60, %c0_61, %c0_62] : memref<4x8x200xf32, #tpu.memory_space<vmem>>, vector<1x8x200xf32>
    %72 = vector.shape_cast %71 : vector<1x8x200xf32> to vector<8x200xf32>
    %cst_63 = arith.constant 2.000000e-01 : f32
    %73 = vector.broadcast %cst_63 : f32 to vector<8x200xf32>
    %74 = arith.mulf %72, %73 : vector<8x200xf32>
    %c2_64 = arith.constant 2 : index
    %c0_65 = arith.constant 0 : index
    %c0_66 = arith.constant 0 : index
    %75 = vector.load %arg7[%c2_64, %c0_65, %c0_66] : memref<4x8x200xf32, #tpu.memory_space<vmem>>, vector<1x8x200xf32>
    %76 = vector.shape_cast %75 : vector<1x8x200xf32> to vector<8x200xf32>
    %cst_67 = arith.constant 1.000000e+00 : f32
    %77 = vector.broadcast %cst_67 : f32 to vector<8x200xf32>
    %78 = arith.subf %77, %76 : vector<8x200xf32>
    %79 = arith.mulf %74, %78 : vector<8x200xf32>
    %80 = arith.addf %79, %70 : vector<8x200xf32>
    %cst_68 = arith.constant 5.000000e-01 : f32
    %81 = vector.broadcast %cst_68 : f32 to vector<8x200xf32>
    %82 = arith.cmpf ogt, %80, %81 : vector<8x200xf32>
    %83 = arith.extui %82 : vector<8x200xi1> to vector<8x200xi32>
    %84 = arith.sitofp %83 : vector<8x200xi32> to vector<8x200xf32>
    %c2_69 = arith.constant 2 : index
    %c0_70 = arith.constant 0 : index
    %c0_71 = arith.constant 0 : index
    %85 = vector.load %arg6[%c2_69, %c0_70, %c0_71] : memref<4x8x200xf32, #tpu.memory_space<vmem>>, vector<1x8x200xf32>
    %86 = vector.shape_cast %85 : vector<1x8x200xf32> to vector<8x200xf32>
    %87 = vector.shape_cast %80 : vector<8x200xf32> to vector<1x8x200xf32>
    tpu.vector_store %arg6[%c2_69, %c0_70, %c0_71], %87 {strides = array<i32>} : memref<4x8x200xf32, #tpu.memory_space<vmem>>, vector<1x8x200xf32>,
    %c2_72 = arith.constant 2 : index
    %c0_73 = arith.constant 0 : index
    %c0_74 = arith.constant 0 : index
    %88 = vector.load %arg7[%c2_72, %c0_73, %c0_74] : memref<4x8x200xf32, #tpu.memory_space<vmem>>, vector<1x8x200xf32>
    %89 = vector.shape_cast %88 : vector<1x8x200xf32> to vector<8x200xf32>
    %90 = vector.shape_cast %84 : vector<8x200xf32> to vector<1x8x200xf32>
    tpu.vector_store %arg7[%c2_72, %c0_73, %c0_74], %90 {strides = array<i32>} : memref<4x8x200xf32, #tpu.memory_space<vmem>>, vector<1x8x200xf32>,
    %cst_75 = arith.constant 2.500000e-01 : f32
    %91 = vector.broadcast %cst_75 : f32 to vector<8x200xf32>
    %92 = arith.mulf %91, %84 : vector<8x200xf32>
    %93 = arith.addf %63, %92 : vector<8x200xf32>
    %c0_76 = arith.constant 0 : index
    %c0_77 = arith.constant 0 : index
    %94 = vector.load %arg3[%c0_76, %c0_77] : memref<8x100xf32, #tpu.memory_space<vmem>>, vector<8x100xf32>
    %c0_78 = arith.constant 0 : index
    %c0_79 = arith.constant 0 : index
    %c3 = arith.constant 3 : index
    %c0_80 = arith.constant 0 : index
    %c0_81 = arith.constant 0 : index
    %95 = vector.load %arg2[%c0_78, %c0_79, %c3, %c0_80, %c0_81] : memref<1x1x4x100x200xf32, #tpu.memory_space<vmem>>, vector<1x1x1x100x200xf32>
    %96 = vector.shape_cast %95 : vector<1x1x1x100x200xf32> to vector<100x200xf32>
    %cst_82 = arith.constant dense<0.000000e+00> : vector<8x200xf32>
    %97 = tpu.matmul %94, %96, %cst_82 {dimension_numbers = #tpu.dot_dimension_numbers<[1], [0], [0], [1], [0, 0, 1, 1], [], []>} : vector<8x100xf32>, vector<100x200xf32>, vector<8x200xf32> -> vector<8x200xf32>
    %c0_83 = arith.constant 0 : index
    %c0_84 = arith.constant 0 : index
    %98 = vector.load %arg4[%c0_83, %c0_84] : memref<8x1xf32, #tpu.memory_space<vmem>>, vector<8x1xf32>
    %99 = vector.broadcast %98 : vector<8x1xf32> to vector<8x200xf32>
    %100 = arith.addf %97, %99 : vector<8x200xf32>
    %c3_85 = arith.constant 3 : index
    %c0_86 = arith.constant 0 : index
    %c0_87 = arith.constant 0 : index
    %101 = vector.load %arg6[%c3_85, %c0_86, %c0_87] : memref<4x8x200xf32, #tpu.memory_space<vmem>>, vector<1x8x200xf32>
    %102 = vector.shape_cast %101 : vector<1x8x200xf32> to vector<8x200xf32>
    %cst_88 = arith.constant 2.000000e-01 : f32
    %103 = vector.broadcast %cst_88 : f32 to vector<8x200xf32>
    %104 = arith.mulf %102, %103 : vector<8x200xf32>
    %c3_89 = arith.constant 3 : index
    %c0_90 = arith.constant 0 : index
    %c0_91 = arith.constant 0 : index
    %105 = vector.load %arg7[%c3_89, %c0_90, %c0_91] : memref<4x8x200xf32, #tpu.memory_space<vmem>>, vector<1x8x200xf32>
    %106 = vector.shape_cast %105 : vector<1x8x200xf32> to vector<8x200xf32>
    %cst_92 = arith.constant 1.000000e+00 : f32
    %107 = vector.broadcast %cst_92 : f32 to vector<8x200xf32>
    %108 = arith.subf %107, %106 : vector<8x200xf32>
    %109 = arith.mulf %104, %108 : vector<8x200xf32>
    %110 = arith.addf %109, %100 : vector<8x200xf32>
    %cst_93 = arith.constant 5.000000e-01 : f32
    %111 = vector.broadcast %cst_93 : f32 to vector<8x200xf32>
    %112 = arith.cmpf ogt, %110, %111 : vector<8x200xf32>
    %113 = arith.extui %112 : vector<8x200xi1> to vector<8x200xi32>
    %114 = arith.sitofp %113 : vector<8x200xi32> to vector<8x200xf32>
    %c3_94 = arith.constant 3 : index
    %c0_95 = arith.constant 0 : index
    %c0_96 = arith.constant 0 : index
    %115 = vector.load %arg6[%c3_94, %c0_95, %c0_96] : memref<4x8x200xf32, #tpu.memory_space<vmem>>, vector<1x8x200xf32>
    %116 = vector.shape_cast %115 : vector<1x8x200xf32> to vector<8x200xf32>
    %117 = vector.shape_cast %110 : vector<8x200xf32> to vector<1x8x200xf32>
    tpu.vector_store %arg6[%c3_94, %c0_95, %c0_96], %117 {strides = array<i32>} : memref<4x8x200xf32, #tpu.memory_space<vmem>>, vector<1x8x200xf32>,
    %c3_97 = arith.constant 3 : index
    %c0_98 = arith.constant 0 : index
    %c0_99 = arith.constant 0 : index
    %118 = vector.load %arg7[%c3_97, %c0_98, %c0_99] : memref<4x8x200xf32, #tpu.memory_space<vmem>>, vector<1x8x200xf32>
    %119 = vector.shape_cast %118 : vector<1x8x200xf32> to vector<8x200xf32>
    %120 = vector.shape_cast %114 : vector<8x200xf32> to vector<1x8x200xf32>
    tpu.vector_store %arg7[%c3_97, %c0_98, %c0_99], %120 {strides = array<i32>} : memref<4x8x200xf32, #tpu.memory_space<vmem>>, vector<1x8x200xf32>,
    %cst_100 = arith.constant 2.500000e-01 : f32
    %121 = vector.broadcast %cst_100 : f32 to vector<8x200xf32>
    %122 = arith.mulf %121, %114 : vector<8x200xf32>
    %123 = arith.addf %93, %122 : vector<8x200xf32>
    %c0_101 = arith.constant 0 : index
    %c0_102 = arith.constant 0 : index
    %c0_103 = arith.constant 0 : index
    %c0_104 = arith.constant 0 : index
    %124 = vector.load %arg5[%c0_101, %c0_102, %c0_103, %c0_104] : memref<1x1x8x200xf32, #tpu.memory_space<vmem>>, vector<1x1x8x200xf32>
    %125 = vector.shape_cast %124 : vector<1x1x8x200xf32> to vector<8x200xf32>
    %126 = vector.shape_cast %123 : vector<8x200xf32> to vector<1x1x8x200xf32>
    tpu.vector_store %arg5[%c0_101, %c0_102, %c0_103, %c0_104], %126 {strides = array<i32>} : memref<1x1x8x200xf32, #tpu.memory_space<vmem>>, vector<1x1x8x200xf32>,
    return
  }
  func.func @transform_0(%arg0: i32, %arg1: i32) -> (i32, i32, i32, i32, i32) {
    %c0_i32 = arith.constant 0 : i32
    %c0_i32_0 = arith.constant 0 : i32
    %c0_i32_1 = arith.constant 0 : i32
    %c0_i32_2 = arith.constant 0 : i32
    return %arg1, %arg0, %c0_i32, %c0_i32_0, %c0_i32_1 : i32, i32, i32, i32, i32
  }
  func.func @transform_1(%arg0: i32, %arg1: i32) -> (i32, i32) {
    %c0_i32 = arith.constant 0 : i32
    %c0_i32_0 = arith.constant 0 : i32
    %c0_i32_1 = arith.constant 0 : i32
    return %c0_i32, %c0_i32_0 : i32, i32
  }
  func.func @transform_2(%arg0: i32, %arg1: i32) -> (i32, i32) {
    %c0_i32 = arith.constant 0 : i32
    %c0_i32_0 = arith.constant 0 : i32
    %c0_i32_1 = arith.constant 0 : i32
    return %c0_i32, %c0_i32_0 : i32, i32
  }
  func.func @transform_3(%arg0: i32, %arg1: i32) -> (i32, i32, i32, i32) {
    %c0_i32 = arith.constant 0 : i32
    %c0_i32_0 = arith.constant 0 : i32
    %c0_i32_1 = arith.constant 0 : i32
    return %arg1, %arg0, %c0_i32, %c0_i32_0 : i32, i32, i32, i32
  }
}

module attributes {stable_mosaic.version = 11 : i64} {
  func.func @head_kernel(%arg0: i32, %arg1: memref<1x4x392x16xf32, #tpu.memory_space<vmem>>, %arg2: memref<16x392xf32, #tpu.memory_space<vmem>>, %arg3: memref<16x1xf32, #tpu.memory_space<vmem>>, %arg4: memref<4x32x16xf32, #tpu.memory_space<vmem>>, %arg5: memref<32x1xf32, #tpu.memory_space<vmem>>, %arg6: memref<32x1xf32, #tpu.memory_space<vmem>>, %arg7: memref<1x1xf32, #tpu.memory_space<vmem>>, %arg8: memref<1x2xf32, #tpu.memory_space<vmem>>, %arg9: memref<4x16x16xf32, #tpu.memory_space<vmem>>, %arg10: memref<4x16x16xf32, #tpu.memory_space<vmem>>, %arg11: memref<32x2xf32, #tpu.memory_space<vmem>>, %arg12: memref<32x2xf32, #tpu.memory_space<vmem>>) attributes {dimension_semantics = [#tpu.dimension_semantics<arbitrary>], iteration_bounds = array<i64: 2>, scalar_prefetch = 0 : i64, scratch_operands = 4 : i64, tpu.core_type = #tpu.core_type<tc>, window_params = [{transform_indices = @transform_0, window_bounds = array<i64: 1, 4, 392, 16>}, {pipeline_mode = #tpu.pipeline_mode<synchronous>, transform_indices = @transform_1, window_bounds = array<i64: 16, 392>}, {pipeline_mode = #tpu.pipeline_mode<synchronous>, transform_indices = @transform_2, window_bounds = array<i64: 16, 1>}, {pipeline_mode = #tpu.pipeline_mode<synchronous>, transform_indices = @transform_3, window_bounds = array<i64: 4, 32, 16>}, {pipeline_mode = #tpu.pipeline_mode<synchronous>, transform_indices = @transform_4, window_bounds = array<i64: 32, 1>}, {pipeline_mode = #tpu.pipeline_mode<synchronous>, transform_indices = @transform_5, window_bounds = array<i64: 32, 1>}, {pipeline_mode = #tpu.pipeline_mode<synchronous>, transform_indices = @transform_6, window_bounds = array<i64: 1, 1>}, {pipeline_mode = #tpu.pipeline_mode<synchronous>, transform_indices = @transform_7, window_bounds = array<i64: 1, 2>}]} {
    %c0_i32 = arith.constant 0 : i32
    %0 = arith.cmpi eq, %arg0, %c0_i32 : i32
    %1 = arith.extui %0 : i1 to i32
    %c0_i32_0 = arith.constant 0 : i32
    %2 = arith.cmpi ne, %1, %c0_i32_0 : i32
    scf.if %2 {
      %cst_136 = arith.constant 0.000000e+00 : f32
      %177 = vector.broadcast %cst_136 : f32 to vector<4x16x16xf32>
      %c0_137 = arith.constant 0 : index
      %c0_138 = arith.constant 0 : index
      %c0_139 = arith.constant 0 : index
      %178 = vector.load %arg9[%c0_137, %c0_138, %c0_139] : memref<4x16x16xf32, #tpu.memory_space<vmem>>, vector<4x16x16xf32>
      tpu.vector_store %arg9[%c0_137, %c0_138, %c0_139], %177 {strides = array<i32>} : memref<4x16x16xf32, #tpu.memory_space<vmem>>, vector<4x16x16xf32>,
      %cst_140 = arith.constant 0.000000e+00 : f32
      %179 = vector.broadcast %cst_140 : f32 to vector<4x16x16xf32>
      %c0_141 = arith.constant 0 : index
      %c0_142 = arith.constant 0 : index
      %c0_143 = arith.constant 0 : index
      %180 = vector.load %arg10[%c0_141, %c0_142, %c0_143] : memref<4x16x16xf32, #tpu.memory_space<vmem>>, vector<4x16x16xf32>
      tpu.vector_store %arg10[%c0_141, %c0_142, %c0_143], %179 {strides = array<i32>} : memref<4x16x16xf32, #tpu.memory_space<vmem>>, vector<4x16x16xf32>,
      %cst_144 = arith.constant 0.000000e+00 : f32
      %181 = vector.broadcast %cst_144 : f32 to vector<32x2xf32>
      %c0_145 = arith.constant 0 : index
      %c0_146 = arith.constant 0 : index
      %182 = vector.load %arg11[%c0_145, %c0_146] : memref<32x2xf32, #tpu.memory_space<vmem>>, vector<32x2xf32>
      tpu.vector_store %arg11[%c0_145, %c0_146], %181 {strides = array<i32>} : memref<32x2xf32, #tpu.memory_space<vmem>>, vector<32x2xf32>,
      %cst_147 = arith.constant 0.000000e+00 : f32
      %183 = vector.broadcast %cst_147 : f32 to vector<32x2xf32>
      %c0_148 = arith.constant 0 : index
      %c0_149 = arith.constant 0 : index
      %184 = vector.load %arg12[%c0_148, %c0_149] : memref<32x2xf32, #tpu.memory_space<vmem>>, vector<32x2xf32>
      tpu.vector_store %arg12[%c0_148, %c0_149], %183 {strides = array<i32>} : memref<32x2xf32, #tpu.memory_space<vmem>>, vector<32x2xf32>,
      %cst_150 = arith.constant 0.000000e+00 : f32
      %185 = vector.broadcast %cst_150 : f32 to vector<1x2xf32>
      %c0_151 = arith.constant 0 : index
      %c0_152 = arith.constant 0 : index
      %186 = vector.load %arg8[%c0_151, %c0_152] : memref<1x2xf32, #tpu.memory_space<vmem>>, vector<1x2xf32>
      tpu.vector_store %arg8[%c0_151, %c0_152], %185 {strides = array<i32>} : memref<1x2xf32, #tpu.memory_space<vmem>>, vector<1x2xf32>,
    } else {
    }
    %cst = arith.constant 0.000000e+00 : f32
    %3 = vector.broadcast %cst : f32 to vector<16x16xf32>
    %c0 = arith.constant 0 : index
    %c0_1 = arith.constant 0 : index
    %4 = vector.load %arg2[%c0, %c0_1] : memref<16x392xf32, #tpu.memory_space<vmem>>, vector<16x392xf32>
    %c0_2 = arith.constant 0 : index
    %c0_3 = arith.constant 0 : index
    %c0_4 = arith.constant 0 : index
    %c0_5 = arith.constant 0 : index
    %5 = vector.load %arg1[%c0_2, %c0_3, %c0_4, %c0_5] : memref<1x4x392x16xf32, #tpu.memory_space<vmem>>, vector<1x1x392x16xf32>
    %6 = vector.shape_cast %5 : vector<1x1x392x16xf32> to vector<392x16xf32>
    %cst_6 = arith.constant dense<0.000000e+00> : vector<16x16xf32>
    %7 = tpu.matmul %4, %6, %cst_6 {dimension_numbers = #tpu.dot_dimension_numbers<[1], [0], [0], [1], [0, 0, 1, 1], [], []>} : vector<16x392xf32>, vector<392x16xf32>, vector<16x16xf32> -> vector<16x16xf32>
    %c0_7 = arith.constant 0 : index
    %c0_8 = arith.constant 0 : index
    %8 = vector.load %arg3[%c0_7, %c0_8] : memref<16x1xf32, #tpu.memory_space<vmem>>, vector<16x1xf32>
    %9 = vector.broadcast %8 : vector<16x1xf32> to vector<16x16xf32>
    %10 = arith.addf %7, %9 : vector<16x16xf32>
    %c0_9 = arith.constant 0 : index
    %c0_10 = arith.constant 0 : index
    %c0_11 = arith.constant 0 : index
    %11 = vector.load %arg9[%c0_9, %c0_10, %c0_11] : memref<4x16x16xf32, #tpu.memory_space<vmem>>, vector<1x16x16xf32>
    %12 = vector.shape_cast %11 : vector<1x16x16xf32> to vector<16x16xf32>
    %cst_12 = arith.constant 2.000000e-01 : f32
    %13 = vector.broadcast %cst_12 : f32 to vector<16x16xf32>
    %14 = arith.mulf %12, %13 : vector<16x16xf32>
    %c0_13 = arith.constant 0 : index
    %c0_14 = arith.constant 0 : index
    %c0_15 = arith.constant 0 : index
    %15 = vector.load %arg10[%c0_13, %c0_14, %c0_15] : memref<4x16x16xf32, #tpu.memory_space<vmem>>, vector<1x16x16xf32>
    %16 = vector.shape_cast %15 : vector<1x16x16xf32> to vector<16x16xf32>
    %cst_16 = arith.constant 1.000000e+00 : f32
    %17 = vector.broadcast %cst_16 : f32 to vector<16x16xf32>
    %18 = arith.subf %17, %16 : vector<16x16xf32>
    %19 = arith.mulf %14, %18 : vector<16x16xf32>
    %20 = arith.addf %19, %10 : vector<16x16xf32>
    %cst_17 = arith.constant 5.000000e-01 : f32
    %21 = vector.broadcast %cst_17 : f32 to vector<16x16xf32>
    %22 = arith.cmpf ogt, %20, %21 : vector<16x16xf32>
    %23 = arith.extui %22 : vector<16x16xi1> to vector<16x16xi32>
    %24 = arith.sitofp %23 : vector<16x16xi32> to vector<16x16xf32>
    %c0_18 = arith.constant 0 : index
    %c0_19 = arith.constant 0 : index
    %c0_20 = arith.constant 0 : index
    %25 = vector.load %arg9[%c0_18, %c0_19, %c0_20] : memref<4x16x16xf32, #tpu.memory_space<vmem>>, vector<1x16x16xf32>
    %26 = vector.shape_cast %25 : vector<1x16x16xf32> to vector<16x16xf32>
    %27 = vector.shape_cast %20 : vector<16x16xf32> to vector<1x16x16xf32>
    tpu.vector_store %arg9[%c0_18, %c0_19, %c0_20], %27 {strides = array<i32>} : memref<4x16x16xf32, #tpu.memory_space<vmem>>, vector<1x16x16xf32>,
    %c0_21 = arith.constant 0 : index
    %c0_22 = arith.constant 0 : index
    %c0_23 = arith.constant 0 : index
    %28 = vector.load %arg10[%c0_21, %c0_22, %c0_23] : memref<4x16x16xf32, #tpu.memory_space<vmem>>, vector<1x16x16xf32>
    %29 = vector.shape_cast %28 : vector<1x16x16xf32> to vector<16x16xf32>
    %30 = vector.shape_cast %24 : vector<16x16xf32> to vector<1x16x16xf32>
    tpu.vector_store %arg10[%c0_21, %c0_22, %c0_23], %30 {strides = array<i32>} : memref<4x16x16xf32, #tpu.memory_space<vmem>>, vector<1x16x16xf32>,
    %cst_24 = arith.constant 2.500000e-01 : f32
    %31 = vector.broadcast %cst_24 : f32 to vector<16x16xf32>
    %32 = arith.mulf %31, %24 : vector<16x16xf32>
    %33 = arith.addf %3, %32 : vector<16x16xf32>
    %c0_25 = arith.constant 0 : index
    %c0_26 = arith.constant 0 : index
    %34 = vector.load %arg2[%c0_25, %c0_26] : memref<16x392xf32, #tpu.memory_space<vmem>>, vector<16x392xf32>
    %c0_27 = arith.constant 0 : index
    %c1 = arith.constant 1 : index
    %c0_28 = arith.constant 0 : index
    %c0_29 = arith.constant 0 : index
    %35 = vector.load %arg1[%c0_27, %c1, %c0_28, %c0_29] : memref<1x4x392x16xf32, #tpu.memory_space<vmem>>, vector<1x1x392x16xf32>
    %36 = vector.shape_cast %35 : vector<1x1x392x16xf32> to vector<392x16xf32>
    %cst_30 = arith.constant dense<0.000000e+00> : vector<16x16xf32>
    %37 = tpu.matmul %34, %36, %cst_30 {dimension_numbers = #tpu.dot_dimension_numbers<[1], [0], [0], [1], [0, 0, 1, 1], [], []>} : vector<16x392xf32>, vector<392x16xf32>, vector<16x16xf32> -> vector<16x16xf32>
    %c0_31 = arith.constant 0 : index
    %c0_32 = arith.constant 0 : index
    %38 = vector.load %arg3[%c0_31, %c0_32] : memref<16x1xf32, #tpu.memory_space<vmem>>, vector<16x1xf32>
    %39 = vector.broadcast %38 : vector<16x1xf32> to vector<16x16xf32>
    %40 = arith.addf %37, %39 : vector<16x16xf32>
    %c1_33 = arith.constant 1 : index
    %c0_34 = arith.constant 0 : index
    %c0_35 = arith.constant 0 : index
    %41 = vector.load %arg9[%c1_33, %c0_34, %c0_35] : memref<4x16x16xf32, #tpu.memory_space<vmem>>, vector<1x16x16xf32>
    %42 = vector.shape_cast %41 : vector<1x16x16xf32> to vector<16x16xf32>
    %cst_36 = arith.constant 2.000000e-01 : f32
    %43 = vector.broadcast %cst_36 : f32 to vector<16x16xf32>
    %44 = arith.mulf %42, %43 : vector<16x16xf32>
    %c1_37 = arith.constant 1 : index
    %c0_38 = arith.constant 0 : index
    %c0_39 = arith.constant 0 : index
    %45 = vector.load %arg10[%c1_37, %c0_38, %c0_39] : memref<4x16x16xf32, #tpu.memory_space<vmem>>, vector<1x16x16xf32>
    %46 = vector.shape_cast %45 : vector<1x16x16xf32> to vector<16x16xf32>
    %cst_40 = arith.constant 1.000000e+00 : f32
    %47 = vector.broadcast %cst_40 : f32 to vector<16x16xf32>
    %48 = arith.subf %47, %46 : vector<16x16xf32>
    %49 = arith.mulf %44, %48 : vector<16x16xf32>
    %50 = arith.addf %49, %40 : vector<16x16xf32>
    %cst_41 = arith.constant 5.000000e-01 : f32
    %51 = vector.broadcast %cst_41 : f32 to vector<16x16xf32>
    %52 = arith.cmpf ogt, %50, %51 : vector<16x16xf32>
    %53 = arith.extui %52 : vector<16x16xi1> to vector<16x16xi32>
    %54 = arith.sitofp %53 : vector<16x16xi32> to vector<16x16xf32>
    %c1_42 = arith.constant 1 : index
    %c0_43 = arith.constant 0 : index
    %c0_44 = arith.constant 0 : index
    %55 = vector.load %arg9[%c1_42, %c0_43, %c0_44] : memref<4x16x16xf32, #tpu.memory_space<vmem>>, vector<1x16x16xf32>
    %56 = vector.shape_cast %55 : vector<1x16x16xf32> to vector<16x16xf32>
    %57 = vector.shape_cast %50 : vector<16x16xf32> to vector<1x16x16xf32>
    tpu.vector_store %arg9[%c1_42, %c0_43, %c0_44], %57 {strides = array<i32>} : memref<4x16x16xf32, #tpu.memory_space<vmem>>, vector<1x16x16xf32>,
    %c1_45 = arith.constant 1 : index
    %c0_46 = arith.constant 0 : index
    %c0_47 = arith.constant 0 : index
    %58 = vector.load %arg10[%c1_45, %c0_46, %c0_47] : memref<4x16x16xf32, #tpu.memory_space<vmem>>, vector<1x16x16xf32>
    %59 = vector.shape_cast %58 : vector<1x16x16xf32> to vector<16x16xf32>
    %60 = vector.shape_cast %54 : vector<16x16xf32> to vector<1x16x16xf32>
    tpu.vector_store %arg10[%c1_45, %c0_46, %c0_47], %60 {strides = array<i32>} : memref<4x16x16xf32, #tpu.memory_space<vmem>>, vector<1x16x16xf32>,
    %cst_48 = arith.constant 2.500000e-01 : f32
    %61 = vector.broadcast %cst_48 : f32 to vector<16x16xf32>
    %62 = arith.mulf %61, %54 : vector<16x16xf32>
    %63 = arith.addf %33, %62 : vector<16x16xf32>
    %c0_49 = arith.constant 0 : index
    %c0_50 = arith.constant 0 : index
    %64 = vector.load %arg2[%c0_49, %c0_50] : memref<16x392xf32, #tpu.memory_space<vmem>>, vector<16x392xf32>
    %c0_51 = arith.constant 0 : index
    %c2 = arith.constant 2 : index
    %c0_52 = arith.constant 0 : index
    %c0_53 = arith.constant 0 : index
    %65 = vector.load %arg1[%c0_51, %c2, %c0_52, %c0_53] : memref<1x4x392x16xf32, #tpu.memory_space<vmem>>, vector<1x1x392x16xf32>
    %66 = vector.shape_cast %65 : vector<1x1x392x16xf32> to vector<392x16xf32>
    %cst_54 = arith.constant dense<0.000000e+00> : vector<16x16xf32>
    %67 = tpu.matmul %64, %66, %cst_54 {dimension_numbers = #tpu.dot_dimension_numbers<[1], [0], [0], [1], [0, 0, 1, 1], [], []>} : vector<16x392xf32>, vector<392x16xf32>, vector<16x16xf32> -> vector<16x16xf32>
    %c0_55 = arith.constant 0 : index
    %c0_56 = arith.constant 0 : index
    %68 = vector.load %arg3[%c0_55, %c0_56] : memref<16x1xf32, #tpu.memory_space<vmem>>, vector<16x1xf32>
    %69 = vector.broadcast %68 : vector<16x1xf32> to vector<16x16xf32>
    %70 = arith.addf %67, %69 : vector<16x16xf32>
    %c2_57 = arith.constant 2 : index
    %c0_58 = arith.constant 0 : index
    %c0_59 = arith.constant 0 : index
    %71 = vector.load %arg9[%c2_57, %c0_58, %c0_59] : memref<4x16x16xf32, #tpu.memory_space<vmem>>, vector<1x16x16xf32>
    %72 = vector.shape_cast %71 : vector<1x16x16xf32> to vector<16x16xf32>
    %cst_60 = arith.constant 2.000000e-01 : f32
    %73 = vector.broadcast %cst_60 : f32 to vector<16x16xf32>
    %74 = arith.mulf %72, %73 : vector<16x16xf32>
    %c2_61 = arith.constant 2 : index
    %c0_62 = arith.constant 0 : index
    %c0_63 = arith.constant 0 : index
    %75 = vector.load %arg10[%c2_61, %c0_62, %c0_63] : memref<4x16x16xf32, #tpu.memory_space<vmem>>, vector<1x16x16xf32>
    %76 = vector.shape_cast %75 : vector<1x16x16xf32> to vector<16x16xf32>
    %cst_64 = arith.constant 1.000000e+00 : f32
    %77 = vector.broadcast %cst_64 : f32 to vector<16x16xf32>
    %78 = arith.subf %77, %76 : vector<16x16xf32>
    %79 = arith.mulf %74, %78 : vector<16x16xf32>
    %80 = arith.addf %79, %70 : vector<16x16xf32>
    %cst_65 = arith.constant 5.000000e-01 : f32
    %81 = vector.broadcast %cst_65 : f32 to vector<16x16xf32>
    %82 = arith.cmpf ogt, %80, %81 : vector<16x16xf32>
    %83 = arith.extui %82 : vector<16x16xi1> to vector<16x16xi32>
    %84 = arith.sitofp %83 : vector<16x16xi32> to vector<16x16xf32>
    %c2_66 = arith.constant 2 : index
    %c0_67 = arith.constant 0 : index
    %c0_68 = arith.constant 0 : index
    %85 = vector.load %arg9[%c2_66, %c0_67, %c0_68] : memref<4x16x16xf32, #tpu.memory_space<vmem>>, vector<1x16x16xf32>
    %86 = vector.shape_cast %85 : vector<1x16x16xf32> to vector<16x16xf32>
    %87 = vector.shape_cast %80 : vector<16x16xf32> to vector<1x16x16xf32>
    tpu.vector_store %arg9[%c2_66, %c0_67, %c0_68], %87 {strides = array<i32>} : memref<4x16x16xf32, #tpu.memory_space<vmem>>, vector<1x16x16xf32>,
    %c2_69 = arith.constant 2 : index
    %c0_70 = arith.constant 0 : index
    %c0_71 = arith.constant 0 : index
    %88 = vector.load %arg10[%c2_69, %c0_70, %c0_71] : memref<4x16x16xf32, #tpu.memory_space<vmem>>, vector<1x16x16xf32>
    %89 = vector.shape_cast %88 : vector<1x16x16xf32> to vector<16x16xf32>
    %90 = vector.shape_cast %84 : vector<16x16xf32> to vector<1x16x16xf32>
    tpu.vector_store %arg10[%c2_69, %c0_70, %c0_71], %90 {strides = array<i32>} : memref<4x16x16xf32, #tpu.memory_space<vmem>>, vector<1x16x16xf32>,
    %cst_72 = arith.constant 2.500000e-01 : f32
    %91 = vector.broadcast %cst_72 : f32 to vector<16x16xf32>
    %92 = arith.mulf %91, %84 : vector<16x16xf32>
    %93 = arith.addf %63, %92 : vector<16x16xf32>
    %c0_73 = arith.constant 0 : index
    %c0_74 = arith.constant 0 : index
    %94 = vector.load %arg2[%c0_73, %c0_74] : memref<16x392xf32, #tpu.memory_space<vmem>>, vector<16x392xf32>
    %c0_75 = arith.constant 0 : index
    %c3 = arith.constant 3 : index
    %c0_76 = arith.constant 0 : index
    %c0_77 = arith.constant 0 : index
    %95 = vector.load %arg1[%c0_75, %c3, %c0_76, %c0_77] : memref<1x4x392x16xf32, #tpu.memory_space<vmem>>, vector<1x1x392x16xf32>
    %96 = vector.shape_cast %95 : vector<1x1x392x16xf32> to vector<392x16xf32>
    %cst_78 = arith.constant dense<0.000000e+00> : vector<16x16xf32>
    %97 = tpu.matmul %94, %96, %cst_78 {dimension_numbers = #tpu.dot_dimension_numbers<[1], [0], [0], [1], [0, 0, 1, 1], [], []>} : vector<16x392xf32>, vector<392x16xf32>, vector<16x16xf32> -> vector<16x16xf32>
    %c0_79 = arith.constant 0 : index
    %c0_80 = arith.constant 0 : index
    %98 = vector.load %arg3[%c0_79, %c0_80] : memref<16x1xf32, #tpu.memory_space<vmem>>, vector<16x1xf32>
    %99 = vector.broadcast %98 : vector<16x1xf32> to vector<16x16xf32>
    %100 = arith.addf %97, %99 : vector<16x16xf32>
    %c3_81 = arith.constant 3 : index
    %c0_82 = arith.constant 0 : index
    %c0_83 = arith.constant 0 : index
    %101 = vector.load %arg9[%c3_81, %c0_82, %c0_83] : memref<4x16x16xf32, #tpu.memory_space<vmem>>, vector<1x16x16xf32>
    %102 = vector.shape_cast %101 : vector<1x16x16xf32> to vector<16x16xf32>
    %cst_84 = arith.constant 2.000000e-01 : f32
    %103 = vector.broadcast %cst_84 : f32 to vector<16x16xf32>
    %104 = arith.mulf %102, %103 : vector<16x16xf32>
    %c3_85 = arith.constant 3 : index
    %c0_86 = arith.constant 0 : index
    %c0_87 = arith.constant 0 : index
    %105 = vector.load %arg10[%c3_85, %c0_86, %c0_87] : memref<4x16x16xf32, #tpu.memory_space<vmem>>, vector<1x16x16xf32>
    %106 = vector.shape_cast %105 : vector<1x16x16xf32> to vector<16x16xf32>
    %cst_88 = arith.constant 1.000000e+00 : f32
    %107 = vector.broadcast %cst_88 : f32 to vector<16x16xf32>
    %108 = arith.subf %107, %106 : vector<16x16xf32>
    %109 = arith.mulf %104, %108 : vector<16x16xf32>
    %110 = arith.addf %109, %100 : vector<16x16xf32>
    %cst_89 = arith.constant 5.000000e-01 : f32
    %111 = vector.broadcast %cst_89 : f32 to vector<16x16xf32>
    %112 = arith.cmpf ogt, %110, %111 : vector<16x16xf32>
    %113 = arith.extui %112 : vector<16x16xi1> to vector<16x16xi32>
    %114 = arith.sitofp %113 : vector<16x16xi32> to vector<16x16xf32>
    %c3_90 = arith.constant 3 : index
    %c0_91 = arith.constant 0 : index
    %c0_92 = arith.constant 0 : index
    %115 = vector.load %arg9[%c3_90, %c0_91, %c0_92] : memref<4x16x16xf32, #tpu.memory_space<vmem>>, vector<1x16x16xf32>
    %116 = vector.shape_cast %115 : vector<1x16x16xf32> to vector<16x16xf32>
    %117 = vector.shape_cast %110 : vector<16x16xf32> to vector<1x16x16xf32>
    tpu.vector_store %arg9[%c3_90, %c0_91, %c0_92], %117 {strides = array<i32>} : memref<4x16x16xf32, #tpu.memory_space<vmem>>, vector<1x16x16xf32>,
    %c3_93 = arith.constant 3 : index
    %c0_94 = arith.constant 0 : index
    %c0_95 = arith.constant 0 : index
    %118 = vector.load %arg10[%c3_93, %c0_94, %c0_95] : memref<4x16x16xf32, #tpu.memory_space<vmem>>, vector<1x16x16xf32>
    %119 = vector.shape_cast %118 : vector<1x16x16xf32> to vector<16x16xf32>
    %120 = vector.shape_cast %114 : vector<16x16xf32> to vector<1x16x16xf32>
    tpu.vector_store %arg10[%c3_93, %c0_94, %c0_95], %120 {strides = array<i32>} : memref<4x16x16xf32, #tpu.memory_space<vmem>>, vector<1x16x16xf32>,
    %cst_96 = arith.constant 2.500000e-01 : f32
    %121 = vector.broadcast %cst_96 : f32 to vector<16x16xf32>
    %122 = arith.mulf %121, %114 : vector<16x16xf32>
    %123 = arith.addf %93, %122 : vector<16x16xf32>
    %124 = vector.extract_strided_slice %123 {offsets = [0, 8], sizes = [16, 8], strides = [1, 1]} : vector<16x16xf32> to vector<16x8xf32>
    %125 = vector.extract_strided_slice %123 {offsets = [0, 0], sizes = [16, 8], strides = [1, 1]} : vector<16x16xf32> to vector<16x8xf32>
    %126 = arith.subf %124, %125 : vector<16x8xf32>
    %127 = math.absf %126 : vector<16x8xf32>
    %cst_97 = arith.constant 0.000000e+00 : f32
    %128 = vector.broadcast %cst_97 : f32 to vector<32x2xf32>
    %c0_98 = arith.constant 0 : index
    %c0_99 = arith.constant 0 : index
    %c0_100 = arith.constant 0 : index
    %129 = vector.load %arg4[%c0_98, %c0_99, %c0_100] : memref<4x32x16xf32, #tpu.memory_space<vmem>>, vector<1x32x16xf32>
    %130 = vector.shape_cast %129 : vector<1x32x16xf32> to vector<32x16xf32>
    %131 = vector.extract_strided_slice %127 {offsets = [0, 0], sizes = [16, 2], strides = [1, 1]} : vector<16x8xf32> to vector<16x2xf32>
    %cst_101 = arith.constant dense<0.000000e+00> : vector<32x2xf32>
    %132 = tpu.matmul %130, %131, %cst_101 {dimension_numbers = #tpu.dot_dimension_numbers<[1], [0], [0], [1], [0, 0, 1, 1], [], []>} : vector<32x16xf32>, vector<16x2xf32>, vector<32x2xf32> -> vector<32x2xf32>
    %133 = arith.addf %128, %132 : vector<32x2xf32>
    %c1_102 = arith.constant 1 : index
    %c0_103 = arith.constant 0 : index
    %c0_104 = arith.constant 0 : index
    %134 = vector.load %arg4[%c1_102, %c0_103, %c0_104] : memref<4x32x16xf32, #tpu.memory_space<vmem>>, vector<1x32x16xf32>
    %135 = vector.shape_cast %134 : vector<1x32x16xf32> to vector<32x16xf32>
    %136 = vector.extract_strided_slice %127 {offsets = [0, 2], sizes = [16, 2], strides = [1, 1]} : vector<16x8xf32> to vector<16x2xf32>
    %cst_105 = arith.constant dense<0.000000e+00> : vector<32x2xf32>
    %137 = tpu.matmul %135, %136, %cst_105 {dimension_numbers = #tpu.dot_dimension_numbers<[1], [0], [0], [1], [0, 0, 1, 1], [], []>} : vector<32x16xf32>, vector<16x2xf32>, vector<32x2xf32> -> vector<32x2xf32>
    %138 = arith.addf %133, %137 : vector<32x2xf32>
    %c2_106 = arith.constant 2 : index
    %c0_107 = arith.constant 0 : index
    %c0_108 = arith.constant 0 : index
    %139 = vector.load %arg4[%c2_106, %c0_107, %c0_108] : memref<4x32x16xf32, #tpu.memory_space<vmem>>, vector<1x32x16xf32>
    %140 = vector.shape_cast %139 : vector<1x32x16xf32> to vector<32x16xf32>
    %141 = vector.extract_strided_slice %127 {offsets = [0, 4], sizes = [16, 2], strides = [1, 1]} : vector<16x8xf32> to vector<16x2xf32>
    %cst_109 = arith.constant dense<0.000000e+00> : vector<32x2xf32>
    %142 = tpu.matmul %140, %141, %cst_109 {dimension_numbers = #tpu.dot_dimension_numbers<[1], [0], [0], [1], [0, 0, 1, 1], [], []>} : vector<32x16xf32>, vector<16x2xf32>, vector<32x2xf32> -> vector<32x2xf32>
    %143 = arith.addf %138, %142 : vector<32x2xf32>
    %c3_110 = arith.constant 3 : index
    %c0_111 = arith.constant 0 : index
    %c0_112 = arith.constant 0 : index
    %144 = vector.load %arg4[%c3_110, %c0_111, %c0_112] : memref<4x32x16xf32, #tpu.memory_space<vmem>>, vector<1x32x16xf32>
    %145 = vector.shape_cast %144 : vector<1x32x16xf32> to vector<32x16xf32>
    %146 = vector.extract_strided_slice %127 {offsets = [0, 6], sizes = [16, 2], strides = [1, 1]} : vector<16x8xf32> to vector<16x2xf32>
    %cst_113 = arith.constant dense<0.000000e+00> : vector<32x2xf32>
    %147 = tpu.matmul %145, %146, %cst_113 {dimension_numbers = #tpu.dot_dimension_numbers<[1], [0], [0], [1], [0, 0, 1, 1], [], []>} : vector<32x16xf32>, vector<16x2xf32>, vector<32x2xf32> -> vector<32x2xf32>
    %148 = arith.addf %143, %147 : vector<32x2xf32>
    %c0_114 = arith.constant 0 : index
    %c0_115 = arith.constant 0 : index
    %149 = vector.load %arg5[%c0_114, %c0_115] : memref<32x1xf32, #tpu.memory_space<vmem>>, vector<32x1xf32>
    %150 = vector.broadcast %149 : vector<32x1xf32> to vector<32x2xf32>
    %151 = arith.addf %148, %150 : vector<32x2xf32>
    %c0_116 = arith.constant 0 : index
    %c0_117 = arith.constant 0 : index
    %152 = vector.load %arg11[%c0_116, %c0_117] : memref<32x2xf32, #tpu.memory_space<vmem>>, vector<32x2xf32>
    %cst_118 = arith.constant 2.000000e-01 : f32
    %153 = vector.broadcast %cst_118 : f32 to vector<32x2xf32>
    %154 = arith.mulf %152, %153 : vector<32x2xf32>
    %c0_119 = arith.constant 0 : index
    %c0_120 = arith.constant 0 : index
    %155 = vector.load %arg12[%c0_119, %c0_120] : memref<32x2xf32, #tpu.memory_space<vmem>>, vector<32x2xf32>
    %cst_121 = arith.constant 1.000000e+00 : f32
    %156 = vector.broadcast %cst_121 : f32 to vector<32x2xf32>
    %157 = arith.subf %156, %155 : vector<32x2xf32>
    %158 = arith.mulf %154, %157 : vector<32x2xf32>
    %159 = arith.addf %158, %151 : vector<32x2xf32>
    %cst_122 = arith.constant 5.000000e-01 : f32
    %160 = vector.broadcast %cst_122 : f32 to vector<32x2xf32>
    %161 = arith.cmpf ogt, %159, %160 : vector<32x2xf32>
    %162 = arith.extui %161 : vector<32x2xi1> to vector<32x2xi32>
    %163 = arith.sitofp %162 : vector<32x2xi32> to vector<32x2xf32>
    %c0_123 = arith.constant 0 : index
    %c0_124 = arith.constant 0 : index
    %164 = vector.load %arg11[%c0_123, %c0_124] : memref<32x2xf32, #tpu.memory_space<vmem>>, vector<32x2xf32>
    tpu.vector_store %arg11[%c0_123, %c0_124], %159 {strides = array<i32>} : memref<32x2xf32, #tpu.memory_space<vmem>>, vector<32x2xf32>,
    %c0_125 = arith.constant 0 : index
    %c0_126 = arith.constant 0 : index
    %165 = vector.load %arg12[%c0_125, %c0_126] : memref<32x2xf32, #tpu.memory_space<vmem>>, vector<32x2xf32>
    tpu.vector_store %arg12[%c0_125, %c0_126], %163 {strides = array<i32>} : memref<32x2xf32, #tpu.memory_space<vmem>>, vector<32x2xf32>,
    %c0_127 = arith.constant 0 : index
    %c0_128 = arith.constant 0 : index
    %166 = vector.load %arg6[%c0_127, %c0_128] : memref<32x1xf32, #tpu.memory_space<vmem>>, vector<32x1xf32>
    %167 = vector.broadcast %166 : vector<32x1xf32> to vector<32x2xf32>
    %168 = arith.mulf %163, %167 : vector<32x2xf32>
    %cst_129 = arith.constant dense<0.000000e+00> : vector<2xf32>
    %169 = vector.multi_reduction <add>, %168, %cst_129 [0] : vector<32x2xf32> to vector<2xf32>
    %170 = vector.shape_cast %169 : vector<2xf32> to vector<1x2xf32>
    %c0_130 = arith.constant 0 : index
    %c0_131 = arith.constant 0 : index
    %171 = vector.load %arg7[%c0_130, %c0_131] : memref<1x1xf32, #tpu.memory_space<vmem>>, vector<1x1xf32>
    %172 = vector.broadcast %171 : vector<1x1xf32> to vector<1x2xf32>
    %173 = arith.addf %170, %172 : vector<1x2xf32>
    %c0_132 = arith.constant 0 : index
    %c0_133 = arith.constant 0 : index
    %174 = vector.load %arg8[%c0_132, %c0_133] : memref<1x2xf32, #tpu.memory_space<vmem>>, vector<1x2xf32>
    %175 = arith.addf %174, %173 : vector<1x2xf32>
    %c0_134 = arith.constant 0 : index
    %c0_135 = arith.constant 0 : index
    %176 = vector.load %arg8[%c0_134, %c0_135] : memref<1x2xf32, #tpu.memory_space<vmem>>, vector<1x2xf32>
    tpu.vector_store %arg8[%c0_134, %c0_135], %175 {strides = array<i32>} : memref<1x2xf32, #tpu.memory_space<vmem>>, vector<1x2xf32>,
    return
  }
  func.func @transform_0(%arg0: i32) -> (i32, i32, i32, i32) {
    %c0_i32 = arith.constant 0 : i32
    %c0_i32_0 = arith.constant 0 : i32
    %c0_i32_1 = arith.constant 0 : i32
    %c0_i32_2 = arith.constant 0 : i32
    return %arg0, %c0_i32, %c0_i32_0, %c0_i32_1 : i32, i32, i32, i32
  }
  func.func @transform_1(%arg0: i32) -> (i32, i32) {
    %c0_i32 = arith.constant 0 : i32
    %c0_i32_0 = arith.constant 0 : i32
    %c0_i32_1 = arith.constant 0 : i32
    return %c0_i32, %c0_i32_0 : i32, i32
  }
  func.func @transform_2(%arg0: i32) -> (i32, i32) {
    %c0_i32 = arith.constant 0 : i32
    %c0_i32_0 = arith.constant 0 : i32
    %c0_i32_1 = arith.constant 0 : i32
    return %c0_i32, %c0_i32_0 : i32, i32
  }
  func.func @transform_3(%arg0: i32) -> (i32, i32, i32) {
    %c0_i32 = arith.constant 0 : i32
    %c0_i32_0 = arith.constant 0 : i32
    %c0_i32_1 = arith.constant 0 : i32
    %c0_i32_2 = arith.constant 0 : i32
    return %c0_i32, %c0_i32_0, %c0_i32_1 : i32, i32, i32
  }
  func.func @transform_4(%arg0: i32) -> (i32, i32) {
    %c0_i32 = arith.constant 0 : i32
    %c0_i32_0 = arith.constant 0 : i32
    %c0_i32_1 = arith.constant 0 : i32
    return %c0_i32, %c0_i32_0 : i32, i32
  }
  func.func @transform_5(%arg0: i32) -> (i32, i32) {
    %c0_i32 = arith.constant 0 : i32
    %c0_i32_0 = arith.constant 0 : i32
    %c0_i32_1 = arith.constant 0 : i32
    return %c0_i32, %c0_i32_0 : i32, i32
  }
  func.func @transform_6(%arg0: i32) -> (i32, i32) {
    %c0_i32 = arith.constant 0 : i32
    %c0_i32_0 = arith.constant 0 : i32
    %c0_i32_1 = arith.constant 0 : i32
    return %c0_i32, %c0_i32_0 : i32, i32
  }
  func.func @transform_7(%arg0: i32) -> (i32, i32) {
    %c0_i32 = arith.constant 0 : i32
    %c0_i32_0 = arith.constant 0 : i32
    %c0_i32_1 = arith.constant 0 : i32
    return %c0_i32, %c0_i32_0 : i32, i32
  }
}

</mosaic_0001>

<llo_original>
// kernel: ssiamese_forward.2
$region0: #{ssiamese_forward.2}
  #allocation0 [shape = 'u32[]', space=smem, size = 0x4, offset = 0x4, fixed_abs, tag = 'smem constant byte address 0x4 - core index']
  #allocation1 [shape = 'u32[144,128]{1,0:T(1,128)}', space=vmem, size = 0x12000, scoped, tag = 'internal scratch']
  #allocation2 [shape = 'f32[4,8,200]{2,1,0:T(8,128)}', space=vmem, size = 0x8000, scoped, tag = 'scratch operand']
  #allocation3 [shape = 'f32[4,8,200]{2,1,0:T(8,128)}', space=vmem, size = 0x8000, scoped, tag = 'scratch operand']
  %s0 = inlined_call_operand.vmem [shape: f32[2,2,4,100,200], index: 0, kind: input, shape index: {}]
  %s1 = inlined_call_operand.vmem [shape: f32[8,100], index: 1, kind: input, shape index: {}]
  %s2 = inlined_call_operand.vmem [shape: f32[8,1], index: 2, kind: input, shape index: {}]
  %s3 = inlined_call_operand.vmem [shape: f32[2,2,8,200], index: 3, kind: output, shape index: {}]
  %s4 = sld [smem:[#allocation0]]
  $region49: #{ssiamese_forward.2} parent=0
    _
  %s6 = ssub.s32 1, %s4
  %s7 = scalar_select 0, %s6, %s4
  loop: start=0, step=1, limit=6
  $region2: #{ssiamese_forward.2} parent=0 // loop_pre_header
    _
  $region3: #{ssiamese_forward.2} parent=0 // loop_header
    %s9 = sphi 0, %s13
    %p10 = scmp.ge.s32.totalorder %s9, 6
    %s16 = sphi 0, %s28
    %s17 = sphi 0, %s24
    %s18 = sphi 0, %s16
    %s19 = sphi 0, %s17
    %s20 = sphi 0, %s18
    %s21 = sphi 0, %s19
    %s33 = sphi 0, %s35
    %s36 = sphi 0, %s33
    %s37 = sphi 0, %s36
    %s53 = sphi 0, %s37
    %s57 = sphi 0, %s57
    %s59 = sphi 0, %s57
    %s60 = sphi 0, %s59
    %s74 = sphi 0, %s60
    %s78 = sphi 0, %s78
    %s80 = sphi 0, %s78
    %s81 = sphi 0, %s80
    %s95 = sphi 0, %s81
    %s103 = sphi 0, %s105
    %s106 = sphi 0, %s103
    %s107 = sphi 0, %s106
    %s123 = sphi 0, %s107
  $region4: #{ssiamese_forward.2} parent=0 // loop_header_branch
    %12 = sbr.rel (%p10) target = $region8
  $region5: #{ssiamese_forward.2} parent=0 // loop_body
    %s14 = ssub.s32 %s9, 1
    %s15 = ssub.s32 %s9, 2
    %s22 = sadd.s32 1, %s17
    %p23 = scmp.ge.s32.totalorder %s22, 2
    %s24 = scalar_select %p23, 0, %s22
    %s25 = sadd.s32 1, %s16
    %s26 = scalar_select %p23, %s25, %s16
    %p27 = scmp.ge.s32.totalorder %s26, 2
    %s28 = scalar_select %p27, 0, %s26
    %s29 = ssub.s32 %s17, %s24
    %s30 = ssub.s32 %s16, %s28
    %s31 = sor.u32 %s29, %s30
    %p32 = scmp.eq.s32.totalorder %s31, 0
    %s34 = sadd.s32 %s33, 1
    %s35 = scalar_select %p32, %s33, %s34
    %p38 = pneg %p32
    %p39 = scmp.eq.s32.totalorder %s9, 3
    %p40 = por %p38, %p39
    %p41 = scmp.ne.s32.totalorder %s33, %s36
    %p42 = scmp.eq.s32.totalorder %s9, 0
    %p43 = por %p41, %p42
    %p44 = scmp.ne.s32.totalorder %s33, %s36
    %p45 = scmp.eq.s32.totalorder %s14, 3
    %p46 = por %p44, %p45
    %p47 = scmp.ne.s32.totalorder %s36, %s37
    %p48 = scmp.eq.s32.totalorder %s14, 0
    %p49 = por %p47, %p48
    %p50 = scmp.ne.s32.totalorder %s36, %s37
    %p51 = scmp.eq.s32.totalorder %s15, 3
    %p52 = por %p50, %p51
    %p54 = scmp.ne.s32.totalorder %s37, %s53
    %p55 = scmp.eq.s32.totalorder %s15, 0
    %p56 = por %p54, %p55
    %s58 = sadd.s32 %s57, 1
    %p61 = scmp.eq.s32.totalorder %s9, 3
    %p62 = scmp.ne.s32.totalorder %s57, %s59
    %p63 = scmp.eq.s32.totalorder %s9, 0
    %p64 = por %p62, %p63
    %p65 = scmp.ne.s32.totalorder %s57, %s59
    %p66 = scmp.eq.s32.totalorder %s14, 3
    %p67 = por %p65, %p66
    %p68 = scmp.ne.s32.totalorder %s59, %s60
    %p69 = scmp.eq.s32.totalorder %s14, 0
    %p70 = por %p68, %p69
    %p71 = scmp.ne.s32.totalorder %s59, %s60
    %p72 = scmp.eq.s32.totalorder %s15, 3
    %p73 = por %p71, %p72
    %p75 = scmp.ne.s32.totalorder %s60, %s74
    %p76 = scmp.eq.s32.totalorder %s15, 0
    %p77 = por %p75, %p76
    %s79 = sadd.s32 %s78, 1
    %p82 = scmp.eq.s32.totalorder %s9, 3
    %p83 = scmp.ne.s32.totalorder %s78, %s80
    %p84 = scmp.eq.s32.totalorder %s9, 0
    %p85 = por %p83, %p84
    %p86 = scmp.ne.s32.totalorder %s78, %s80
    %p87 = scmp.eq.s32.totalorder %s14, 3
    %p88 = por %p86, %p87
    %p89 = scmp.ne.s32.totalorder %s80, %s81
    %p90 = scmp.eq.s32.totalorder %s14, 0
    %p91 = por %p89, %p90
    %p92 = scmp.ne.s32.totalorder %s80, %s81
    %p93 = scmp.eq.s32.totalorder %s15, 3
    %p94 = por %p92, %p93
    %p96 = scmp.ne.s32.totalorder %s81, %s95
    %p97 = scmp.eq.s32.totalorder %s15, 0
    %p98 = por %p96, %p97
    %s99 = ssub.s32 %s17, %s24
    %s100 = ssub.s32 %s16, %s28
    %s101 = sor.u32 %s99, %s100
    %p102 = scmp.eq.s32.totalorder %s101, 0
    %s104 = sadd.s32 %s103, 1
    %s105 = scalar_select %p102, %s103, %s104
    %p108 = pneg %p102
    %p109 = scmp.eq.s32.totalorder %s9, 3
    %p110 = por %p108, %p109
    %p111 = scmp.ne.s32.totalorder %s103, %s106
    %p112 = scmp.eq.s32.totalorder %s9, 0
    %p113 = por %p111, %p112
    %p114 = scmp.ne.s32.totalorder %s103, %s106
    %p115 = scmp.eq.s32.totalorder %s14, 3
    %p116 = por %p114, %p115
    %p117 = scmp.ne.s32.totalorder %s106, %s107
    %p118 = scmp.eq.s32.totalorder %s14, 0
    %p119 = por %p117, %p118
    %p120 = scmp.ne.s32.totalorder %s106, %s107
    %p121 = scmp.eq.s32.totalorder %s15, 3
    %p122 = por %p120, %p121
    %p124 = scmp.ne.s32.totalorder %s107, %s123
    %p125 = scmp.eq.s32.totalorder %s15, 0
    %p126 = por %p124, %p125
    %p127 = scmp.le.s32.totalorder 1, %s9
    %p128 = scmp.lt.s32.totalorder %s9, 5
    %p129 = pnand %p127, %p128
    %p130 = pneg %p129
    // Predicated region
    $region9: #{ssiamese_forward.2} parent=5 // pred_check
      _
    $region10: #{ssiamese_forward.2} parent=5 // pred_check_branch
      %132 = sbr.rel (%p129) target = $region12
    $region11: #{ssiamese_forward.2} parent=5 // pred_region
      %s133 = ssub.s32 %s9, 1
      // Predicated region
      $region13: #{ssiamese_forward.2} parent=11 // pred_check
        %p134 = pneg %p70
      $region14: #{ssiamese_forward.2} parent=11 // pred_check_branch
        %136 = sbr.rel (%p134) target = $region16
      $region15: #{ssiamese_forward.2} parent=11 // pred_region
        _
      $region16: #{ssiamese_forward.2} parent=11 // pred_fallthru
        _
      // Predicated region
      $region17: #{ssiamese_forward.2} parent=11 // pred_check
        %p137 = pneg %p91
      $region18: #{ssiamese_forward.2} parent=11 // pred_check_branch
        %139 = sbr.rel (%p137) target = $region20
      $region19: #{ssiamese_forward.2} parent=11 // pred_region
        _
      $region20: #{ssiamese_forward.2} parent=11 // pred_fallthru
        _
    $region12: #{ssiamese_forward.2} parent=5 // pred_fallthru
      _
    %p140 = scmp.lt.s32.totalorder %s9, 4
    // Predicated region
    $region21: #{ssiamese_forward.2} parent=5 // pred_check
      %p141 = pneg %p140
    $region22: #{ssiamese_forward.2} parent=5 // pred_check_branch
      %143 = sbr.rel (%p141) target = $region24
    $region23: #{ssiamese_forward.2} parent=5 // pred_region
      // Predicated region
      $region25: #{ssiamese_forward.2} parent=23 // pred_check
        %p144 = pneg %p43
      $region26: #{ssiamese_forward.2} parent=23 // pred_check_branch
        %146 = sbr.rel (%p144) target = $region28
      $region27: #{ssiamese_forward.2} parent=23 // pred_region
        %p147 = scmp.lt.s32.totalorder %s17, 1
        %s148 = scalar_select %p147, %s17, 1
        %p149 = scmp.lt.s32.totalorder %s16, 1
        %s150 = scalar_select %p149, %s16, 1
        %s151 = smul.addr %s150, 104
        %s152 = smul.addr %s148, 208
        %s153 = sadd.s32 %s151, %s152
        %s154 = smul.addr %s153, 8
        %s155 = scalar_lea.vmem %s0, %s154
      $region28: #{ssiamese_forward.2} parent=23 // pred_fallthru
        _
    $region24: #{ssiamese_forward.2} parent=5 // pred_fallthru
      _
    %p156 = scmp.le.s32.totalorder 1, %s9
    %p157 = scmp.lt.s32.totalorder %s9, 5
    %p158 = pnand %p156, %p157
    %p159 = pneg %p158
    // Predicated region
    $region29: #{ssiamese_forward.2} parent=5 // pred_check
      _
    $region30: #{ssiamese_forward.2} parent=5 // pred_check_branch
      %161 = sbr.rel (%p158) target = $region32
    $region31: #{ssiamese_forward.2} parent=5 // pred_region
      %s162 = ssub.s32 %s9, 1
      %p163 = scmp.lt.s32.totalorder %s19, 1
      %s164 = scalar_select %p163, %s19, 1
      %p165 = scmp.lt.s32.totalorder %s18, 1
      %s166 = scalar_select %p165, %s18, 1
      %s167 = smul.addr %s166, 104
      %s168 = smul.addr %s164, 208
      %s169 = sadd.s32 %s167, %s168
      %s170 = smul.addr %s169, 8
      %s171 = scalar_lea.vmem %s0, %s170
      %p172 = pneg %p49
      %p173 = pneg %p46
      %p174 = pneg %p70
      %p175 = pneg %p67
      %p176 = pneg %p91
      %p177 = pneg %p88
      %p178 = pneg %p119
      %p179 = pneg %p116
      %p180 = scmp.lt.s32.totalorder %s19, 1
      %s181 = scalar_select %p180, %s19, 1
      %p182 = scmp.lt.s32.totalorder %s18, 1
      %s183 = scalar_select %p182, %s18, 1
      %s184 = smul.addr %s183, 2
      %s185 = smul.addr %s181, 4
      %s186 = sadd.s32 %s184, %s185
      %s187 = smul.addr %s186, 8
      %s188 = scalar_lea.vmem %s3, %s187
      %p189 = scmp.lt.s32.totalorder %s19, 1
      %s190 = scalar_select %p189, %s19, 1
      %p191 = scmp.lt.s32.totalorder %s18, 1
      %s192 = scalar_select %p191, %s18, 1
      %s193 = smul.addr %s192, 104
      %s194 = smul.addr %s190, 208
      %s195 = sadd.s32 %s193, %s194
      %s196 = smul.addr %s195, 8
      %s197 = scalar_lea.vmem %s0, %s196
      %p198 = scmp.lt.s32.totalorder %s19, 1
      %s199 = scalar_select %p198, %s19, 1
      %p200 = scmp.lt.s32.totalorder %s18, 1
      %s201 = scalar_select %p200, %s18, 1
      %s202 = smul.addr %s201, 2
      %s203 = smul.addr %s199, 4
      %s204 = sadd.s32 %s202, %s203
      %s205 = smul.addr %s204, 8
      %s206 = scalar_lea.vmem %s3, %s205
      %p207 = scmp.eq.s32.totalorder %s19, 0
      // Predicated region
      $region33: #{ssiamese_forward.2} parent=31 // pred_check
        %p208 = pneg %p207
      $region34: #{ssiamese_forward.2} parent=31 // pred_check_branch
        %210 = sbr.rel (%p208) target = $region36
      $region35: #{ssiamese_forward.2} parent=31 // pred_region
        %211 = vst [vmem:[#allocation2] sm:$0xff] 0.0
        %vm212 = vcmask 588800
        %213 = vst.msk [vmem:[#allocation2 + $0x8] sm:$0xff] %vm212, 0.0
        %214 = vst [vmem:[#allocation2 + $0x10] sm:$0xff] 0.0
        %215 = vst.msk [vmem:[#allocation2 + $0x18] sm:$0xff] %vm212, 0.0
        %216 = vst [vmem:[#allocation2 + $0x20] sm:$0xff] 0.0
        %217 = vst.msk [vmem:[#allocation2 + $0x28] sm:$0xff] %vm212, 0.0
        %218 = vst [vmem:[#allocation2 + $0x30] sm:$0xff] 0.0
        %219 = vst.msk [vmem:[#allocation2 + $0x38] sm:$0xff] %vm212, 0.0
        %220 = vst [vmem:[#allocation3] sm:$0xff] 0.0
        %221 = vst.msk [vmem:[#allocation3 + $0x8] sm:$0xff] %vm212, 0.0
        %222 = vst [vmem:[#allocation3 + $0x10] sm:$0xff] 0.0
        %223 = vst.msk [vmem:[#allocation3 + $0x18] sm:$0xff] %vm212, 0.0
        %224 = vst [vmem:[#allocation3 + $0x20] sm:$0xff] 0.0
        %225 = vst.msk [vmem:[#allocation3 + $0x28] sm:$0xff] %vm212, 0.0
        %226 = vst [vmem:[#allocation3 + $0x30] sm:$0xff] 0.0
        %227 = vst.msk [vmem:[#allocation3 + $0x38] sm:$0xff] %vm212, 0.0
      $region36: #{ssiamese_forward.2} parent=31 // pred_fallthru
        _
      %v228 = vld [vmem:[%s1] sm:$0xff]
      %v229 = vld [vmem:[%s197] sm:$0xff]
      %v230 = vld [vmem:[%s197 + $0x8] sm:$0xff]
      %v231 = vld [vmem:[%s197 + $0x10] sm:$0xff]
      %v232 = vld [vmem:[%s197 + $0x18] sm:$0xff]
      %v233 = vld [vmem:[%s197 + $0x20] sm:$0xff]
      %v234 = vld [vmem:[%s197 + $0x28] sm:$0xff]
      %v235 = vld [vmem:[%s197 + $0x30] sm:$0xff]
      %v236 = vld [vmem:[%s197 + $0x38] sm:$0xff]
      %v237 = vld [vmem:[%s197 + $0x40] sm:$0xff]
      %v238 = vld [vmem:[%s197 + $0x48] sm:$0xff]
      %v239 = vld [vmem:[%s197 + $0x50] sm:$0xff]
      %v240 = vld [vmem:[%s197 + $0x58] sm:$0xff]
      %v241 = vld [vmem:[%s197 + $0x60] sm:$0xff]
      %v242 = vld [vmem:[%s197 + $0x68] sm:$0xff]
      %v243 = vld [vmem:[%s197 + $0x70] sm:$0xff]
      %v244 = vld [vmem:[%s197 + $0x78] sm:$0xff]
      %v245 = vld [vmem:[%s197 + $0x80] sm:$0xff]
      %v246 = vld [vmem:[%s197 + $0x88] sm:$0xff]
      %v247 = vld [vmem:[%s197 + $0x90] sm:$0xff]
      %v248 = vld [vmem:[%s197 + $0x98] sm:$0xff]
      %v249 = vld [vmem:[%s197 + $0xa0] sm:$0xff]
      %v250 = vld [vmem:[%s197 + $0xa8] sm:$0xff]
      %v251 = vld [vmem:[%s197 + $0xb0] sm:$0xff]
      %v252 = vld [vmem:[%s197 + $0xb8] sm:$0xff]
      %v253 = vld [vmem:[%s197 + $0xc0] sm:$0xf]
      %v254 = vld [vmem:[%s197 + $0xc8] sm:$0xf]
      %v255 = vld [vmem:[%s2] sm:$0xff]
      %257 = vset.pattern.permute.xlu0 0
      %258 = vperm.xlu0 %257, %v255
      %v259 = vpop.permute.xlu0 %258
      %vm261 = vcmask 818176
      %v263 = vsel %vm261, %v228, 0
      %vm265 = vcmask 1043456
      %v267 = vsel %vm265, %v253, 0
      %v270 = vsel %vm265, %v254, 0
      %272 = vmatprep.subr.mxu0 0.0
      %273 = vmatpush1.msra.mxu0 0.0
      %274 = vmatprep.subr.mxu0 0.0
      %275 = vmatpush1.msra.mxu0 0.0
      %276 = vmatprep.subr.mxu0 0.0
      %277 = vmatpush1.msra.mxu0 0.0
      %278 = vmatprep.subr.mxu0 %v270
      %279 = vmatpush1.msra.mxu0 %v267
      %280 = vmatprep.subr.mxu0 %v252
      %281 = vmatpush1.msra.mxu0 %v251
      %282 = vmatprep.subr.mxu0 %v250
      %283 = vmatpush1.msra.mxu0 %v249
      %284 = vmatprep.subr.mxu0 %v248
      %285 = vmatpush1.msra.mxu0 %v247
      %286 = vmatprep.subr.mxu0 %v246
      %287 = vmatpush1.msra.mxu0 %v245
      %288 = vmatprep.subr.mxu0 %v244
      %289 = vmatpush1.msra.mxu0 %v243
      %290 = vmatprep.subr.mxu0 %v242
      %291 = vmatpush1.msra.mxu0 %v241
      %292 = vmatprep.subr.mxu0 %v240
      %293 = vmatpush1.msra.mxu0 %v239
      %294 = vmatprep.subr.mxu0 %v238
      %295 = vmatpush1.msra.mxu0 %v237
      %296 = vmatprep.subr.mxu0 %v236
      %297 = vmatpush1.msra.mxu0 %v235
      %298 = vmatprep.subr.mxu0 %v234
      %299 = vmatpush1.msra.mxu0 %v233
      %300 = vmatprep.subr.mxu0 %v232
      %301 = vmatpush1.msra.mxu0 %v231
      %302 = vmatprep.subr.mxu0 %v230
      %303 = vmatpush1.msra.mxu0 %v229
      %304 = vmatprep.subr.mxu0 0.0
      %305 = vmatpush2.msra.mxu0 0.0
      %306 = vmatprep.subr.mxu0 0.0
      %307 = vmatpush2.msra.mxu0 0.0
      %308 = vmatprep.subr.mxu0 0.0
      %309 = vmatpush2.msra.mxu0 0.0
      %310 = vmatprep.subr.mxu0 0.0
      %311 = vmatpush2.msra.mxu0 0.0
      %312 = vmatprep.subr.mxu0 0.0
      %313 = vmatpush2.msra.mxu0 0.0
      %314 = vmatprep.subr.mxu0 0.0
      %315 = vmatpush2.msra.mxu0 0.0
      %316 = vmatprep.subr.mxu0 0.0
      %317 = vmatpush2.msra.mxu0 0.0
      %318 = vmatprep.subr.mxu0 0.0
      %319 = vmatpush2.msra.mxu0 0.0
      %320 = vmatprep.subr.mxu0 0.0
      %321 = vmatpush2.msra.mxu0 0.0
      %322 = vmatprep.subr.mxu0 0.0
      %323 = vmatpush2.msra.mxu0 0.0
      %324 = vmatprep.subr.mxu0 0.0
      %325 = vmatpush2.msra.mxu0 0.0
      %326 = vmatprep.subr.mxu0 0.0
      %327 = vmatpush2.msra.mxu0 0.0
      %328 = vmatprep.subr.mxu0 0.0
      %329 = vmatpush2.msra.mxu0 0.0
      %330 = vmatprep.subr.mxu0 0.0
      %331 = vmatpush2.msra.mxu0 0.0
      %332 = vmatprep.subr.mxu0 0.0
      %333 = vmatpush2.msra.mxu0 0.0
      %334 = vmatprep.subr.mxu0 0.0
      %335 = vmatpush2.msra.mxu0 0.0
      %336 = vmatprep.mubr.f32.mxu0 0.0
      %337 = vmatmul.mubr.f32.gmra.mxu0 %v263
      %v338 = vpop.f32.mrf.mxu0
      %v339 = vadd.f32 %v259, %v338
      %v340 = vpop.f32.mrf.mxu0
      %v341 = vadd.f32 %v259, %v340
      %342 = vdwg.mxu0
      %v343 = vld [vmem:[#allocation2] sm:$0xff]
      %v344 = vld [vmem:[#allocation2 + $0x8] sm:$0xff]
      %v345 = vmul.f32 %v343, 0.2
      %v346 = vmul.f32 %v344, 0.2
      %v347 = vld [vmem:[#allocation3] sm:$0xff]
      %v348 = vld [vmem:[#allocation3 + $0x8] sm:$0xff]
      %v349 = vsub.f32 1.0, %v347
      %v350 = vsub.f32 1.0, %v348
      %v351 = vmul.f32 %v345, %v349
      %v352 = vmul.f32 %v346, %v350
      %v353 = vadd.f32 %v351, %v339
      %v354 = vadd.f32 %v352, %v341
      %vm355 = vcmp.gt.f32.partialorder %v353, 0.5
      %vm356 = vcmp.gt.f32.partialorder %v354, 0.5
      %v357 = vsel %vm355, 1, 0
      %v358 = vsel %vm356, 1, 0
      %v359 = vcvt.s32.f32 %v357
      %v360 = vcvt.s32.f32 %v358
      %361 = vst [vmem:[#allocation2] sm:$0xff] %v353
      %vm362 = vcmask 588800
      %363 = vst.msk [vmem:[#allocation2 + $0x8] sm:$0xff] %vm362, %v354
      %364 = vst [vmem:[#allocation3] sm:$0xff] %v359
      %365 = vst.msk [vmem:[#allocation3 + $0x8] sm:$0xff] %vm362, %v360
      %v366 = vmul.f32 %v359, 0.25
      %v367 = vmul.f32 %v360, 0.25
      %v368 = vadd.f32 %v366, 0.0
      %v369 = vadd.f32 %v367, 0.0
      %v370 = vld [vmem:[%s1] sm:$0xff]
      %s371 = scalar_lea.vmem %s197, 208
      %v372 = vld [vmem:[%s371] sm:$0xff]
      %v373 = vld [vmem:[%s371 + $0x8] sm:$0xff]
      %v374 = vld [vmem:[%s371 + $0x10] sm:$0xff]
      %v375 = vld [vmem:[%s371 + $0x18] sm:$0xff]
      %v376 = vld [vmem:[%s371 + $0x20] sm:$0xff]
      %v377 = vld [vmem:[%s371 + $0x28] sm:$0xff]
      %v378 = vld [vmem:[%s371 + $0x30] sm:$0xff]
      %v379 = vld [vmem:[%s371 + $0x38] sm:$0xff]
      %v380 = vld [vmem:[%s371 + $0x40] sm:$0xff]
      %v381 = vld [vmem:[%s371 + $0x48] sm:$0xff]
      %v382 = vld [vmem:[%s371 + $0x50] sm:$0xff]
      %v383 = vld [vmem:[%s371 + $0x58] sm:$0xff]
      %v384 = vld [vmem:[%s371 + $0x60] sm:$0xff]
      %v385 = vld [vmem:[%s371 + $0x68] sm:$0xff]
      %v386 = vld [vmem:[%s371 + $0x70] sm:$0xff]
      %v387 = vld [vmem:[%s371 + $0x78] sm:$0xff]
      %v388 = vld [vmem:[%s371 + $0x80] sm:$0xff]
      %v389 = vld [vmem:[%s371 + $0x88] sm:$0xff]
      %v390 = vld [vmem:[%s371 + $0x90] sm:$0xff]
      %v391 = vld [vmem:[%s371 + $0x98] sm:$0xff]
      %v392 = vld [vmem:[%s371 + $0xa0] sm:$0xff]
      %v393 = vld [vmem:[%s371 + $0xa8] sm:$0xff]
      %v394 = vld [vmem:[%s371 + $0xb0] sm:$0xff]
      %v395 = vld [vmem:[%s371 + $0xb8] sm:$0xff]
      %v396 = vld [vmem:[%s371 + $0xc0] sm:$0xf]
      %v397 = vld [vmem:[%s371 + $0xc8] sm:$0xf]
      %v398 = vld [vmem:[%s2] sm:$0xff]
      %400 = vset.pattern.permute.xlu0 0
      %401 = vperm.xlu0 %400, %v398
      %v402 = vpop.permute.xlu0 %401
      %v405 = vsel %vm261, %v370, 0
      %v408 = vsel %vm265, %v396, 0
      %v411 = vsel %vm265, %v397, 0
      %413 = vmatprep.subr.mxu0 0.0
      %414 = vmatpush1.msra.mxu0 0.0
      %415 = vmatprep.subr.mxu0 0.0
      %416 = vmatpush1.msra.mxu0 0.0
      %417 = vmatprep.subr.mxu0 0.0
      %418 = vmatpush1.msra.mxu0 0.0
      %419 = vmatprep.subr.mxu0 %v411
      %420 = vmatpush1.msra.mxu0 %v408
      %421 = vmatprep.subr.mxu0 %v395
      %422 = vmatpush1.msra.mxu0 %v394
      %423 = vmatprep.subr.mxu0 %v393
      %424 = vmatpush1.msra.mxu0 %v392
      %425 = vmatprep.subr.mxu0 %v391
      %426 = vmatpush1.msra.mxu0 %v390
      %427 = vmatprep.subr.mxu0 %v389
      %428 = vmatpush1.msra.mxu0 %v388
      %429 = vmatprep.subr.mxu0 %v387
      %430 = vmatpush1.msra.mxu0 %v386
      %431 = vmatprep.subr.mxu0 %v385
      %432 = vmatpush1.msra.mxu0 %v384
      %433 = vmatprep.subr.mxu0 %v383
      %434 = vmatpush1.msra.mxu0 %v382
      %435 = vmatprep.subr.mxu0 %v381
      %436 = vmatpush1.msra.mxu0 %v380
      %437 = vmatprep.subr.mxu0 %v379
      %438 = vmatpush1.msra.mxu0 %v378
      %439 = vmatprep.subr.mxu0 %v377
      %440 = vmatpush1.msra.mxu0 %v376
      %441 = vmatprep.subr.mxu0 %v375
      %442 = vmatpush1.msra.mxu0 %v374
      %443 = vmatprep.subr.mxu0 %v373
      %444 = vmatpush1.msra.mxu0 %v372
      %445 = vmatprep.subr.mxu0 0.0
      %446 = vmatpush2.msra.mxu0 0.0
      %447 = vmatprep.subr.mxu0 0.0
      %448 = vmatpush2.msra.mxu0 0.0
      %449 = vmatprep.subr.mxu0 0.0
      %450 = vmatpush2.msra.mxu0 0.0
      %451 = vmatprep.subr.mxu0 0.0
      %452 = vmatpush2.msra.mxu0 0.0
      %453 = vmatprep.subr.mxu0 0.0
      %454 = vmatpush2.msra.mxu0 0.0
      %455 = vmatprep.subr.mxu0 0.0
      %456 = vmatpush2.msra.mxu0 0.0
      %457 = vmatprep.subr.mxu0 0.0
      %458 = vmatpush2.msra.mxu0 0.0
      %459 = vmatprep.subr.mxu0 0.0
      %460 = vmatpush2.msra.mxu0 0.0
      %461 = vmatprep.subr.mxu0 0.0
      %462 = vmatpush2.msra.mxu0 0.0
      %463 = vmatprep.subr.mxu0 0.0
      %464 = vmatpush2.msra.mxu0 0.0
      %465 = vmatprep.subr.mxu0 0.0
      %466 = vmatpush2.msra.mxu0 0.0
      %467 = vmatprep.subr.mxu0 0.0
      %468 = vmatpush2.msra.mxu0 0.0
      %469 = vmatprep.subr.mxu0 0.0
      %470 = vmatpush2.msra.mxu0 0.0
      %471 = vmatprep.subr.mxu0 0.0
      %472 = vmatpush2.msra.mxu0 0.0
      %473 = vmatprep.subr.mxu0 0.0
      %474 = vmatpush2.msra.mxu0 0.0
      %475 = vmatprep.subr.mxu0 0.0
      %476 = vmatpush2.msra.mxu0 0.0
      %477 = vmatprep.mubr.f32.mxu0 0.0
      %478 = vmatmul.mubr.f32.gmra.mxu0 %v405
      %v479 = vpop.f32.mrf.mxu0
      %v480 = vadd.f32 %v402, %v479
      %v481 = vpop.f32.mrf.mxu0
      %v482 = vadd.f32 %v402, %v481
      %483 = vdwg.mxu0
      %s484 = scalar_lea.vmem [#allocation2], 16
      %v485 = vld [vmem:[%s484] sm:$0xff]
      %v486 = vld [vmem:[%s484 + $0x8] sm:$0xff]
      %v487 = vmul.f32 %v485, 0.2
      %v488 = vmul.f32 %v486, 0.2
      %s489 = scalar_lea.vmem [#allocation3], 16
      %v490 = vld [vmem:[%s489] sm:$0xff]
      %v491 = vld [vmem:[%s489 + $0x8] sm:$0xff]
      %v492 = vsub.f32 1.0, %v490
      %v493 = vsub.f32 1.0, %v491
      %v494 = vmul.f32 %v487, %v492
      %v495 = vmul.f32 %v488, %v493
      %v496 = vadd.f32 %v494, %v480
      %v497 = vadd.f32 %v495, %v482
      %vm498 = vcmp.gt.f32.partialorder %v496, 0.5
      %vm499 = vcmp.gt.f32.partialorder %v497, 0.5
      %v500 = vsel %vm498, 1, 0
      %v501 = vsel %vm499, 1, 0
      %v502 = vcvt.s32.f32 %v500
      %v503 = vcvt.s32.f32 %v501
      %504 = vst [vmem:[%s484] sm:$0xff] %v496
      %505 = vst.msk [vmem:[%s484 + $0x8] sm:$0xff] %vm362, %v497
      %506 = vst [vmem:[%s489] sm:$0xff] %v502
      %507 = vst.msk [vmem:[%s489 + $0x8] sm:$0xff] %vm362, %v503
      %v508 = vmul.f32 %v502, 0.25
      %v509 = vmul.f32 %v503, 0.25
      %v510 = vadd.f32 %v368, %v508
      %v511 = vadd.f32 %v369, %v509
      %v512 = vld [vmem:[%s1] sm:$0xff]
      %s513 = scalar_lea.vmem %s197, 416
      %v514 = vld [vmem:[%s513] sm:$0xff]
      %v515 = vld [vmem:[%s513 + $0x8] sm:$0xff]
      %v516 = vld [vmem:[%s513 + $0x10] sm:$0xff]
      %v517 = vld [vmem:[%s513 + $0x18] sm:$0xff]
      %v518 = vld [vmem:[%s513 + $0x20] sm:$0xff]
      %v519 = vld [vmem:[%s513 + $0x28] sm:$0xff]
      %v520 = vld [vmem:[%s513 + $0x30] sm:$0xff]
      %v521 = vld [vmem:[%s513 + $0x38] sm:$0xff]
      %v522 = vld [vmem:[%s513 + $0x40] sm:$0xff]
      %v523 = vld [vmem:[%s513 + $0x48] sm:$0xff]
      %v524 = vld [vmem:[%s513 + $0x50] sm:$0xff]
      %v525 = vld [vmem:[%s513 + $0x58] sm:$0xff]
      %v526 = vld [vmem:[%s513 + $0x60] sm:$0xff]
      %v527 = vld [vmem:[%s513 + $0x68] sm:$0xff]
      %v528 = vld [vmem:[%s513 + $0x70] sm:$0xff]
      %v529 = vld [vmem:[%s513 + $0x78] sm:$0xff]
      %v530 = vld [vmem:[%s513 + $0x80] sm:$0xff]
      %v531 = vld [vmem:[%s513 + $0x88] sm:$0xff]
      %v532 = vld [vmem:[%s513 + $0x90] sm:$0xff]
      %v533 = vld [vmem:[%s513 + $0x98] sm:$0xff]
      %v534 = vld [vmem:[%s513 + $0xa0] sm:$0xff]
      %v535 = vld [vmem:[%s513 + $0xa8] sm:$0xff]
      %v536 = vld [vmem:[%s513 + $0xb0] sm:$0xff]
      %v537 = vld [vmem:[%s513 + $0xb8] sm:$0xff]
      %v538 = vld [vmem:[%s513 + $0xc0] sm:$0xf]
      %v539 = vld [vmem:[%s513 + $0xc8] sm:$0xf]
      %v540 = vld [vmem:[%s2] sm:$0xff]
      %542 = vset.pattern.permute.xlu0 0
      %543 = vperm.xlu0 %542, %v540
      %v544 = vpop.permute.xlu0 %543
      %v547 = vsel %vm261, %v512, 0
      %v550 = vsel %vm265, %v538, 0
      %v553 = vsel %vm265, %v539, 0
      %555 = vmatprep.subr.mxu0 0.0
      %556 = vmatpush1.msra.mxu0 0.0
      %557 = vmatprep.subr.mxu0 0.0
      %558 = vmatpush1.msra.mxu0 0.0
      %559 = vmatprep.subr.mxu0 0.0
      %560 = vmatpush1.msra.mxu0 0.0
      %561 = vmatprep.subr.mxu0 %v553
      %562 = vmatpush1.msra.mxu0 %v550
      %563 = vmatprep.subr.mxu0 %v537
      %564 = vmatpush1.msra.mxu0 %v536
      %565 = vmatprep.subr.mxu0 %v535
      %566 = vmatpush1.msra.mxu0 %v534
      %567 = vmatprep.subr.mxu0 %v533
      %568 = vmatpush1.msra.mxu0 %v532
      %569 = vmatprep.subr.mxu0 %v531
      %570 = vmatpush1.msra.mxu0 %v530
      %571 = vmatprep.subr.mxu0 %v529
      %572 = vmatpush1.msra.mxu0 %v528
      %573 = vmatprep.subr.mxu0 %v527
      %574 = vmatpush1.msra.mxu0 %v526
      %575 = vmatprep.subr.mxu0 %v525
      %576 = vmatpush1.msra.mxu0 %v524
      %577 = vmatprep.subr.mxu0 %v523
      %578 = vmatpush1.msra.mxu0 %v522
      %579 = vmatprep.subr.mxu0 %v521
      %580 = vmatpush1.msra.mxu0 %v520
      %581 = vmatprep.subr.mxu0 %v519
      %582 = vmatpush1.msra.mxu0 %v518
      %583 = vmatprep.subr.mxu0 %v517
      %584 = vmatpush1.msra.mxu0 %v516
      %585 = vmatprep.subr.mxu0 %v515
      %586 = vmatpush1.msra.mxu0 %v514
      %587 = vmatprep.subr.mxu0 0.0
      %588 = vmatpush2.msra.mxu0 0.0
      %589 = vmatprep.subr.mxu0 0.0
      %590 = vmatpush2.msra.mxu0 0.0
      %591 = vmatprep.subr.mxu0 0.0
      %592 = vmatpush2.msra.mxu0 0.0
      %593 = vmatprep.subr.mxu0 0.0
      %594 = vmatpush2.msra.mxu0 0.0
      %595 = vmatprep.subr.mxu0 0.0
      %596 = vmatpush2.msra.mxu0 0.0
      %597 = vmatprep.subr.mxu0 0.0
      %598 = vmatpush2.msra.mxu0 0.0
      %599 = vmatprep.subr.mxu0 0.0
      %600 = vmatpush2.msra.mxu0 0.0
      %601 = vmatprep.subr.mxu0 0.0
      %602 = vmatpush2.msra.mxu0 0.0
      %603 = vmatprep.subr.mxu0 0.0
      %604 = vmatpush2.msra.mxu0 0.0
      %605 = vmatprep.subr.mxu0 0.0
      %606 = vmatpush2.msra.mxu0 0.0
      %607 = vmatprep.subr.mxu0 0.0
      %608 = vmatpush2.msra.mxu0 0.0
      %609 = vmatprep.subr.mxu0 0.0
      %610 = vmatpush2.msra.mxu0 0.0
      %611 = vmatprep.subr.mxu0 0.0
      %612 = vmatpush2.msra.mxu0 0.0
      %613 = vmatprep.subr.mxu0 0.0
      %614 = vmatpush2.msra.mxu0 0.0
      %615 = vmatprep.subr.mxu0 0.0
      %616 = vmatpush2.msra.mxu0 0.0
      %617 = vmatprep.subr.mxu0 0.0
      %618 = vmatpush2.msra.mxu0 0.0
      %619 = vmatprep.mubr.f32.mxu0 0.0
      %620 = vmatmul.mubr.f32.gmra.mxu0 %v547
      %v621 = vpop.f32.mrf.mxu0
      %v622 = vadd.f32 %v544, %v621
      %v623 = vpop.f32.mrf.mxu0
      %v624 = vadd.f32 %v544, %v623
      %625 = vdwg.mxu0
      %s626 = scalar_lea.vmem [#allocation2], 32
      %v627 = vld [vmem:[%s626] sm:$0xff]
      %v628 = vld [vmem:[%s626 + $0x8] sm:$0xff]
      %v629 = vmul.f32 %v627, 0.2
      %v630 = vmul.f32 %v628, 0.2
      %s631 = scalar_lea.vmem [#allocation3], 32
      %v632 = vld [vmem:[%s631] sm:$0xff]
      %v633 = vld [vmem:[%s631 + $0x8] sm:$0xff]
      %v634 = vsub.f32 1.0, %v632
      %v635 = vsub.f32 1.0, %v633
      %v636 = vmul.f32 %v629, %v634
      %v637 = vmul.f32 %v630, %v635
      %v638 = vadd.f32 %v636, %v622
      %v639 = vadd.f32 %v637, %v624
      %vm640 = vcmp.gt.f32.partialorder %v638, 0.5
      %vm641 = vcmp.gt.f32.partialorder %v639, 0.5
      %v642 = vsel %vm640, 1, 0
      %v643 = vsel %vm641, 1, 0
      %v644 = vcvt.s32.f32 %v642
      %v645 = vcvt.s32.f32 %v643
      %646 = vst [vmem:[%s626] sm:$0xff] %v638
      %647 = vst.msk [vmem:[%s626 + $0x8] sm:$0xff] %vm362, %v639
      %648 = vst [vmem:[%s631] sm:$0xff] %v644
      %649 = vst.msk [vmem:[%s631 + $0x8] sm:$0xff] %vm362, %v645
      %v650 = vmul.f32 %v644, 0.25
      %v651 = vmul.f32 %v645, 0.25
      %v652 = vadd.f32 %v510, %v650
      %v653 = vadd.f32 %v511, %v651
      %v654 = vld [vmem:[%s1] sm:$0xff]
      %s655 = scalar_lea.vmem %s197, 624
      %v656 = vld [vmem:[%s655] sm:$0xff]
      %v657 = vld [vmem:[%s655 + $0x8] sm:$0xff]
      %v658 = vld [vmem:[%s655 + $0x10] sm:$0xff]
      %v659 = vld [vmem:[%s655 + $0x18] sm:$0xff]
      %v660 = vld [vmem:[%s655 + $0x20] sm:$0xff]
      %v661 = vld [vmem:[%s655 + $0x28] sm:$0xff]
      %v662 = vld [vmem:[%s655 + $0x30] sm:$0xff]
      %v663 = vld [vmem:[%s655 + $0x38] sm:$0xff]
      %v664 = vld [vmem:[%s655 + $0x40] sm:$0xff]
      %v665 = vld [vmem:[%s655 + $0x48] sm:$0xff]
      %v666 = vld [vmem:[%s655 + $0x50] sm:$0xff]
      %v667 = vld [vmem:[%s655 + $0x58] sm:$0xff]
      %v668 = vld [vmem:[%s655 + $0x60] sm:$0xff]
      %v669 = vld [vmem:[%s655 + $0x68] sm:$0xff]
      %v670 = vld [vmem:[%s655 + $0x70] sm:$0xff]
      %v671 = vld [vmem:[%s655 + $0x78] sm:$0xff]
      %v672 = vld [vmem:[%s655 + $0x80] sm:$0xff]
      %v673 = vld [vmem:[%s655 + $0x88] sm:$0xff]
      %v674 = vld [vmem:[%s655 + $0x90] sm:$0xff]
      %v675 = vld [vmem:[%s655 + $0x98] sm:$0xff]
      %v676 = vld [vmem:[%s655 + $0xa0] sm:$0xff]
      %v677 = vld [vmem:[%s655 + $0xa8] sm:$0xff]
      %v678 = vld [vmem:[%s655 + $0xb0] sm:$0xff]
      %v679 = vld [vmem:[%s655 + $0xb8] sm:$0xff]
      %v680 = vld [vmem:[%s655 + $0xc0] sm:$0xf]
      %v681 = vld [vmem:[%s655 + $0xc8] sm:$0xf]
      %v682 = vld [vmem:[%s2] sm:$0xff]
      %684 = vset.pattern.permute.xlu0 0
      %685 = vperm.xlu0 %684, %v682
      %v686 = vpop.permute.xlu0 %685
      %v689 = vsel %vm261, %v654, 0
      %v692 = vsel %vm265, %v680, 0
      %v695 = vsel %vm265, %v681, 0
      %697 = vmatprep.subr.mxu0 0.0
      %698 = vmatpush1.msra.mxu0 0.0
      %699 = vmatprep.subr.mxu0 0.0
      %700 = vmatpush1.msra.mxu0 0.0
      %701 = vmatprep.subr.mxu0 0.0
      %702 = vmatpush1.msra.mxu0 0.0
      %703 = vmatprep.subr.mxu0 %v695
      %704 = vmatpush1.msra.mxu0 %v692
      %705 = vmatprep.subr.mxu0 %v679
      %706 = vmatpush1.msra.mxu0 %v678
      %707 = vmatprep.subr.mxu0 %v677
      %708 = vmatpush1.msra.mxu0 %v676
      %709 = vmatprep.subr.mxu0 %v675
      %710 = vmatpush1.msra.mxu0 %v674
      %711 = vmatprep.subr.mxu0 %v673
      %712 = vmatpush1.msra.mxu0 %v672
      %713 = vmatprep.subr.mxu0 %v671
      %714 = vmatpush1.msra.mxu0 %v670
      %715 = vmatprep.subr.mxu0 %v669
      %716 = vmatpush1.msra.mxu0 %v668
      %717 = vmatprep.subr.mxu0 %v667
      %718 = vmatpush1.msra.mxu0 %v666
      %719 = vmatprep.subr.mxu0 %v665
      %720 = vmatpush1.msra.mxu0 %v664
      %721 = vmatprep.subr.mxu0 %v663
      %722 = vmatpush1.msra.mxu0 %v662
      %723 = vmatprep.subr.mxu0 %v661
      %724 = vmatpush1.msra.mxu0 %v660
      %725 = vmatprep.subr.mxu0 %v659
      %726 = vmatpush1.msra.mxu0 %v658
      %727 = vmatprep.subr.mxu0 %v657
      %728 = vmatpush1.msra.mxu0 %v656
      %729 = vmatprep.subr.mxu0 0.0
      %730 = vmatpush2.msra.mxu0 0.0
      %731 = vmatprep.subr.mxu0 0.0
      %732 = vmatpush2.msra.mxu0 0.0
      %733 = vmatprep.subr.mxu0 0.0
      %734 = vmatpush2.msra.mxu0 0.0
      %735 = vmatprep.subr.mxu0 0.0
      %736 = vmatpush2.msra.mxu0 0.0
      %737 = vmatprep.subr.mxu0 0.0
      %738 = vmatpush2.msra.mxu0 0.0
      %739 = vmatprep.subr.mxu0 0.0
      %740 = vmatpush2.msra.mxu0 0.0
      %741 = vmatprep.subr.mxu0 0.0
      %742 = vmatpush2.msra.mxu0 0.0
      %743 = vmatprep.subr.mxu0 0.0
      %744 = vmatpush2.msra.mxu0 0.0
      %745 = vmatprep.subr.mxu0 0.0
      %746 = vmatpush2.msra.mxu0 0.0
      %747 = vmatprep.subr.mxu0 0.0
      %748 = vmatpush2.msra.mxu0 0.0
      %749 = vmatprep.subr.mxu0 0.0
      %750 = vmatpush2.msra.mxu0 0.0
      %751 = vmatprep.subr.mxu0 0.0
      %752 = vmatpush2.msra.mxu0 0.0
      %753 = vmatprep.subr.mxu0 0.0
      %754 = vmatpush2.msra.mxu0 0.0
      %755 = vmatprep.subr.mxu0 0.0
      %756 = vmatpush2.msra.mxu0 0.0
      %757 = vmatprep.subr.mxu0 0.0
      %758 = vmatpush2.msra.mxu0 0.0
      %759 = vmatprep.subr.mxu0 0.0
      %760 = vmatpush2.msra.mxu0 0.0
      %761 = vmatprep.mubr.f32.mxu0 0.0
      %762 = vmatmul.mubr.f32.gmra.mxu0 %v689
      %v763 = vpop.f32.mrf.mxu0
      %v764 = vadd.f32 %v686, %v763
      %v765 = vpop.f32.mrf.mxu0
      %v766 = vadd.f32 %v686, %v765
      %767 = vdwg.mxu0
      %s768 = scalar_lea.vmem [#allocation2], 48
      %v769 = vld [vmem:[%s768] sm:$0xff]
      %v770 = vld [vmem:[%s768 + $0x8] sm:$0xff]
      %v771 = vmul.f32 %v769, 0.2
      %v772 = vmul.f32 %v770, 0.2
      %s773 = scalar_lea.vmem [#allocation3], 48
      %v774 = vld [vmem:[%s773] sm:$0xff]
      %v775 = vld [vmem:[%s773 + $0x8] sm:$0xff]
      %v776 = vsub.f32 1.0, %v774
      %v777 = vsub.f32 1.0, %v775
      %v778 = vmul.f32 %v771, %v776
      %v779 = vmul.f32 %v772, %v777
      %v780 = vadd.f32 %v778, %v764
      %v781 = vadd.f32 %v779, %v766
      %vm782 = vcmp.gt.f32.partialorder %v780, 0.5
      %vm783 = vcmp.gt.f32.partialorder %v781, 0.5
      %v784 = vsel %vm782, 1, 0
      %v785 = vsel %vm783, 1, 0
      %v786 = vcvt.s32.f32 %v784
      %v787 = vcvt.s32.f32 %v785
      %788 = vst [vmem:[%s768] sm:$0xff] %v780
      %789 = vst.msk [vmem:[%s768 + $0x8] sm:$0xff] %vm362, %v781
      %790 = vst [vmem:[%s773] sm:$0xff] %v786
      %791 = vst.msk [vmem:[%s773 + $0x8] sm:$0xff] %vm362, %v787
      %v792 = vmul.f32 %v786, 0.25
      %v793 = vmul.f32 %v787, 0.25
      %v794 = vadd.f32 %v652, %v792
      %v795 = vadd.f32 %v653, %v793
      %796 = vst [vmem:[%s206] sm:$0xff] %v794
      %797 = vst.msk [vmem:[%s206 + $0x8] sm:$0xff] %vm362, %v795
      %p798 = scmp.lt.s32.totalorder %s19, 1
      %s799 = scalar_select %p798, %s19, 1
      %p800 = scmp.lt.s32.totalorder %s18, 1
      %s801 = scalar_select %p800, %s18, 1
      %s802 = smul.addr %s801, 2
      %s803 = smul.addr %s799, 4
      %s804 = sadd.s32 %s802, %s803
      %s805 = smul.addr %s804, 8
      %s806 = scalar_lea.vmem %s3, %s805
      // Predicated region
      $region37: #{ssiamese_forward.2} parent=31 // pred_check
        %p807 = pneg %p116
      $region38: #{ssiamese_forward.2} parent=31 // pred_check_branch
        %809 = sbr.rel (%p807) target = $region40
      $region39: #{ssiamese_forward.2} parent=31 // pred_region
        _
      $region40: #{ssiamese_forward.2} parent=31 // pred_fallthru
        _
    $region32: #{ssiamese_forward.2} parent=5 // pred_fallthru
      _
    %p810 = scmp.le.s32.totalorder 2, %s9
    // Predicated region
    $region41: #{ssiamese_forward.2} parent=5 // pred_check
      %p811 = pneg %p810
    $region42: #{ssiamese_forward.2} parent=5 // pred_check_branch
      %813 = sbr.rel (%p811) target = $region44
    $region43: #{ssiamese_forward.2} parent=5 // pred_region
      %s814 = ssub.s32 %s9, 2
      // Predicated region
      $region45: #{ssiamese_forward.2} parent=43 // pred_check
        %p815 = pneg %p122
      $region46: #{ssiamese_forward.2} parent=43 // pred_check_branch
        %817 = sbr.rel (%p815) target = $region48
      $region47: #{ssiamese_forward.2} parent=43 // pred_region
        %p818 = scmp.lt.s32.totalorder %s21, 1
        %s819 = scalar_select %p818, %s21, 1
        %p820 = scmp.lt.s32.totalorder %s20, 1
        %s821 = scalar_select %p820, %s20, 1
        %s822 = smul.addr %s821, 2
        %s823 = smul.addr %s819, 4
        %s824 = sadd.s32 %s822, %s823
        %s825 = smul.addr %s824, 8
        %s826 = scalar_lea.vmem %s3, %s825
      $region48: #{ssiamese_forward.2} parent=43 // pred_fallthru
        _
    $region44: #{ssiamese_forward.2} parent=5 // pred_fallthru
      _
  $region6: #{ssiamese_forward.2} parent=0 // loop_footer
    %s13 = sadd.s32 1, %s9
  $region7: #{ssiamese_forward.2} parent=0 // loop_footer_branch
    %8 = sbr.rel target = $region3
  $region8: #{ssiamese_forward.2} parent=0 // loop_exit
    _

// kernel: ssiamese_forward.3
$region0: #{ssiamese_forward.3}
  #allocation0 [shape = 'u32[]', space=smem, size = 0x4, offset = 0x4, fixed_abs, tag = 'smem constant byte address 0x4 - core index']
  #allocation1 [shape = 'u32[144,128]{1,0:T(1,128)}', space=vmem, size = 0x12000, scoped, tag = 'internal scratch']
  #allocation2 [shape = 'f32[4,16,16]{2,1,0:T(8,128)}', space=vmem, size = 0x8000, scoped, tag = 'scratch operand']
  #allocation3 [shape = 'f32[4,16,16]{2,1,0:T(8,128)}', space=vmem, size = 0x8000, scoped, tag = 'scratch operand']
  #allocation4 [shape = 'f32[32,2]{1,0:T(8,128)}', space=vmem, size = 0x4000, scoped, tag = 'scratch operand']
  #allocation5 [shape = 'f32[32,2]{1,0:T(8,128)}', space=vmem, size = 0x4000, scoped, tag = 'scratch operand']
  #allocation6 [shape = 'f32[1,1]{1,0:T(1,128)S(1)}', space=vmem, size = 0x200, scoped, tag = 'scoped memory for ssiamese_forward.3']
  %s0 = inlined_call_operand.vmem [shape: f32[2,4,392,16], index: 0, kind: input, shape index: {}]
  %s1 = inlined_call_operand.vmem [shape: f32[16,392], index: 1, kind: input, shape index: {}]
  %s2 = inlined_call_operand.vmem [shape: f32[16,1], index: 2, kind: input, shape index: {}]
  %s3 = inlined_call_operand.vmem [shape: f32[4,32,16], index: 3, kind: input, shape index: {}]
  %s4 = inlined_call_operand.vmem [shape: f32[32,1], index: 4, kind: input, shape index: {}]
  %s5 = inlined_call_operand.vmem [shape: f32[32,1], index: 5, kind: input, shape index: {}]
  %s6 = inlined_call_operand.<no memory space> [shape: f32[1,1], index: 6, kind: input, shape index: {}]
  %s7 = inlined_call_operand.hbm [shape: f32[1,2], index: 7, kind: output, shape index: {}]
  %s8 = sld [smem:[#allocation0]]
  $region65: #{ssiamese_forward.3} parent=0
    _
  %s10 = ssub.s32 1, %s8
  %s11 = scalar_select 0, %s10, %s8
  %v12 = vstv %s6
  %13 = vst [vmem:[#allocation6] sm:$0x1] %v12
  $region1: #{ssiamese_forward.3} parent=0
    #allocation7 [shape = 'u8[512]{0}', space=vmem, size = 0x400, scoped, tag = 'output window, operand 0, single buffered']
    #allocation8 [shape = 's32[2]{0}', space=sflag, size = 0x8, scoped, tag = 'scoped memory for ssiamese_forward.3']
    %14 = vsyncpa [#allocation8], 0
    loop: start=0, step=1, limit=4
    $region2: #{ssiamese_forward.3} parent=1 // loop_pre_header
      _
    $region3: #{ssiamese_forward.3} parent=1 // loop_header
      %s16 = sphi 0, %s20
      %p17 = scmp.ge.s32.totalorder %s16, 4
      %s26 = sphi 0, %s28
      %s29 = sphi 0, %s26
      %s30 = sphi 0, %s29
      %s46 = sphi 0, %s30
      %s50 = sphi 0, %s50
      %s52 = sphi 0, %s50
      %s53 = sphi 0, %s52
      %s67 = sphi 0, %s53
      %s71 = sphi 0, %s71
      %s73 = sphi 0, %s71
      %s74 = sphi 0, %s73
      %s88 = sphi 0, %s74
      %s92 = sphi 0, %s92
      %s94 = sphi 0, %s92
      %s95 = sphi 0, %s94
      %s109 = sphi 0, %s95
      %s113 = sphi 0, %s113
      %s115 = sphi 0, %s113
      %s116 = sphi 0, %s115
      %s130 = sphi 0, %s116
      %s134 = sphi 0, %s134
      %s136 = sphi 0, %s134
      %s137 = sphi 0, %s136
      %s151 = sphi 0, %s137
      %s155 = sphi 0, %s155
      %s157 = sphi 0, %s155
      %s158 = sphi 0, %s157
      %s172 = sphi 0, %s158
      %s176 = sphi 0, %s176
      %s178 = sphi 0, %s176
      %s179 = sphi 0, %s178
      %s193 = sphi 0, %s179
    $region4: #{ssiamese_forward.3} parent=1 // loop_header_branch
      %19 = sbr.rel (%p17) target = $region8
    $region5: #{ssiamese_forward.3} parent=1 // loop_body
      %s21 = ssub.s32 %s16, 1
      %s22 = ssub.s32 %s16, 2
      %s23 = sadd.s32 %s16, 1
      %s24 = ssub.s32 %s16, %s23
      %p25 = scmp.eq.s32.totalorder %s24, 0
      %s27 = sadd.s32 %s26, 1
      %s28 = scalar_select %p25, %s26, %s27
      %p31 = pneg %p25
      %p32 = scmp.eq.s32.totalorder %s16, 1
      %p33 = por %p31, %p32
      %p34 = scmp.ne.s32.totalorder %s26, %s29
      %p35 = scmp.eq.s32.totalorder %s16, 0
      %p36 = por %p34, %p35
      %p37 = scmp.ne.s32.totalorder %s26, %s29
      %p38 = scmp.eq.s32.totalorder %s21, 1
      %p39 = por %p37, %p38
      %p40 = scmp.ne.s32.totalorder %s29, %s30
      %p41 = scmp.eq.s32.totalorder %s21, 0
      %p42 = por %p40, %p41
      %p43 = scmp.ne.s32.totalorder %s29, %s30
      %p44 = scmp.eq.s32.totalorder %s22, 1
      %p45 = por %p43, %p44
      %p47 = scmp.ne.s32.totalorder %s30, %s46
      %p48 = scmp.eq.s32.totalorder %s22, 0
      %p49 = por %p47, %p48
      %s51 = sadd.s32 %s50, 1
      %p54 = scmp.eq.s32.totalorder %s16, 1
      %p55 = scmp.ne.s32.totalorder %s50, %s52
      %p56 = scmp.eq.s32.totalorder %s16, 0
      %p57 = por %p55, %p56
      %p58 = scmp.ne.s32.totalorder %s50, %s52
      %p59 = scmp.eq.s32.totalorder %s21, 1
      %p60 = por %p58, %p59
      %p61 = scmp.ne.s32.totalorder %s52, %s53
      %p62 = scmp.eq.s32.totalorder %s21, 0
      %p63 = por %p61, %p62
      %p64 = scmp.ne.s32.totalorder %s52, %s53
      %p65 = scmp.eq.s32.totalorder %s22, 1
      %p66 = por %p64, %p65
      %p68 = scmp.ne.s32.totalorder %s53, %s67
      %p69 = scmp.eq.s32.totalorder %s22, 0
      %p70 = por %p68, %p69
      %s72 = sadd.s32 %s71, 1
      %p75 = scmp.eq.s32.totalorder %s16, 1
      %p76 = scmp.ne.s32.totalorder %s71, %s73
      %p77 = scmp.eq.s32.totalorder %s16, 0
      %p78 = por %p76, %p77
      %p79 = scmp.ne.s32.totalorder %s71, %s73
      %p80 = scmp.eq.s32.totalorder %s21, 1
      %p81 = por %p79, %p80
      %p82 = scmp.ne.s32.totalorder %s73, %s74
      %p83 = scmp.eq.s32.totalorder %s21, 0
      %p84 = por %p82, %p83
      %p85 = scmp.ne.s32.totalorder %s73, %s74
      %p86 = scmp.eq.s32.totalorder %s22, 1
      %p87 = por %p85, %p86
      %p89 = scmp.ne.s32.totalorder %s74, %s88
      %p90 = scmp.eq.s32.totalorder %s22, 0
      %p91 = por %p89, %p90
      %s93 = sadd.s32 %s92, 1
      %p96 = scmp.eq.s32.totalorder %s16, 1
      %p97 = scmp.ne.s32.totalorder %s92, %s94
      %p98 = scmp.eq.s32.totalorder %s16, 0
      %p99 = por %p97, %p98
      %p100 = scmp.ne.s32.totalorder %s92, %s94
      %p101 = scmp.eq.s32.totalorder %s21, 1
      %p102 = por %p100, %p101
      %p103 = scmp.ne.s32.totalorder %s94, %s95
      %p104 = scmp.eq.s32.totalorder %s21, 0
      %p105 = por %p103, %p104
      %p106 = scmp.ne.s32.totalorder %s94, %s95
      %p107 = scmp.eq.s32.totalorder %s22, 1
      %p108 = por %p106, %p107
      %p110 = scmp.ne.s32.totalorder %s95, %s109
      %p111 = scmp.eq.s32.totalorder %s22, 0
      %p112 = por %p110, %p111
      %s114 = sadd.s32 %s113, 1
      %p117 = scmp.eq.s32.totalorder %s16, 1
      %p118 = scmp.ne.s32.totalorder %s113, %s115
      %p119 = scmp.eq.s32.totalorder %s16, 0
      %p120 = por %p118, %p119
      %p121 = scmp.ne.s32.totalorder %s113, %s115
      %p122 = scmp.eq.s32.totalorder %s21, 1
      %p123 = por %p121, %p122
      %p124 = scmp.ne.s32.totalorder %s115, %s116
      %p125 = scmp.eq.s32.totalorder %s21, 0
      %p126 = por %p124, %p125
      %p127 = scmp.ne.s32.totalorder %s115, %s116
      %p128 = scmp.eq.s32.totalorder %s22, 1
      %p129 = por %p127, %p128
      %p131 = scmp.ne.s32.totalorder %s116, %s130
      %p132 = scmp.eq.s32.totalorder %s22, 0
      %p133 = por %p131, %p132
      %s135 = sadd.s32 %s134, 1
      %p138 = scmp.eq.s32.totalorder %s16, 1
      %p139 = scmp.ne.s32.totalorder %s134, %s136
      %p140 = scmp.eq.s32.totalorder %s16, 0
      %p141 = por %p139, %p140
      %p142 = scmp.ne.s32.totalorder %s134, %s136
      %p143 = scmp.eq.s32.totalorder %s21, 1
      %p144 = por %p142, %p143
      %p145 = scmp.ne.s32.totalorder %s136, %s137
      %p146 = scmp.eq.s32.totalorder %s21, 0
      %p147 = por %p145, %p146
      %p148 = scmp.ne.s32.totalorder %s136, %s137
      %p149 = scmp.eq.s32.totalorder %s22, 1
      %p150 = por %p148, %p149
      %p152 = scmp.ne.s32.totalorder %s137, %s151
      %p153 = scmp.eq.s32.totalorder %s22, 0
      %p154 = por %p152, %p153
      %s156 = sadd.s32 %s155, 1
      %p159 = scmp.eq.s32.totalorder %s16, 1
      %p160 = scmp.ne.s32.totalorder %s155, %s157
      %p161 = scmp.eq.s32.totalorder %s16, 0
      %p162 = por %p160, %p161
      %p163 = scmp.ne.s32.totalorder %s155, %s157
      %p164 = scmp.eq.s32.totalorder %s21, 1
      %p165 = por %p163, %p164
      %p166 = scmp.ne.s32.totalorder %s157, %s158
      %p167 = scmp.eq.s32.totalorder %s21, 0
      %p168 = por %p166, %p167
      %p169 = scmp.ne.s32.totalorder %s157, %s158
      %p170 = scmp.eq.s32.totalorder %s22, 1
      %p171 = por %p169, %p170
      %p173 = scmp.ne.s32.totalorder %s158, %s172
      %p174 = scmp.eq.s32.totalorder %s22, 0
      %p175 = por %p173, %p174
      %s177 = sadd.s32 %s176, 1
      %p180 = scmp.eq.s32.totalorder %s16, 1
      %p181 = scmp.ne.s32.totalorder %s176, %s178
      %p182 = scmp.eq.s32.totalorder %s16, 0
      %p183 = por %p181, %p182
      %p184 = scmp.ne.s32.totalorder %s176, %s178
      %p185 = scmp.eq.s32.totalorder %s21, 1
      %p186 = por %p184, %p185
      %p187 = scmp.ne.s32.totalorder %s178, %s179
      %p188 = scmp.eq.s32.totalorder %s21, 0
      %p189 = por %p187, %p188
      %p190 = scmp.ne.s32.totalorder %s178, %s179
      %p191 = scmp.eq.s32.totalorder %s22, 1
      %p192 = por %p190, %p191
      %p194 = scmp.ne.s32.totalorder %s179, %s193
      %p195 = scmp.eq.s32.totalorder %s22, 0
      %p196 = por %p194, %p195
      %p197 = scmp.le.s32.totalorder 1, %s16
      %p198 = scmp.lt.s32.totalorder %s16, 3
      %p199 = pnand %p197, %p198
      %p200 = pneg %p199
      // Predicated region
      $region9: #{ssiamese_forward.3} parent=5 // pred_check
        _
      $region10: #{ssiamese_forward.3} parent=5 // pred_check_branch
        %202 = sbr.rel (%p199) target = $region12
      $region11: #{ssiamese_forward.3} parent=5 // pred_region
        %s203 = ssub.s32 %s16, 1
        // Predicated region
        $region13: #{ssiamese_forward.3} parent=11 // pred_check
          %p204 = pneg %p63
        $region14: #{ssiamese_forward.3} parent=11 // pred_check_branch
          %206 = sbr.rel (%p204) target = $region16
        $region15: #{ssiamese_forward.3} parent=11 // pred_region
          _
        $region16: #{ssiamese_forward.3} parent=11 // pred_fallthru
          _
        // Predicated region
        $region17: #{ssiamese_forward.3} parent=11 // pred_check
          %p207 = pneg %p84
        $region18: #{ssiamese_forward.3} parent=11 // pred_check_branch
          %209 = sbr.rel (%p207) target = $region20
        $region19: #{ssiamese_forward.3} parent=11 // pred_region
          _
        $region20: #{ssiamese_forward.3} parent=11 // pred_fallthru
          _
        // Predicated region
        $region21: #{ssiamese_forward.3} parent=11 // pred_check
          %p210 = pneg %p105
        $region22: #{ssiamese_forward.3} parent=11 // pred_check_branch
          %212 = sbr.rel (%p210) target = $region24
        $region23: #{ssiamese_forward.3} parent=11 // pred_region
          _
        $region24: #{ssiamese_forward.3} parent=11 // pred_fallthru
          _
        // Predicated region
        $region25: #{ssiamese_forward.3} parent=11 // pred_check
          %p213 = pneg %p126
        $region26: #{ssiamese_forward.3} parent=11 // pred_check_branch
          %215 = sbr.rel (%p213) target = $region28
        $region27: #{ssiamese_forward.3} parent=11 // pred_region
          _
        $region28: #{ssiamese_forward.3} parent=11 // pred_fallthru
          _
        // Predicated region
        $region29: #{ssiamese_forward.3} parent=11 // pred_check
          %p216 = pneg %p147
        $region30: #{ssiamese_forward.3} parent=11 // pred_check_branch
          %218 = sbr.rel (%p216) target = $region32
        $region31: #{ssiamese_forward.3} parent=11 // pred_region
          _
        $region32: #{ssiamese_forward.3} parent=11 // pred_fallthru
          _
        // Predicated region
        $region33: #{ssiamese_forward.3} parent=11 // pred_check
          %p219 = pneg %p168
        $region34: #{ssiamese_forward.3} parent=11 // pred_check_branch
          %221 = sbr.rel (%p219) target = $region36
        $region35: #{ssiamese_forward.3} parent=11 // pred_region
          _
        $region36: #{ssiamese_forward.3} parent=11 // pred_fallthru
          _
      $region12: #{ssiamese_forward.3} parent=5 // pred_fallthru
        _
      %p222 = scmp.lt.s32.totalorder %s16, 2
      // Predicated region
      $region37: #{ssiamese_forward.3} parent=5 // pred_check
        %p223 = pneg %p222
      $region38: #{ssiamese_forward.3} parent=5 // pred_check_branch
        %225 = sbr.rel (%p223) target = $region40
      $region39: #{ssiamese_forward.3} parent=5 // pred_region
        // Predicated region
        $region41: #{ssiamese_forward.3} parent=39 // pred_check
          %p226 = pneg %p36
        $region42: #{ssiamese_forward.3} parent=39 // pred_check_branch
          %228 = sbr.rel (%p226) target = $region44
        $region43: #{ssiamese_forward.3} parent=39 // pred_region
          %p229 = scmp.lt.s32.totalorder %s16, 1
          %s230 = scalar_select %p229, %s16, 1
          %s231 = smul.addr %s230, 196
          %s232 = smul.addr %s231, 8
          %s233 = scalar_lea.vmem %s0, %s232
        $region44: #{ssiamese_forward.3} parent=39 // pred_fallthru
          _
      $region40: #{ssiamese_forward.3} parent=5 // pred_fallthru
        _
      %p234 = scmp.le.s32.totalorder 1, %s16
      %p235 = scmp.lt.s32.totalorder %s16, 3
      %p236 = pnand %p234, %p235
      %p237 = pneg %p236
      // Predicated region
      $region45: #{ssiamese_forward.3} parent=5 // pred_check
        _
      $region46: #{ssiamese_forward.3} parent=5 // pred_check_branch
        %239 = sbr.rel (%p236) target = $region48
      $region47: #{ssiamese_forward.3} parent=5 // pred_region
        %s240 = ssub.s32 %s16, 1
        %p241 = scmp.lt.s32.totalorder %s21, 1
        %s242 = scalar_select %p241, %s21, 1
        %s243 = smul.addr %s242, 196
        %s244 = smul.addr %s243, 8
        %s245 = scalar_lea.vmem %s0, %s244
        %p246 = pneg %p42
        %p247 = pneg %p39
        %p248 = pneg %p63
        %p249 = pneg %p60
        %p250 = pneg %p84
        %p251 = pneg %p81
        %p252 = pneg %p105
        %p253 = pneg %p102
        %p254 = pneg %p126
        %p255 = pneg %p123
        %p256 = pneg %p147
        %p257 = pneg %p144
        %p258 = pneg %p168
        %p259 = pneg %p165
        %p260 = pneg %p189
        %p261 = pneg %p186
        %p262 = scmp.lt.s32.totalorder %s21, 1
        %s263 = scalar_select %p262, %s21, 1
        %s264 = smul.addr %s263, 196
        %s265 = smul.addr %s264, 8
        %s266 = scalar_lea.vmem %s0, %s265
        %p267 = scmp.eq.s32.totalorder %s21, 0
        // Predicated region
        $region49: #{ssiamese_forward.3} parent=47 // pred_check
          %p268 = pneg %p267
        $region50: #{ssiamese_forward.3} parent=47 // pred_check_branch
          %270 = sbr.rel (%p268) target = $region52
        $region51: #{ssiamese_forward.3} parent=47 // pred_region
          %vm271 = vcmask 130048
          %272 = vst.msk [vmem:[#allocation2] sm:$0xff] %vm271, 0.0
          %273 = vst.msk [vmem:[#allocation2 + $0x8] sm:$0xff] %vm271, 0.0
          %274 = vst.msk [vmem:[#allocation2 + $0x10] sm:$0xff] %vm271, 0.0
          %275 = vst.msk [vmem:[#allocation2 + $0x18] sm:$0xff] %vm271, 0.0
          %276 = vst.msk [vmem:[#allocation2 + $0x20] sm:$0xff] %vm271, 0.0
          %277 = vst.msk [vmem:[#allocation2 + $0x28] sm:$0xff] %vm271, 0.0
          %278 = vst.msk [vmem:[#allocation2 + $0x30] sm:$0xff] %vm271, 0.0
          %279 = vst.msk [vmem:[#allocation2 + $0x38] sm:$0xff] %vm271, 0.0
          %280 = vst.msk [vmem:[#allocation3] sm:$0xff] %vm271, 0.0
          %281 = vst.msk [vmem:[#allocation3 + $0x8] sm:$0xff] %vm271, 0.0
          %282 = vst.msk [vmem:[#allocation3 + $0x10] sm:$0xff] %vm271, 0.0
          %283 = vst.msk [vmem:[#allocation3 + $0x18] sm:$0xff] %vm271, 0.0
          %284 = vst.msk [vmem:[#allocation3 + $0x20] sm:$0xff] %vm271, 0.0
          %285 = vst.msk [vmem:[#allocation3 + $0x28] sm:$0xff] %vm271, 0.0
          %286 = vst.msk [vmem:[#allocation3 + $0x30] sm:$0xff] %vm271, 0.0
          %287 = vst.msk [vmem:[#allocation3 + $0x38] sm:$0xff] %vm271, 0.0
          %vm288 = vcmask 15360
          %289 = vst.msk [vmem:[#allocation4] sm:$0xff] %vm288, 0.0
          %290 = vst.msk [vmem:[#allocation4 + $0x8] sm:$0xff] %vm288, 0.0
          %291 = vst.msk [vmem:[#allocation4 + $0x10] sm:$0xff] %vm288, 0.0
          %292 = vst.msk [vmem:[#allocation4 + $0x18] sm:$0xff] %vm288, 0.0
          %293 = vst.msk [vmem:[#allocation5] sm:$0xff] %vm288, 0.0
          %294 = vst.msk [vmem:[#allocation5 + $0x8] sm:$0xff] %vm288, 0.0
          %295 = vst.msk [vmem:[#allocation5 + $0x10] sm:$0xff] %vm288, 0.0
          %296 = vst.msk [vmem:[#allocation5 + $0x18] sm:$0xff] %vm288, 0.0
          %vm297 = vcmask 8192
          %298 = vst.msk [vmem:[#allocation7] sm:$0x1] %vm297, 0.0
        $region52: #{ssiamese_forward.3} parent=47 // pred_fallthru
          _
        %v299 = vld [vmem:[%s1] sm:$0xff]
        %v300 = vld [vmem:[%s1 + $0x8] sm:$0xff]
        %v301 = vld [vmem:[%s1 + $0x10] sm:$0xff]
        %v302 = vld [vmem:[%s1 + $0x18] sm:$0xff]
        %v303 = vld [vmem:[%s1 + $0x20] sm:$0xff]
        %v304 = vld [vmem:[%s1 + $0x28] sm:$0xff]
        %v305 = vld [vmem:[%s1 + $0x30] sm:$0xff]
        %v306 = vld [vmem:[%s1 + $0x38] sm:$0xff]
        %v307 = vld [vmem:[%s266] sm:$0xff]
        %v308 = vld [vmem:[%s266 + $0x8] sm:$0xff]
        %v309 = vld [vmem:[%s266 + $0x10] sm:$0xff]
        %v310 = vld [vmem:[%s266 + $0x18] sm:$0xff]
        %v311 = vld [vmem:[%s266 + $0x20] sm:$0xff]
        %v312 = vld [vmem:[%s266 + $0x28] sm:$0xff]
        %v313 = vld [vmem:[%s266 + $0x30] sm:$0xff]
        %v314 = vld [vmem:[%s266 + $0x38] sm:$0xff]
        %v315 = vld [vmem:[%s266 + $0x40] sm:$0xff]
        %v316 = vld [vmem:[%s266 + $0x48] sm:$0xff]
        %v317 = vld [vmem:[%s266 + $0x50] sm:$0xff]
        %v318 = vld [vmem:[%s266 + $0x58] sm:$0xff]
        %v319 = vld [vmem:[%s266 + $0x60] sm:$0xff]
        %v320 = vld [vmem:[%s266 + $0x68] sm:$0xff]
        %v321 = vld [vmem:[%s266 + $0x70] sm:$0xff]
        %v322 = vld [vmem:[%s266 + $0x78] sm:$0xff]
        %v323 = vld [vmem:[%s266 + $0x80] sm:$0xff]
        %v324 = vld [vmem:[%s266 + $0x88] sm:$0xff]
        %v325 = vld [vmem:[%s266 + $0x90] sm:$0xff]
        %v326 = vld [vmem:[%s266 + $0x98] sm:$0xff]
        %v327 = vld [vmem:[%s266 + $0xa0] sm:$0xff]
        %v328 = vld [vmem:[%s266 + $0xa8] sm:$0xff]
        %v329 = vld [vmem:[%s266 + $0xb0] sm:$0xff]
        %v330 = vld [vmem:[%s266 + $0xb8] sm:$0xff]
        %v331 = vld [vmem:[%s266 + $0xc0] sm:$0xff]
        %v332 = vld [vmem:[%s266 + $0xc8] sm:$0xff]
        %v333 = vld [vmem:[%s266 + $0xd0] sm:$0xff]
        %v334 = vld [vmem:[%s266 + $0xd8] sm:$0xff]
        %v335 = vld [vmem:[%s266 + $0xe0] sm:$0xff]
        %v336 = vld [vmem:[%s266 + $0xe8] sm:$0xff]
        %v337 = vld [vmem:[%s266 + $0xf0] sm:$0xff]
        %v338 = vld [vmem:[%s266 + $0xf8] sm:$0xff]
        %v339 = vld [vmem:[%s266 + $0x100] sm:$0xff]
        %v340 = vld [vmem:[%s266 + $0x108] sm:$0xff]
        %v341 = vld [vmem:[%s266 + $0x110] sm:$0xff]
        %v342 = vld [vmem:[%s266 + $0x118] sm:$0xff]
        %v343 = vld [vmem:[%s266 + $0x120] sm:$0xff]
        %v344 = vld [vmem:[%s266 + $0x128] sm:$0xff]
        %v345 = vld [vmem:[%s266 + $0x130] sm:$0xff]
        %v346 = vld [vmem:[%s266 + $0x138] sm:$0xff]
        %v347 = vld [vmem:[%s266 + $0x140] sm:$0xff]
        %v348 = vld [vmem:[%s266 + $0x148] sm:$0xff]
        %v349 = vld [vmem:[%s266 + $0x150] sm:$0xff]
        %v350 = vld [vmem:[%s266 + $0x158] sm:$0xff]
        %v351 = vld [vmem:[%s266 + $0x160] sm:$0xff]
        %v352 = vld [vmem:[%s266 + $0x168] sm:$0xff]
        %v353 = vld [vmem:[%s266 + $0x170] sm:$0xff]
        %v354 = vld [vmem:[%s266 + $0x178] sm:$0xff]
        %v355 = vld [vmem:[%s266 + $0x180] sm:$0xff]
        %v356 = vld [vmem:[%s2] sm:$0xff]
        %v357 = vld [vmem:[%s2 + $0x8] sm:$0xff]
        %359 = vset.pattern.permute.xlu0 0
        %360 = vperm.xlu0 %359, %v356
        %v361 = vpop.permute.xlu0 %360
        %364 = vset.pattern.permute.xlu0 0
        %365 = vperm.xlu0 %364, %v357
        %v366 = vpop.permute.xlu0 %365
        %vm368 = vcmask 64512
        %v370 = vsel %vm368, %v302, 0
        %v373 = vsel %vm368, %v306, 0
        %375 = vmatprep.subr.mxu0 0.0
        %376 = vmatpush1.msra.mxu0 %v322
        %377 = vmatprep.subr.mxu0 0.0
        %378 = vmatpush1.msra.mxu0 %v321
        %379 = vmatprep.subr.mxu0 0.0
        %380 = vmatpush1.msra.mxu0 %v320
        %381 = vmatprep.subr.mxu0 0.0
        %382 = vmatpush1.msra.mxu0 %v319
        %383 = vmatprep.subr.mxu0 0.0
        %384 = vmatpush1.msra.mxu0 %v318
        %385 = vmatprep.subr.mxu0 0.0
        %386 = vmatpush1.msra.mxu0 %v317
        %387 = vmatprep.subr.mxu0 0.0
        %388 = vmatpush1.msra.mxu0 %v316
        %389 = vmatprep.subr.mxu0 0.0
        %390 = vmatpush1.msra.mxu0 %v315
        %391 = vmatprep.subr.mxu0 0.0
        %392 = vmatpush1.msra.mxu0 %v314
        %393 = vmatprep.subr.mxu0 0.0
        %394 = vmatpush1.msra.mxu0 %v313
        %395 = vmatprep.subr.mxu0 0.0
        %396 = vmatpush1.msra.mxu0 %v312
        %397 = vmatprep.subr.mxu0 0.0
        %398 = vmatpush1.msra.mxu0 %v311
        %399 = vmatprep.subr.mxu0 0.0
        %400 = vmatpush1.msra.mxu0 %v310
        %401 = vmatprep.subr.mxu0 0.0
        %402 = vmatpush1.msra.mxu0 %v309
        %403 = vmatprep.subr.mxu0 0.0
        %404 = vmatpush1.msra.mxu0 %v308
        %405 = vmatprep.subr.mxu0 0.0
        %406 = vmatpush1.msra.mxu0 %v307
        %407 = vmatprep.subr.mxu0 0.0
        %408 = vmatpush2.msra.mxu0 %v338
        %409 = vmatprep.subr.mxu0 0.0
        %410 = vmatpush2.msra.mxu0 %v337
        %411 = vmatprep.subr.mxu0 0.0
        %412 = vmatpush2.msra.mxu0 %v336
        %413 = vmatprep.subr.mxu0 0.0
        %414 = vmatpush2.msra.mxu0 %v335
        %415 = vmatprep.subr.mxu0 0.0
        %416 = vmatpush2.msra.mxu0 %v334
        %417 = vmatprep.subr.mxu0 0.0
        %418 = vmatpush2.msra.mxu0 %v333
        %419 = vmatprep.subr.mxu0 0.0
        %420 = vmatpush2.msra.mxu0 %v332
        %421 = vmatprep.subr.mxu0 0.0
        %422 = vmatpush2.msra.mxu0 %v331
        %423 = vmatprep.subr.mxu0 0.0
        %424 = vmatpush2.msra.mxu0 %v330
        %425 = vmatprep.subr.mxu0 0.0
        %426 = vmatpush2.msra.mxu0 %v329
        %427 = vmatprep.subr.mxu0 0.0
        %428 = vmatpush2.msra.mxu0 %v328
        %429 = vmatprep.subr.mxu0 0.0
        %430 = vmatpush2.msra.mxu0 %v327
        %431 = vmatprep.subr.mxu0 0.0
        %432 = vmatpush2.msra.mxu0 %v326
        %433 = vmatprep.subr.mxu0 0.0
        %434 = vmatpush2.msra.mxu0 %v325
        %435 = vmatprep.subr.mxu0 0.0
        %436 = vmatpush2.msra.mxu0 %v324
        %437 = vmatprep.subr.mxu0 0.0
        %438 = vmatpush2.msra.mxu0 %v323
        %439 = vmatprep.mubr.f32.mxu0 %v300
        %440 = vmatmul.mubr.f32.gmra.mxu0 %v299
        %v441 = vpop.f32.mrf.mxu0
        %v442 = vadd.f32 %v361, %v441
        %v443 = vpop.f32.mrf.mxu0
        %444 = vmatprep.mubr.f32.mxu0 %v304
        %445 = vmatmul.mubr.f32.gmra.mxu0 %v303
        %v446 = vpop.f32.mrf.mxu0
        %v447 = vadd.f32 %v366, %v446
        %v448 = vpop.f32.mrf.mxu0
        %449 = vdwg.mxu0
        %450 = vmatprep.subr.mxu0 0.0
        %451 = vmatpush1.msra.mxu0 %v354
        %452 = vmatprep.subr.mxu0 0.0
        %453 = vmatpush1.msra.mxu0 %v353
        %454 = vmatprep.subr.mxu0 0.0
        %455 = vmatpush1.msra.mxu0 %v352
        %456 = vmatprep.subr.mxu0 0.0
        %457 = vmatpush1.msra.mxu0 %v351
        %458 = vmatprep.subr.mxu0 0.0
        %459 = vmatpush1.msra.mxu0 %v350
        %460 = vmatprep.subr.mxu0 0.0
        %461 = vmatpush1.msra.mxu0 %v349
        %462 = vmatprep.subr.mxu0 0.0
        %463 = vmatpush1.msra.mxu0 %v348
        %464 = vmatprep.subr.mxu0 0.0
        %465 = vmatpush1.msra.mxu0 %v347
        %466 = vmatprep.subr.mxu0 0.0
        %467 = vmatpush1.msra.mxu0 %v346
        %468 = vmatprep.subr.mxu0 0.0
        %469 = vmatpush1.msra.mxu0 %v345
        %470 = vmatprep.subr.mxu0 0.0
        %471 = vmatpush1.msra.mxu0 %v344
        %472 = vmatprep.subr.mxu0 0.0
        %473 = vmatpush1.msra.mxu0 %v343
        %474 = vmatprep.subr.mxu0 0.0
        %475 = vmatpush1.msra.mxu0 %v342
        %476 = vmatprep.subr.mxu0 0.0
        %477 = vmatpush1.msra.mxu0 %v341
        %478 = vmatprep.subr.mxu0 0.0
        %479 = vmatpush1.msra.mxu0 %v340
        %480 = vmatprep.subr.mxu0 0.0
        %481 = vmatpush1.msra.mxu0 %v339
        %482 = vmatprep.subr.mxu0 0.0
        %483 = vmatpush2.msra.mxu0 0.0
        %484 = vmatprep.subr.mxu0 0.0
        %485 = vmatpush2.msra.mxu0 0.0
        %486 = vmatprep.subr.mxu0 0.0
        %487 = vmatpush2.msra.mxu0 0.0
        %488 = vmatprep.subr.mxu0 0.0
        %489 = vmatpush2.msra.mxu0 0.0
        %490 = vmatprep.subr.mxu0 0.0
        %491 = vmatpush2.msra.mxu0 0.0
        %492 = vmatprep.subr.mxu0 0.0
        %493 = vmatpush2.msra.mxu0 0.0
        %494 = vmatprep.subr.mxu0 0.0
        %495 = vmatpush2.msra.mxu0 0.0
        %496 = vmatprep.subr.mxu0 0.0
        %497 = vmatpush2.msra.mxu0 0.0
        %498 = vmatprep.subr.mxu0 0.0
        %499 = vmatpush2.msra.mxu0 0.0
        %500 = vmatprep.subr.mxu0 0.0
        %501 = vmatpush2.msra.mxu0 0.0
        %502 = vmatprep.subr.mxu0 0.0
        %503 = vmatpush2.msra.mxu0 0.0
        %504 = vmatprep.subr.mxu0 0.0
        %505 = vmatpush2.msra.mxu0 0.0
        %506 = vmatprep.subr.mxu0 0.0
        %507 = vmatpush2.msra.mxu0 0.0
        %508 = vmatprep.subr.mxu0 0.0
        %509 = vmatpush2.msra.mxu0 0.0
        %510 = vmatprep.subr.mxu0 0.0
        %511 = vmatpush2.msra.mxu0 0.0
        %512 = vmatprep.subr.mxu0 0.0
        %513 = vmatpush2.msra.mxu0 %v355
        %514 = vmatprep.mubr.f32.mxu0 %v370
        %515 = vmatmul.mubr.f32.gmra.mxu0 %v301
        %v516 = vpop.f32.mrf.mxu0
        %v517 = vadd.f32 %v442, %v516
        %v518 = vpop.f32.mrf.mxu0
        %519 = vmatprep.mubr.f32.mxu0 %v373
        %520 = vmatmul.mubr.f32.gmra.mxu0 %v305
        %v521 = vpop.f32.mrf.mxu0
        %v522 = vadd.f32 %v447, %v521
        %v523 = vpop.f32.mrf.mxu0
        %524 = vdwg.mxu0
        %v525 = vld [vmem:[#allocation2] sm:$0xff]
        %v526 = vld [vmem:[#allocation2 + $0x8] sm:$0xff]
        %v527 = vmul.f32 %v525, 0.2
        %v528 = vmul.f32 %v526, 0.2
        %v529 = vld [vmem:[#allocation3] sm:$0xff]
        %v530 = vld [vmem:[#allocation3 + $0x8] sm:$0xff]
        %v531 = vsub.f32 1.0, %v529
        %v532 = vsub.f32 1.0, %v530
        %v533 = vmul.f32 %v527, %v531
        %v534 = vmul.f32 %v528, %v532
        %v535 = vadd.f32 %v533, %v517
        %v536 = vadd.f32 %v534, %v522
        %vm537 = vcmp.gt.f32.partialorder %v535, 0.5
        %vm538 = vcmp.gt.f32.partialorder %v536, 0.5
        %v539 = vsel %vm537, 1, 0
        %v540 = vsel %vm538, 1, 0
        %v541 = vcvt.s32.f32 %v539
        %v542 = vcvt.s32.f32 %v540
        %vm543 = vcmask 130048
        %544 = vst.msk [vmem:[#allocation2] sm:$0xff] %vm543, %v535
        %545 = vst.msk [vmem:[#allocation2 + $0x8] sm:$0xff] %vm543, %v536
        %546 = vst.msk [vmem:[#allocation3] sm:$0xff] %vm543, %v541
        %547 = vst.msk [vmem:[#allocation3 + $0x8] sm:$0xff] %vm543, %v542
        %v548 = vmul.f32 %v541, 0.25
        %v549 = vmul.f32 %v542, 0.25
        %v550 = vadd.f32 %v548, 0.0
        %v551 = vadd.f32 %v549, 0.0
        %v552 = vld [vmem:[%s1] sm:$0xff]
        %v553 = vld [vmem:[%s1 + $0x8] sm:$0xff]
        %v554 = vld [vmem:[%s1 + $0x10] sm:$0xff]
        %v555 = vld [vmem:[%s1 + $0x18] sm:$0xff]
        %v556 = vld [vmem:[%s1 + $0x20] sm:$0xff]
        %v557 = vld [vmem:[%s1 + $0x28] sm:$0xff]
        %v558 = vld [vmem:[%s1 + $0x30] sm:$0xff]
        %v559 = vld [vmem:[%s1 + $0x38] sm:$0xff]
        %s560 = scalar_lea.vmem %s266, 392
        %v561 = vld [vmem:[%s560] sm:$0xff]
        %v562 = vld [vmem:[%s560 + $0x8] sm:$0xff]
        %v563 = vld [vmem:[%s560 + $0x10] sm:$0xff]
        %v564 = vld [vmem:[%s560 + $0x18] sm:$0xff]
        %v565 = vld [vmem:[%s560 + $0x20] sm:$0xff]
        %v566 = vld [vmem:[%s560 + $0x28] sm:$0xff]
        %v567 = vld [vmem:[%s560 + $0x30] sm:$0xff]
        %v568 = vld [vmem:[%s560 + $0x38] sm:$0xff]
        %v569 = vld [vmem:[%s560 + $0x40] sm:$0xff]
        %v570 = vld [vmem:[%s560 + $0x48] sm:$0xff]
        %v571 = vld [vmem:[%s560 + $0x50] sm:$0xff]
        %v572 = vld [vmem:[%s560 + $0x58] sm:$0xff]
        %v573 = vld [vmem:[%s560 + $0x60] sm:$0xff]
        %v574 = vld [vmem:[%s560 + $0x68] sm:$0xff]
        %v575 = vld [vmem:[%s560 + $0x70] sm:$0xff]
        %v576 = vld [vmem:[%s560 + $0x78] sm:$0xff]
        %v577 = vld [vmem:[%s560 + $0x80] sm:$0xff]
        %v578 = vld [vmem:[%s560 + $0x88] sm:$0xff]
        %v579 = vld [vmem:[%s560 + $0x90] sm:$0xff]
        %v580 = vld [vmem:[%s560 + $0x98] sm:$0xff]
        %v581 = vld [vmem:[%s560 + $0xa0] sm:$0xff]
        %v582 = vld [vmem:[%s560 + $0xa8] sm:$0xff]
        %v583 = vld [vmem:[%s560 + $0xb0] sm:$0xff]
        %v584 = vld [vmem:[%s560 + $0xb8] sm:$0xff]
        %v585 = vld [vmem:[%s560 + $0xc0] sm:$0xff]
        %v586 = vld [vmem:[%s560 + $0xc8] sm:$0xff]
        %v587 = vld [vmem:[%s560 + $0xd0] sm:$0xff]
        %v588 = vld [vmem:[%s560 + $0xd8] sm:$0xff]
        %v589 = vld [vmem:[%s560 + $0xe0] sm:$0xff]
        %v590 = vld [vmem:[%s560 + $0xe8] sm:$0xff]
        %v591 = vld [vmem:[%s560 + $0xf0] sm:$0xff]
        %v592 = vld [vmem:[%s560 + $0xf8] sm:$0xff]
        %v593 = vld [vmem:[%s560 + $0x100] sm:$0xff]
        %v594 = vld [vmem:[%s560 + $0x108] sm:$0xff]
        %v595 = vld [vmem:[%s560 + $0x110] sm:$0xff]
        %v596 = vld [vmem:[%s560 + $0x118] sm:$0xff]
        %v597 = vld [vmem:[%s560 + $0x120] sm:$0xff]
        %v598 = vld [vmem:[%s560 + $0x128] sm:$0xff]
        %v599 = vld [vmem:[%s560 + $0x130] sm:$0xff]
        %v600 = vld [vmem:[%s560 + $0x138] sm:$0xff]
        %v601 = vld [vmem:[%s560 + $0x140] sm:$0xff]
        %v602 = vld [vmem:[%s560 + $0x148] sm:$0xff]
        %v603 = vld [vmem:[%s560 + $0x150] sm:$0xff]
        %v604 = vld [vmem:[%s560 + $0x158] sm:$0xff]
        %v605 = vld [vmem:[%s560 + $0x160] sm:$0xff]
        %v606 = vld [vmem:[%s560 + $0x168] sm:$0xff]
        %v607 = vld [vmem:[%s560 + $0x170] sm:$0xff]
        %v608 = vld [vmem:[%s560 + $0x178] sm:$0xff]
        %v609 = vld [vmem:[%s560 + $0x180] sm:$0xff]
        %v610 = vld [vmem:[%s2] sm:$0xff]
        %v611 = vld [vmem:[%s2 + $0x8] sm:$0xff]
        %613 = vset.pattern.permute.xlu0 0
        %614 = vperm.xlu0 %613, %v610
        %v615 = vpop.permute.xlu0 %614
        %618 = vset.pattern.permute.xlu0 0
        %619 = vperm.xlu0 %618, %v611
        %v620 = vpop.permute.xlu0 %619
        %v623 = vsel %vm368, %v555, 0
        %v626 = vsel %vm368, %v559, 0
        %628 = vmatprep.subr.mxu0 0.0
        %629 = vmatpush1.msra.mxu0 %v576
        %630 = vmatprep.subr.mxu0 0.0
        %631 = vmatpush1.msra.mxu0 %v575
        %632 = vmatprep.subr.mxu0 0.0
        %633 = vmatpush1.msra.mxu0 %v574
        %634 = vmatprep.subr.mxu0 0.0
        %635 = vmatpush1.msra.mxu0 %v573
        %636 = vmatprep.subr.mxu0 0.0
        %637 = vmatpush1.msra.mxu0 %v572
        %638 = vmatprep.subr.mxu0 0.0
        %639 = vmatpush1.msra.mxu0 %v571
        %640 = vmatprep.subr.mxu0 0.0
        %641 = vmatpush1.msra.mxu0 %v570
        %642 = vmatprep.subr.mxu0 0.0
        %643 = vmatpush1.msra.mxu0 %v569
        %644 = vmatprep.subr.mxu0 0.0
        %645 = vmatpush1.msra.mxu0 %v568
        %646 = vmatprep.subr.mxu0 0.0
        %647 = vmatpush1.msra.mxu0 %v567
        %648 = vmatprep.subr.mxu0 0.0
        %649 = vmatpush1.msra.mxu0 %v566
        %650 = vmatprep.subr.mxu0 0.0
        %651 = vmatpush1.msra.mxu0 %v565
        %652 = vmatprep.subr.mxu0 0.0
        %653 = vmatpush1.msra.mxu0 %v564
        %654 = vmatprep.subr.mxu0 0.0
        %655 = vmatpush1.msra.mxu0 %v563
        %656 = vmatprep.subr.mxu0 0.0
        %657 = vmatpush1.msra.mxu0 %v562
        %658 = vmatprep.subr.mxu0 0.0
        %659 = vmatpush1.msra.mxu0 %v561
        %660 = vmatprep.subr.mxu0 0.0
        %661 = vmatpush2.msra.mxu0 %v592
        %662 = vmatprep.subr.mxu0 0.0
        %663 = vmatpush2.msra.mxu0 %v591
        %664 = vmatprep.subr.mxu0 0.0
        %665 = vmatpush2.msra.mxu0 %v590
        %666 = vmatprep.subr.mxu0 0.0
        %667 = vmatpush2.msra.mxu0 %v589
        %668 = vmatprep.subr.mxu0 0.0
        %669 = vmatpush2.msra.mxu0 %v588
        %670 = vmatprep.subr.mxu0 0.0
        %671 = vmatpush2.msra.mxu0 %v587
        %672 = vmatprep.subr.mxu0 0.0
        %673 = vmatpush2.msra.mxu0 %v586
        %674 = vmatprep.subr.mxu0 0.0
        %675 = vmatpush2.msra.mxu0 %v585
        %676 = vmatprep.subr.mxu0 0.0
        %677 = vmatpush2.msra.mxu0 %v584
        %678 = vmatprep.subr.mxu0 0.0
        %679 = vmatpush2.msra.mxu0 %v583
        %680 = vmatprep.subr.mxu0 0.0
        %681 = vmatpush2.msra.mxu0 %v582
        %682 = vmatprep.subr.mxu0 0.0
        %683 = vmatpush2.msra.mxu0 %v581
        %684 = vmatprep.subr.mxu0 0.0
        %685 = vmatpush2.msra.mxu0 %v580
        %686 = vmatprep.subr.mxu0 0.0
        %687 = vmatpush2.msra.mxu0 %v579
        %688 = vmatprep.subr.mxu0 0.0
        %689 = vmatpush2.msra.mxu0 %v578
        %690 = vmatprep.subr.mxu0 0.0
        %691 = vmatpush2.msra.mxu0 %v577
        %692 = vmatprep.mubr.f32.mxu0 %v553
        %693 = vmatmul.mubr.f32.gmra.mxu0 %v552
        %v694 = vpop.f32.mrf.mxu0
        %v695 = vadd.f32 %v615, %v694
        %v696 = vpop.f32.mrf.mxu0
        %697 = vmatprep.mubr.f32.mxu0 %v557
        %698 = vmatmul.mubr.f32.gmra.mxu0 %v556
        %v699 = vpop.f32.mrf.mxu0
        %v700 = vadd.f32 %v620, %v699
        %v701 = vpop.f32.mrf.mxu0
        %702 = vdwg.mxu0
        %703 = vmatprep.subr.mxu0 0.0
        %704 = vmatpush1.msra.mxu0 %v608
        %705 = vmatprep.subr.mxu0 0.0
        %706 = vmatpush1.msra.mxu0 %v607
        %707 = vmatprep.subr.mxu0 0.0
        %708 = vmatpush1.msra.mxu0 %v606
        %709 = vmatprep.subr.mxu0 0.0
        %710 = vmatpush1.msra.mxu0 %v605
        %711 = vmatprep.subr.mxu0 0.0
        %712 = vmatpush1.msra.mxu0 %v604
        %713 = vmatprep.subr.mxu0 0.0
        %714 = vmatpush1.msra.mxu0 %v603
        %715 = vmatprep.subr.mxu0 0.0
        %716 = vmatpush1.msra.mxu0 %v602
        %717 = vmatprep.subr.mxu0 0.0
        %718 = vmatpush1.msra.mxu0 %v601
        %719 = vmatprep.subr.mxu0 0.0
        %720 = vmatpush1.msra.mxu0 %v600
        %721 = vmatprep.subr.mxu0 0.0
        %722 = vmatpush1.msra.mxu0 %v599
        %723 = vmatprep.subr.mxu0 0.0
        %724 = vmatpush1.msra.mxu0 %v598
        %725 = vmatprep.subr.mxu0 0.0
        %726 = vmatpush1.msra.mxu0 %v597
        %727 = vmatprep.subr.mxu0 0.0
        %728 = vmatpush1.msra.mxu0 %v596
        %729 = vmatprep.subr.mxu0 0.0
        %730 = vmatpush1.msra.mxu0 %v595
        %731 = vmatprep.subr.mxu0 0.0
        %732 = vmatpush1.msra.mxu0 %v594
        %733 = vmatprep.subr.mxu0 0.0
        %734 = vmatpush1.msra.mxu0 %v593
        %735 = vmatprep.subr.mxu0 0.0
        %736 = vmatpush2.msra.mxu0 0.0
        %737 = vmatprep.subr.mxu0 0.0
        %738 = vmatpush2.msra.mxu0 0.0
        %739 = vmatprep.subr.mxu0 0.0
        %740 = vmatpush2.msra.mxu0 0.0
        %741 = vmatprep.subr.mxu0 0.0
        %742 = vmatpush2.msra.mxu0 0.0
        %743 = vmatprep.subr.mxu0 0.0
        %744 = vmatpush2.msra.mxu0 0.0
        %745 = vmatprep.subr.mxu0 0.0
        %746 = vmatpush2.msra.mxu0 0.0
        %747 = vmatprep.subr.mxu0 0.0
        %748 = vmatpush2.msra.mxu0 0.0
        %749 = vmatprep.subr.mxu0 0.0
        %750 = vmatpush2.msra.mxu0 0.0
        %751 = vmatprep.subr.mxu0 0.0
        %752 = vmatpush2.msra.mxu0 0.0
        %753 = vmatprep.subr.mxu0 0.0
        %754 = vmatpush2.msra.mxu0 0.0
        %755 = vmatprep.subr.mxu0 0.0
        %756 = vmatpush2.msra.mxu0 0.0
        %757 = vmatprep.subr.mxu0 0.0
        %758 = vmatpush2.msra.mxu0 0.0
        %759 = vmatprep.subr.mxu0 0.0
        %760 = vmatpush2.msra.mxu0 0.0
        %761 = vmatprep.subr.mxu0 0.0
        %762 = vmatpush2.msra.mxu0 0.0
        %763 = vmatprep.subr.mxu0 0.0
        %764 = vmatpush2.msra.mxu0 0.0
        %765 = vmatprep.subr.mxu0 0.0
        %766 = vmatpush2.msra.mxu0 %v609
        %767 = vmatprep.mubr.f32.mxu0 %v623
        %768 = vmatmul.mubr.f32.gmra.mxu0 %v554
        %v769 = vpop.f32.mrf.mxu0
        %v770 = vadd.f32 %v695, %v769
        %v771 = vpop.f32.mrf.mxu0
        %772 = vmatprep.mubr.f32.mxu0 %v626
        %773 = vmatmul.mubr.f32.gmra.mxu0 %v558
        %v774 = vpop.f32.mrf.mxu0
        %v775 = vadd.f32 %v700, %v774
        %v776 = vpop.f32.mrf.mxu0
        %777 = vdwg.mxu0
        %s778 = scalar_lea.vmem [#allocation2], 16
        %v779 = vld [vmem:[%s778] sm:$0xff]
        %v780 = vld [vmem:[%s778 + $0x8] sm:$0xff]
        %v781 = vmul.f32 %v779, 0.2
        %v782 = vmul.f32 %v780, 0.2
        %s783 = scalar_lea.vmem [#allocation3], 16
        %v784 = vld [vmem:[%s783] sm:$0xff]
        %v785 = vld [vmem:[%s783 + $0x8] sm:$0xff]
        %v786 = vsub.f32 1.0, %v784
        %v787 = vsub.f32 1.0, %v785
        %v788 = vmul.f32 %v781, %v786
        %v789 = vmul.f32 %v782, %v787
        %v790 = vadd.f32 %v788, %v770
        %v791 = vadd.f32 %v789, %v775
        %vm792 = vcmp.gt.f32.partialorder %v790, 0.5
        %vm793 = vcmp.gt.f32.partialorder %v791, 0.5
        %v794 = vsel %vm792, 1, 0
        %v795 = vsel %vm793, 1, 0
        %v796 = vcvt.s32.f32 %v794
        %v797 = vcvt.s32.f32 %v795
        %798 = vst.msk [vmem:[%s778] sm:$0xff] %vm543, %v790
        %799 = vst.msk [vmem:[%s778 + $0x8] sm:$0xff] %vm543, %v791
        %800 = vst.msk [vmem:[%s783] sm:$0xff] %vm543, %v796
        %801 = vst.msk [vmem:[%s783 + $0x8] sm:$0xff] %vm543, %v797
        %v802 = vmul.f32 %v796, 0.25
        %v803 = vmul.f32 %v797, 0.25
        %v804 = vadd.f32 %v550, %v802
        %v805 = vadd.f32 %v551, %v803
        %v806 = vld [vmem:[%s1] sm:$0xff]
        %v807 = vld [vmem:[%s1 + $0x8] sm:$0xff]
        %v808 = vld [vmem:[%s1 + $0x10] sm:$0xff]
        %v809 = vld [vmem:[%s1 + $0x18] sm:$0xff]
        %v810 = vld [vmem:[%s1 + $0x20] sm:$0xff]
        %v811 = vld [vmem:[%s1 + $0x28] sm:$0xff]
        %v812 = vld [vmem:[%s1 + $0x30] sm:$0xff]
        %v813 = vld [vmem:[%s1 + $0x38] sm:$0xff]
        %s814 = scalar_lea.vmem %s266, 784
        %v815 = vld [vmem:[%s814] sm:$0xff]
        %v816 = vld [vmem:[%s814 + $0x8] sm:$0xff]
        %v817 = vld [vmem:[%s814 + $0x10] sm:$0xff]
        %v818 = vld [vmem:[%s814 + $0x18] sm:$0xff]
        %v819 = vld [vmem:[%s814 + $0x20] sm:$0xff]
        %v820 = vld [vmem:[%s814 + $0x28] sm:$0xff]
        %v821 = vld [vmem:[%s814 + $0x30] sm:$0xff]
        %v822 = vld [vmem:[%s814 + $0x38] sm:$0xff]
        %v823 = vld [vmem:[%s814 + $0x40] sm:$0xff]
        %v824 = vld [vmem:[%s814 + $0x48] sm:$0xff]
        %v825 = vld [vmem:[%s814 + $0x50] sm:$0xff]
        %v826 = vld [vmem:[%s814 + $0x58] sm:$0xff]
        %v827 = vld [vmem:[%s814 + $0x60] sm:$0xff]
        %v828 = vld [vmem:[%s814 + $0x68] sm:$0xff]
        %v829 = vld [vmem:[%s814 + $0x70] sm:$0xff]
        %v830 = vld [vmem:[%s814 + $0x78] sm:$0xff]
        %v831 = vld [vmem:[%s814 + $0x80] sm:$0xff]
        %v832 = vld [vmem:[%s814 + $0x88] sm:$0xff]
        %v833 = vld [vmem:[%s814 + $0x90] sm:$0xff]
        %v834 = vld [vmem:[%s814 + $0x98] sm:$0xff]
        %v835 = vld [vmem:[%s814 + $0xa0] sm:$0xff]
        %v836 = vld [vmem:[%s814 + $0xa8] sm:$0xff]
        %v837 = vld [vmem:[%s814 + $0xb0] sm:$0xff]
        %v838 = vld [vmem:[%s814 + $0xb8] sm:$0xff]
        %v839 = vld [vmem:[%s814 + $0xc0] sm:$0xff]
        %v840 = vld [vmem:[%s814 + $0xc8] sm:$0xff]
        %v841 = vld [vmem:[%s814 + $0xd0] sm:$0xff]
        %v842 = vld [vmem:[%s814 + $0xd8] sm:$0xff]
        %v843 = vld [vmem:[%s814 + $0xe0] sm:$0xff]
        %v844 = vld [vmem:[%s814 + $0xe8] sm:$0xff]
        %v845 = vld [vmem:[%s814 + $0xf0] sm:$0xff]
        %v846 = vld [vmem:[%s814 + $0xf8] sm:$0xff]
        %v847 = vld [vmem:[%s814 + $0x100] sm:$0xff]
        %v848 = vld [vmem:[%s814 + $0x108] sm:$0xff]
        %v849 = vld [vmem:[%s814 + $0x110] sm:$0xff]
        %v850 = vld [vmem:[%s814 + $0x118] sm:$0xff]
        %v851 = vld [vmem:[%s814 + $0x120] sm:$0xff]
        %v852 = vld [vmem:[%s814 + $0x128] sm:$0xff]
        %v853 = vld [vmem:[%s814 + $0x130] sm:$0xff]
        %v854 = vld [vmem:[%s814 + $0x138] sm:$0xff]
        %v855 = vld [vmem:[%s814 + $0x140] sm:$0xff]
        %v856 = vld [vmem:[%s814 + $0x148] sm:$0xff]
        %v857 = vld [vmem:[%s814 + $0x150] sm:$0xff]
        %v858 = vld [vmem:[%s814 + $0x158] sm:$0xff]
        %v859 = vld [vmem:[%s814 + $0x160] sm:$0xff]
        %v860 = vld [vmem:[%s814 + $0x168] sm:$0xff]
        %v861 = vld [vmem:[%s814 + $0x170] sm:$0xff]
        %v862 = vld [vmem:[%s814 + $0x178] sm:$0xff]
        %v863 = vld [vmem:[%s814 + $0x180] sm:$0xff]
        %v864 = vld [vmem:[%s2] sm:$0xff]
        %v865 = vld [vmem:[%s2 + $0x8] sm:$0xff]
        %867 = vset.pattern.permute.xlu0 0
        %868 = vperm.xlu0 %867, %v864
        %v869 = vpop.permute.xlu0 %868
        %872 = vset.pattern.permute.xlu0 0
        %873 = vperm.xlu0 %872, %v865
        %v874 = vpop.permute.xlu0 %873
        %v877 = vsel %vm368, %v809, 0
        %v880 = vsel %vm368, %v813, 0
        %882 = vmatprep.subr.mxu0 0.0
        %883 = vmatpush1.msra.mxu0 %v830
        %884 = vmatprep.subr.mxu0 0.0
        %885 = vmatpush1.msra.mxu0 %v829
        %886 = vmatprep.subr.mxu0 0.0
        %887 = vmatpush1.msra.mxu0 %v828
        %888 = vmatprep.subr.mxu0 0.0
        %889 = vmatpush1.msra.mxu0 %v827
        %890 = vmatprep.subr.mxu0 0.0
        %891 = vmatpush1.msra.mxu0 %v826
        %892 = vmatprep.subr.mxu0 0.0
        %893 = vmatpush1.msra.mxu0 %v825
        %894 = vmatprep.subr.mxu0 0.0
        %895 = vmatpush1.msra.mxu0 %v824
        %896 = vmatprep.subr.mxu0 0.0
        %897 = vmatpush1.msra.mxu0 %v823
        %898 = vmatprep.subr.mxu0 0.0
        %899 = vmatpush1.msra.mxu0 %v822
        %900 = vmatprep.subr.mxu0 0.0
        %901 = vmatpush1.msra.mxu0 %v821
        %902 = vmatprep.subr.mxu0 0.0
        %903 = vmatpush1.msra.mxu0 %v820
        %904 = vmatprep.subr.mxu0 0.0
        %905 = vmatpush1.msra.mxu0 %v819
        %906 = vmatprep.subr.mxu0 0.0
        %907 = vmatpush1.msra.mxu0 %v818
        %908 = vmatprep.subr.mxu0 0.0
        %909 = vmatpush1.msra.mxu0 %v817
        %910 = vmatprep.subr.mxu0 0.0
        %911 = vmatpush1.msra.mxu0 %v816
        %912 = vmatprep.subr.mxu0 0.0
        %913 = vmatpush1.msra.mxu0 %v815
        %914 = vmatprep.subr.mxu0 0.0
        %915 = vmatpush2.msra.mxu0 %v846
        %916 = vmatprep.subr.mxu0 0.0
        %917 = vmatpush2.msra.mxu0 %v845
        %918 = vmatprep.subr.mxu0 0.0
        %919 = vmatpush2.msra.mxu0 %v844
        %920 = vmatprep.subr.mxu0 0.0
        %921 = vmatpush2.msra.mxu0 %v843
        %922 = vmatprep.subr.mxu0 0.0
        %923 = vmatpush2.msra.mxu0 %v842
        %924 = vmatprep.subr.mxu0 0.0
        %925 = vmatpush2.msra.mxu0 %v841
        %926 = vmatprep.subr.mxu0 0.0
        %927 = vmatpush2.msra.mxu0 %v840
        %928 = vmatprep.subr.mxu0 0.0
        %929 = vmatpush2.msra.mxu0 %v839
        %930 = vmatprep.subr.mxu0 0.0
        %931 = vmatpush2.msra.mxu0 %v838
        %932 = vmatprep.subr.mxu0 0.0
        %933 = vmatpush2.msra.mxu0 %v837
        %934 = vmatprep.subr.mxu0 0.0
        %935 = vmatpush2.msra.mxu0 %v836
        %936 = vmatprep.subr.mxu0 0.0
        %937 = vmatpush2.msra.mxu0 %v835
        %938 = vmatprep.subr.mxu0 0.0
        %939 = vmatpush2.msra.mxu0 %v834
        %940 = vmatprep.subr.mxu0 0.0
        %941 = vmatpush2.msra.mxu0 %v833
        %942 = vmatprep.subr.mxu0 0.0
        %943 = vmatpush2.msra.mxu0 %v832
        %944 = vmatprep.subr.mxu0 0.0
        %945 = vmatpush2.msra.mxu0 %v831
        %946 = vmatprep.mubr.f32.mxu0 %v807
        %947 = vmatmul.mubr.f32.gmra.mxu0 %v806
        %v948 = vpop.f32.mrf.mxu0
        %v949 = vadd.f32 %v869, %v948
        %v950 = vpop.f32.mrf.mxu0
        %951 = vmatprep.mubr.f32.mxu0 %v811
        %952 = vmatmul.mubr.f32.gmra.mxu0 %v810
        %v953 = vpop.f32.mrf.mxu0
        %v954 = vadd.f32 %v874, %v953
        %v955 = vpop.f32.mrf.mxu0
        %956 = vdwg.mxu0
        %957 = vmatprep.subr.mxu0 0.0
        %958 = vmatpush1.msra.mxu0 %v862
        %959 = vmatprep.subr.mxu0 0.0
        %960 = vmatpush1.msra.mxu0 %v861
        %961 = vmatprep.subr.mxu0 0.0
        %962 = vmatpush1.msra.mxu0 %v860
        %963 = vmatprep.subr.mxu0 0.0
        %964 = vmatpush1.msra.mxu0 %v859
        %965 = vmatprep.subr.mxu0 0.0
        %966 = vmatpush1.msra.mxu0 %v858
        %967 = vmatprep.subr.mxu0 0.0
        %968 = vmatpush1.msra.mxu0 %v857
        %969 = vmatprep.subr.mxu0 0.0
        %970 = vmatpush1.msra.mxu0 %v856
        %971 = vmatprep.subr.mxu0 0.0
        %972 = vmatpush1.msra.mxu0 %v855
        %973 = vmatprep.subr.mxu0 0.0
        %974 = vmatpush1.msra.mxu0 %v854
        %975 = vmatprep.subr.mxu0 0.0
        %976 = vmatpush1.msra.mxu0 %v853
        %977 = vmatprep.subr.mxu0 0.0
        %978 = vmatpush1.msra.mxu0 %v852
        %979 = vmatprep.subr.mxu0 0.0
        %980 = vmatpush1.msra.mxu0 %v851
        %981 = vmatprep.subr.mxu0 0.0
        %982 = vmatpush1.msra.mxu0 %v850
        %983 = vmatprep.subr.mxu0 0.0
        %984 = vmatpush1.msra.mxu0 %v849
        %985 = vmatprep.subr.mxu0 0.0
        %986 = vmatpush1.msra.mxu0 %v848
        %987 = vmatprep.subr.mxu0 0.0
        %988 = vmatpush1.msra.mxu0 %v847
        %989 = vmatprep.subr.mxu0 0.0
        %990 = vmatpush2.msra.mxu0 0.0
        %991 = vmatprep.subr.mxu0 0.0
        %992 = vmatpush2.msra.mxu0 0.0
        %993 = vmatprep.subr.mxu0 0.0
        %994 = vmatpush2.msra.mxu0 0.0
        %995 = vmatprep.subr.mxu0 0.0
        %996 = vmatpush2.msra.mxu0 0.0
        %997 = vmatprep.subr.mxu0 0.0
        %998 = vmatpush2.msra.mxu0 0.0
        %999 = vmatprep.subr.mxu0 0.0
        %1000 = vmatpush2.msra.mxu0 0.0
        %1001 = vmatprep.subr.mxu0 0.0
        %1002 = vmatpush2.msra.mxu0 0.0
        %1003 = vmatprep.subr.mxu0 0.0
        %1004 = vmatpush2.msra.mxu0 0.0
        %1005 = vmatprep.subr.mxu0 0.0
        %1006 = vmatpush2.msra.mxu0 0.0
        %1007 = vmatprep.subr.mxu0 0.0
        %1008 = vmatpush2.msra.mxu0 0.0
        %1009 = vmatprep.subr.mxu0 0.0
        %1010 = vmatpush2.msra.mxu0 0.0
        %1011 = vmatprep.subr.mxu0 0.0
        %1012 = vmatpush2.msra.mxu0 0.0
        %1013 = vmatprep.subr.mxu0 0.0
        %1014 = vmatpush2.msra.mxu0 0.0
        %1015 = vmatprep.subr.mxu0 0.0
        %1016 = vmatpush2.msra.mxu0 0.0
        %1017 = vmatprep.subr.mxu0 0.0
        %1018 = vmatpush2.msra.mxu0 0.0
        %1019 = vmatprep.subr.mxu0 0.0
        %1020 = vmatpush2.msra.mxu0 %v863
        %1021 = vmatprep.mubr.f32.mxu0 %v877
        %1022 = vmatmul.mubr.f32.gmra.mxu0 %v808
        %v1023 = vpop.f32.mrf.mxu0
        %v1024 = vadd.f32 %v949, %v1023
        %v1025 = vpop.f32.mrf.mxu0
        %1026 = vmatprep.mubr.f32.mxu0 %v880
        %1027 = vmatmul.mubr.f32.gmra.mxu0 %v812
        %v1028 = vpop.f32.mrf.mxu0
        %v1029 = vadd.f32 %v954, %v1028
        %v1030 = vpop.f32.mrf.mxu0
        %1031 = vdwg.mxu0
        %s1032 = scalar_lea.vmem [#allocation2], 32
        %v1033 = vld [vmem:[%s1032] sm:$0xff]
        %v1034 = vld [vmem:[%s1032 + $0x8] sm:$0xff]
        %v1035 = vmul.f32 %v1033, 0.2
        %v1036 = vmul.f32 %v1034, 0.2
        %s1037 = scalar_lea.vmem [#allocation3], 32
        %v1038 = vld [vmem:[%s1037] sm:$0xff]
        %v1039 = vld [vmem:[%s1037 + $0x8] sm:$0xff]
        %v1040 = vsub.f32 1.0, %v1038
        %v1041 = vsub.f32 1.0, %v1039
        %v1042 = vmul.f32 %v1035, %v1040
        %v1043 = vmul.f32 %v1036, %v1041
        %v1044 = vadd.f32 %v1042, %v1024
        %v1045 = vadd.f32 %v1043, %v1029
        %vm1046 = vcmp.gt.f32.partialorder %v1044, 0.5
        %vm1047 = vcmp.gt.f32.partialorder %v1045, 0.5
        %v1048 = vsel %vm1046, 1, 0
        %v1049 = vsel %vm1047, 1, 0
        %v1050 = vcvt.s32.f32 %v1048
        %v1051 = vcvt.s32.f32 %v1049
        %1052 = vst.msk [vmem:[%s1032] sm:$0xff] %vm543, %v1044
        %1053 = vst.msk [vmem:[%s1032 + $0x8] sm:$0xff] %vm543, %v1045
        %1054 = vst.msk [vmem:[%s1037] sm:$0xff] %vm543, %v1050
        %1055 = vst.msk [vmem:[%s1037 + $0x8] sm:$0xff] %vm543, %v1051
        %v1056 = vmul.f32 %v1050, 0.25
        %v1057 = vmul.f32 %v1051, 0.25
        %v1058 = vadd.f32 %v804, %v1056
        %v1059 = vadd.f32 %v805, %v1057
        %v1060 = vld [vmem:[%s1] sm:$0xff]
        %v1061 = vld [vmem:[%s1 + $0x8] sm:$0xff]
        %v1062 = vld [vmem:[%s1 + $0x10] sm:$0xff]
        %v1063 = vld [vmem:[%s1 + $0x18] sm:$0xff]
        %v1064 = vld [vmem:[%s1 + $0x20] sm:$0xff]
        %v1065 = vld [vmem:[%s1 + $0x28] sm:$0xff]
        %v1066 = vld [vmem:[%s1 + $0x30] sm:$0xff]
        %v1067 = vld [vmem:[%s1 + $0x38] sm:$0xff]
        %s1068 = scalar_lea.vmem %s266, 1176
        %v1069 = vld [vmem:[%s1068] sm:$0xff]
        %v1070 = vld [vmem:[%s1068 + $0x8] sm:$0xff]
        %v1071 = vld [vmem:[%s1068 + $0x10] sm:$0xff]
        %v1072 = vld [vmem:[%s1068 + $0x18] sm:$0xff]
        %v1073 = vld [vmem:[%s1068 + $0x20] sm:$0xff]
        %v1074 = vld [vmem:[%s1068 + $0x28] sm:$0xff]
        %v1075 = vld [vmem:[%s1068 + $0x30] sm:$0xff]
        %v1076 = vld [vmem:[%s1068 + $0x38] sm:$0xff]
        %v1077 = vld [vmem:[%s1068 + $0x40] sm:$0xff]
        %v1078 = vld [vmem:[%s1068 + $0x48] sm:$0xff]
        %v1079 = vld [vmem:[%s1068 + $0x50] sm:$0xff]
        %v1080 = vld [vmem:[%s1068 + $0x58] sm:$0xff]
        %v1081 = vld [vmem:[%s1068 + $0x60] sm:$0xff]
        %v1082 = vld [vmem:[%s1068 + $0x68] sm:$0xff]
        %v1083 = vld [vmem:[%s1068 + $0x70] sm:$0xff]
        %v1084 = vld [vmem:[%s1068 + $0x78] sm:$0xff]
        %v1085 = vld [vmem:[%s1068 + $0x80] sm:$0xff]
        %v1086 = vld [vmem:[%s1068 + $0x88] sm:$0xff]
        %v1087 = vld [vmem:[%s1068 + $0x90] sm:$0xff]
        %v1088 = vld [vmem:[%s1068 + $0x98] sm:$0xff]
        %v1089 = vld [vmem:[%s1068 + $0xa0] sm:$0xff]
        %v1090 = vld [vmem:[%s1068 + $0xa8] sm:$0xff]
        %v1091 = vld [vmem:[%s1068 + $0xb0] sm:$0xff]
        %v1092 = vld [vmem:[%s1068 + $0xb8] sm:$0xff]
        %v1093 = vld [vmem:[%s1068 + $0xc0] sm:$0xff]
        %v1094 = vld [vmem:[%s1068 + $0xc8] sm:$0xff]
        %v1095 = vld [vmem:[%s1068 + $0xd0] sm:$0xff]
        %v1096 = vld [vmem:[%s1068 + $0xd8] sm:$0xff]
        %v1097 = vld [vmem:[%s1068 + $0xe0] sm:$0xff]
        %v1098 = vld [vmem:[%s1068 + $0xe8] sm:$0xff]
        %v1099 = vld [vmem:[%s1068 + $0xf0] sm:$0xff]
        %v1100 = vld [vmem:[%s1068 + $0xf8] sm:$0xff]
        %v1101 = vld [vmem:[%s1068 + $0x100] sm:$0xff]
        %v1102 = vld [vmem:[%s1068 + $0x108] sm:$0xff]
        %v1103 = vld [vmem:[%s1068 + $0x110] sm:$0xff]
        %v1104 = vld [vmem:[%s1068 + $0x118] sm:$0xff]
        %v1105 = vld [vmem:[%s1068 + $0x120] sm:$0xff]
        %v1106 = vld [vmem:[%s1068 + $0x128] sm:$0xff]
        %v1107 = vld [vmem:[%s1068 + $0x130] sm:$0xff]
        %v1108 = vld [vmem:[%s1068 + $0x138] sm:$0xff]
        %v1109 = vld [vmem:[%s1068 + $0x140] sm:$0xff]
        %v1110 = vld [vmem:[%s1068 + $0x148] sm:$0xff]
        %v1111 = vld [vmem:[%s1068 + $0x150] sm:$0xff]
        %v1112 = vld [vmem:[%s1068 + $0x158] sm:$0xff]
        %v1113 = vld [vmem:[%s1068 + $0x160] sm:$0xff]
        %v1114 = vld [vmem:[%s1068 + $0x168] sm:$0xff]
        %v1115 = vld [vmem:[%s1068 + $0x170] sm:$0xff]
        %v1116 = vld [vmem:[%s1068 + $0x178] sm:$0xff]
        %v1117 = vld [vmem:[%s1068 + $0x180] sm:$0xff]
        %v1118 = vld [vmem:[%s2] sm:$0xff]
        %v1119 = vld [vmem:[%s2 + $0x8] sm:$0xff]
        %1121 = vset.pattern.permute.xlu0 0
        %1122 = vperm.xlu0 %1121, %v1118
        %v1123 = vpop.permute.xlu0 %1122
        %1126 = vset.pattern.permute.xlu0 0
        %1127 = vperm.xlu0 %1126, %v1119
        %v1128 = vpop.permute.xlu0 %1127
        %v1131 = vsel %vm368, %v1063, 0
        %v1134 = vsel %vm368, %v1067, 0
        %1136 = vmatprep.subr.mxu0 0.0
        %1137 = vmatpush1.msra.mxu0 %v1084
        %1138 = vmatprep.subr.mxu0 0.0
        %1139 = vmatpush1.msra.mxu0 %v1083
        %1140 = vmatprep.subr.mxu0 0.0
        %1141 = vmatpush1.msra.mxu0 %v1082
        %1142 = vmatprep.subr.mxu0 0.0
        %1143 = vmatpush1.msra.mxu0 %v1081
        %1144 = vmatprep.subr.mxu0 0.0
        %1145 = vmatpush1.msra.mxu0 %v1080
        %1146 = vmatprep.subr.mxu0 0.0
        %1147 = vmatpush1.msra.mxu0 %v1079
        %1148 = vmatprep.subr.mxu0 0.0
        %1149 = vmatpush1.msra.mxu0 %v1078
        %1150 = vmatprep.subr.mxu0 0.0
        %1151 = vmatpush1.msra.mxu0 %v1077
        %1152 = vmatprep.subr.mxu0 0.0
        %1153 = vmatpush1.msra.mxu0 %v1076
        %1154 = vmatprep.subr.mxu0 0.0
        %1155 = vmatpush1.msra.mxu0 %v1075
        %1156 = vmatprep.subr.mxu0 0.0
        %1157 = vmatpush1.msra.mxu0 %v1074
        %1158 = vmatprep.subr.mxu0 0.0
        %1159 = vmatpush1.msra.mxu0 %v1073
        %1160 = vmatprep.subr.mxu0 0.0
        %1161 = vmatpush1.msra.mxu0 %v1072
        %1162 = vmatprep.subr.mxu0 0.0
        %1163 = vmatpush1.msra.mxu0 %v1071
        %1164 = vmatprep.subr.mxu0 0.0
        %1165 = vmatpush1.msra.mxu0 %v1070
        %1166 = vmatprep.subr.mxu0 0.0
        %1167 = vmatpush1.msra.mxu0 %v1069
        %1168 = vmatprep.subr.mxu0 0.0
        %1169 = vmatpush2.msra.mxu0 %v1100
        %1170 = vmatprep.subr.mxu0 0.0
        %1171 = vmatpush2.msra.mxu0 %v1099
        %1172 = vmatprep.subr.mxu0 0.0
        %1173 = vmatpush2.msra.mxu0 %v1098
        %1174 = vmatprep.subr.mxu0 0.0
        %1175 = vmatpush2.msra.mxu0 %v1097
        %1176 = vmatprep.subr.mxu0 0.0
        %1177 = vmatpush2.msra.mxu0 %v1096
        %1178 = vmatprep.subr.mxu0 0.0
        %1179 = vmatpush2.msra.mxu0 %v1095
        %1180 = vmatprep.subr.mxu0 0.0
        %1181 = vmatpush2.msra.mxu0 %v1094
        %1182 = vmatprep.subr.mxu0 0.0
        %1183 = vmatpush2.msra.mxu0 %v1093
        %1184 = vmatprep.subr.mxu0 0.0
        %1185 = vmatpush2.msra.mxu0 %v1092
        %1186 = vmatprep.subr.mxu0 0.0
        %1187 = vmatpush2.msra.mxu0 %v1091
        %1188 = vmatprep.subr.mxu0 0.0
        %1189 = vmatpush2.msra.mxu0 %v1090
        %1190 = vmatprep.subr.mxu0 0.0
        %1191 = vmatpush2.msra.mxu0 %v1089
        %1192 = vmatprep.subr.mxu0 0.0
        %1193 = vmatpush2.msra.mxu0 %v1088
        %1194 = vmatprep.subr.mxu0 0.0
        %1195 = vmatpush2.msra.mxu0 %v1087
        %1196 = vmatprep.subr.mxu0 0.0
        %1197 = vmatpush2.msra.mxu0 %v1086
        %1198 = vmatprep.subr.mxu0 0.0
        %1199 = vmatpush2.msra.mxu0 %v1085
        %1200 = vmatprep.mubr.f32.mxu0 %v1061
        %1201 = vmatmul.mubr.f32.gmra.mxu0 %v1060
        %v1202 = vpop.f32.mrf.mxu0
        %v1203 = vadd.f32 %v1123, %v1202
        %v1204 = vpop.f32.mrf.mxu0
        %1205 = vmatprep.mubr.f32.mxu0 %v1065
        %1206 = vmatmul.mubr.f32.gmra.mxu0 %v1064
        %v1207 = vpop.f32.mrf.mxu0
        %v1208 = vadd.f32 %v1128, %v1207
        %v1209 = vpop.f32.mrf.mxu0
        %1210 = vdwg.mxu0
        %1211 = vmatprep.subr.mxu0 0.0
        %1212 = vmatpush1.msra.mxu0 %v1116
        %1213 = vmatprep.subr.mxu0 0.0
        %1214 = vmatpush1.msra.mxu0 %v1115
        %1215 = vmatprep.subr.mxu0 0.0
        %1216 = vmatpush1.msra.mxu0 %v1114
        %1217 = vmatprep.subr.mxu0 0.0
        %1218 = vmatpush1.msra.mxu0 %v1113
        %1219 = vmatprep.subr.mxu0 0.0
        %1220 = vmatpush1.msra.mxu0 %v1112
        %1221 = vmatprep.subr.mxu0 0.0
        %1222 = vmatpush1.msra.mxu0 %v1111
        %1223 = vmatprep.subr.mxu0 0.0
        %1224 = vmatpush1.msra.mxu0 %v1110
        %1225 = vmatprep.subr.mxu0 0.0
        %1226 = vmatpush1.msra.mxu0 %v1109
        %1227 = vmatprep.subr.mxu0 0.0
        %1228 = vmatpush1.msra.mxu0 %v1108
        %1229 = vmatprep.subr.mxu0 0.0
        %1230 = vmatpush1.msra.mxu0 %v1107
        %1231 = vmatprep.subr.mxu0 0.0
        %1232 = vmatpush1.msra.mxu0 %v1106
        %1233 = vmatprep.subr.mxu0 0.0
        %1234 = vmatpush1.msra.mxu0 %v1105
        %1235 = vmatprep.subr.mxu0 0.0
        %1236 = vmatpush1.msra.mxu0 %v1104
        %1237 = vmatprep.subr.mxu0 0.0
        %1238 = vmatpush1.msra.mxu0 %v1103
        %1239 = vmatprep.subr.mxu0 0.0
        %1240 = vmatpush1.msra.mxu0 %v1102
        %1241 = vmatprep.subr.mxu0 0.0
        %1242 = vmatpush1.msra.mxu0 %v1101
        %1243 = vmatprep.subr.mxu0 0.0
        %1244 = vmatpush2.msra.mxu0 0.0
        %1245 = vmatprep.subr.mxu0 0.0
        %1246 = vmatpush2.msra.mxu0 0.0
        %1247 = vmatprep.subr.mxu0 0.0
        %1248 = vmatpush2.msra.mxu0 0.0
        %1249 = vmatprep.subr.mxu0 0.0
        %1250 = vmatpush2.msra.mxu0 0.0
        %1251 = vmatprep.subr.mxu0 0.0
        %1252 = vmatpush2.msra.mxu0 0.0
        %1253 = vmatprep.subr.mxu0 0.0
        %1254 = vmatpush2.msra.mxu0 0.0
        %1255 = vmatprep.subr.mxu0 0.0
        %1256 = vmatpush2.msra.mxu0 0.0
        %1257 = vmatprep.subr.mxu0 0.0
        %1258 = vmatpush2.msra.mxu0 0.0
        %1259 = vmatprep.subr.mxu0 0.0
        %1260 = vmatpush2.msra.mxu0 0.0
        %1261 = vmatprep.subr.mxu0 0.0
        %1262 = vmatpush2.msra.mxu0 0.0
        %1263 = vmatprep.subr.mxu0 0.0
        %1264 = vmatpush2.msra.mxu0 0.0
        %1265 = vmatprep.subr.mxu0 0.0
        %1266 = vmatpush2.msra.mxu0 0.0
        %1267 = vmatprep.subr.mxu0 0.0
        %1268 = vmatpush2.msra.mxu0 0.0
        %1269 = vmatprep.subr.mxu0 0.0
        %1270 = vmatpush2.msra.mxu0 0.0
        %1271 = vmatprep.subr.mxu0 0.0
        %1272 = vmatpush2.msra.mxu0 0.0
        %1273 = vmatprep.subr.mxu0 0.0
        %1274 = vmatpush2.msra.mxu0 %v1117
        %1275 = vmatprep.mubr.f32.mxu0 %v1131
        %1276 = vmatmul.mubr.f32.gmra.mxu0 %v1062
        %v1277 = vpop.f32.mrf.mxu0
        %v1278 = vadd.f32 %v1203, %v1277
        %v1279 = vpop.f32.mrf.mxu0
        %1280 = vmatprep.mubr.f32.mxu0 %v1134
        %1281 = vmatmul.mubr.f32.gmra.mxu0 %v1066
        %v1282 = vpop.f32.mrf.mxu0
        %v1283 = vadd.f32 %v1208, %v1282
        %v1284 = vpop.f32.mrf.mxu0
        %1285 = vdwg.mxu0
        %s1286 = scalar_lea.vmem [#allocation2], 48
        %v1287 = vld [vmem:[%s1286] sm:$0xff]
        %v1288 = vld [vmem:[%s1286 + $0x8] sm:$0xff]
        %v1289 = vmul.f32 %v1287, 0.2
        %v1290 = vmul.f32 %v1288, 0.2
        %s1291 = scalar_lea.vmem [#allocation3], 48
        %v1292 = vld [vmem:[%s1291] sm:$0xff]
        %v1293 = vld [vmem:[%s1291 + $0x8] sm:$0xff]
        %v1294 = vsub.f32 1.0, %v1292
        %v1295 = vsub.f32 1.0, %v1293
        %v1296 = vmul.f32 %v1289, %v1294
        %v1297 = vmul.f32 %v1290, %v1295
        %v1298 = vadd.f32 %v1296, %v1278
        %v1299 = vadd.f32 %v1297, %v1283
        %vm1300 = vcmp.gt.f32.partialorder %v1298, 0.5
        %vm1301 = vcmp.gt.f32.partialorder %v1299, 0.5
        %v1302 = vsel %vm1300, 1, 0
        %v1303 = vsel %vm1301, 1, 0
        %v1304 = vcvt.s32.f32 %v1302
        %v1305 = vcvt.s32.f32 %v1303
        %1306 = vst.msk [vmem:[%s1286] sm:$0xff] %vm543, %v1298
        %1307 = vst.msk [vmem:[%s1286 + $0x8] sm:$0xff] %vm543, %v1299
        %1308 = vst.msk [vmem:[%s1291] sm:$0xff] %vm543, %v1304
        %1309 = vst.msk [vmem:[%s1291 + $0x8] sm:$0xff] %vm543, %v1305
        %v1310 = vmul.f32 %v1304, 0.25
        %v1311 = vmul.f32 %v1305, 0.25
        %v1312 = vadd.f32 %v1058, %v1310
        %v1313 = vadd.f32 %v1059, %v1311
        %1316 = vrot.lane.b32.xlu0 %v1312, 8
        %v1317 = vpop.permute.xlu0 %1316
        %1318 = vrot.lane.b32.xlu0 %v1313, 8
        %v1319 = vpop.permute.xlu0 %1318
        %v1322 = vsub.f32 %v1312, %v1317
        %v1323 = vsub.f32 %v1313, %v1319
        %v1324 = vand.u32 2147483647, %v1322
        %v1325 = vand.u32 2147483647, %v1323
        %v1326 = vld [vmem:[%s3] sm:$0xff]
        %v1327 = vld [vmem:[%s3 + $0x8] sm:$0xff]
        %v1328 = vld [vmem:[%s3 + $0x10] sm:$0xff]
        %v1329 = vld [vmem:[%s3 + $0x18] sm:$0xff]
        %s1330 = scalar_lea.vmem %s3, 32
        %v1331 = vld [vmem:[%s1330] sm:$0xff]
        %v1332 = vld [vmem:[%s1330 + $0x8] sm:$0xff]
        %v1333 = vld [vmem:[%s1330 + $0x10] sm:$0xff]
        %v1334 = vld [vmem:[%s1330 + $0x18] sm:$0xff]
        %1337 = vrot.lane.b32.xlu0 %v1324, 118
        %v1338 = vpop.permute.xlu0 %1337
        %1339 = vrot.lane.b32.xlu0 %v1325, 118
        %v1340 = vpop.permute.xlu0 %1339
        %v1344 = vsel %vm543, %v1331, 0
        %v1347 = vsel %vm543, %v1332, 0
        %v1350 = vsel %vm543, %v1333, 0
        %v1353 = vsel %vm543, %v1334, 0
        %1355 = vmatprep.subr.mxu0 0.0
        %1356 = vmatpush1.msra.mxu0 0.0
        %1357 = vmatprep.subr.mxu0 0.0
        %1358 = vmatpush1.msra.mxu0 0.0
        %1359 = vmatprep.subr.mxu0 0.0
        %1360 = vmatpush1.msra.mxu0 0.0
        %1361 = vmatprep.subr.mxu0 0.0
        %1362 = vmatpush1.msra.mxu0 0.0
        %1363 = vmatprep.subr.mxu0 0.0
        %1364 = vmatpush1.msra.mxu0 0.0
        %1365 = vmatprep.subr.mxu0 0.0
        %1366 = vmatpush1.msra.mxu0 0.0
        %1367 = vmatprep.subr.mxu0 0.0
        %1368 = vmatpush1.msra.mxu0 0.0
        %1369 = vmatprep.subr.mxu0 0.0
        %1370 = vmatpush1.msra.mxu0 0.0
        %1371 = vmatprep.subr.mxu0 0.0
        %1372 = vmatpush1.msra.mxu0 0.0
        %1373 = vmatprep.subr.mxu0 0.0
        %1374 = vmatpush1.msra.mxu0 0.0
        %1375 = vmatprep.subr.mxu0 0.0
        %1376 = vmatpush1.msra.mxu0 0.0
        %1377 = vmatprep.subr.mxu0 0.0
        %1378 = vmatpush1.msra.mxu0 0.0
        %1379 = vmatprep.subr.mxu0 0.0
        %1380 = vmatpush1.msra.mxu0 0.0
        %1381 = vmatprep.subr.mxu0 0.0
        %1382 = vmatpush1.msra.mxu0 0.0
        %1383 = vmatprep.subr.mxu0 0.0
        %1384 = vmatpush1.msra.mxu0 %v1340
        %1385 = vmatprep.subr.mxu0 0.0
        %1386 = vmatpush1.msra.mxu0 %v1338
        %1387 = vmatprep.subr.mxu0 0.0
        %1388 = vmatpush2.msra.mxu0 0.0
        %1389 = vmatprep.subr.mxu0 0.0
        %1390 = vmatpush2.msra.mxu0 0.0
        %1391 = vmatprep.subr.mxu0 0.0
        %1392 = vmatpush2.msra.mxu0 0.0
        %1393 = vmatprep.subr.mxu0 0.0
        %1394 = vmatpush2.msra.mxu0 0.0
        %1395 = vmatprep.subr.mxu0 0.0
        %1396 = vmatpush2.msra.mxu0 0.0
        %1397 = vmatprep.subr.mxu0 0.0
        %1398 = vmatpush2.msra.mxu0 0.0
        %1399 = vmatprep.subr.mxu0 0.0
        %1400 = vmatpush2.msra.mxu0 0.0
        %1401 = vmatprep.subr.mxu0 0.0
        %1402 = vmatpush2.msra.mxu0 0.0
        %1403 = vmatprep.subr.mxu0 0.0
        %1404 = vmatpush2.msra.mxu0 0.0
        %1405 = vmatprep.subr.mxu0 0.0
        %1406 = vmatpush2.msra.mxu0 0.0
        %1407 = vmatprep.subr.mxu0 0.0
        %1408 = vmatpush2.msra.mxu0 0.0
        %1409 = vmatprep.subr.mxu0 0.0
        %1410 = vmatpush2.msra.mxu0 0.0
        %1411 = vmatprep.subr.mxu0 0.0
        %1412 = vmatpush2.msra.mxu0 0.0
        %1413 = vmatprep.subr.mxu0 0.0
        %1414 = vmatpush2.msra.mxu0 0.0
        %1415 = vmatprep.subr.mxu0 0.0
        %1416 = vmatpush2.msra.mxu0 0.0
        %1417 = vmatprep.subr.mxu0 0.0
        %1418 = vmatpush2.msra.mxu0 0.0
        %1419 = vmatprep.mubr.f32.mxu0 0.0
        %1420 = vmatmul.mubr.f32.gmra.mxu0 %v1344
        %v1421 = vpop.f32.mrf.mxu0
        %v1422 = vadd.f32 0.0, %v1421
        %v1423 = vpop.f32.mrf.mxu0
        %1424 = vmatprep.mubr.f32.mxu0 0.0
        %1425 = vmatmul.mubr.f32.gmra.mxu0 %v1347
        %v1426 = vpop.f32.mrf.mxu0
        %v1427 = vadd.f32 0.0, %v1426
        %v1428 = vpop.f32.mrf.mxu0
        %1429 = vmatprep.mubr.f32.mxu0 0.0
        %1430 = vmatmul.mubr.f32.gmra.mxu0 %v1350
        %v1431 = vpop.f32.mrf.mxu0
        %v1432 = vadd.f32 0.0, %v1431
        %v1433 = vpop.f32.mrf.mxu0
        %1434 = vmatprep.mubr.f32.mxu0 0.0
        %1435 = vmatmul.mubr.f32.gmra.mxu0 %v1353
        %v1436 = vpop.f32.mrf.mxu0
        %v1437 = vadd.f32 0.0, %v1436
        %v1438 = vpop.f32.mrf.mxu0
        %1439 = vdwg.mxu0
        %1440 = vrot.lane.b32.xlu0 %v1324, 120
        %v1441 = vpop.permute.xlu0 %1440
        %1442 = vrot.lane.b32.xlu0 %v1325, 120
        %v1443 = vpop.permute.xlu0 %1442
        %v1447 = vsel %vm543, %v1326, 0
        %v1450 = vsel %vm543, %v1327, 0
        %v1453 = vsel %vm543, %v1328, 0
        %v1456 = vsel %vm543, %v1329, 0
        %1458 = vmatprep.subr.mxu0 0.0
        %1459 = vmatpush1.msra.mxu0 0.0
        %1460 = vmatprep.subr.mxu0 0.0
        %1461 = vmatpush1.msra.mxu0 0.0
        %1462 = vmatprep.subr.mxu0 0.0
        %1463 = vmatpush1.msra.mxu0 0.0
        %1464 = vmatprep.subr.mxu0 0.0
        %1465 = vmatpush1.msra.mxu0 0.0
        %1466 = vmatprep.subr.mxu0 0.0
        %1467 = vmatpush1.msra.mxu0 0.0
        %1468 = vmatprep.subr.mxu0 0.0
        %1469 = vmatpush1.msra.mxu0 0.0
        %1470 = vmatprep.subr.mxu0 0.0
        %1471 = vmatpush1.msra.mxu0 0.0
        %1472 = vmatprep.subr.mxu0 0.0
        %1473 = vmatpush1.msra.mxu0 0.0
        %1474 = vmatprep.subr.mxu0 0.0
        %1475 = vmatpush1.msra.mxu0 0.0
        %1476 = vmatprep.subr.mxu0 0.0
        %1477 = vmatpush1.msra.mxu0 0.0
        %1478 = vmatprep.subr.mxu0 0.0
        %1479 = vmatpush1.msra.mxu0 0.0
        %1480 = vmatprep.subr.mxu0 0.0
        %1481 = vmatpush1.msra.mxu0 0.0
        %1482 = vmatprep.subr.mxu0 0.0
        %1483 = vmatpush1.msra.mxu0 0.0
        %1484 = vmatprep.subr.mxu0 0.0
        %1485 = vmatpush1.msra.mxu0 0.0
        %1486 = vmatprep.subr.mxu0 0.0
        %1487 = vmatpush1.msra.mxu0 %v1443
        %1488 = vmatprep.subr.mxu0 0.0
        %1489 = vmatpush1.msra.mxu0 %v1441
        %1490 = vmatprep.subr.mxu0 0.0
        %1491 = vmatpush2.msra.mxu0 0.0
        %1492 = vmatprep.subr.mxu0 0.0
        %1493 = vmatpush2.msra.mxu0 0.0
        %1494 = vmatprep.subr.mxu0 0.0
        %1495 = vmatpush2.msra.mxu0 0.0
        %1496 = vmatprep.subr.mxu0 0.0
        %1497 = vmatpush2.msra.mxu0 0.0
        %1498 = vmatprep.subr.mxu0 0.0
        %1499 = vmatpush2.msra.mxu0 0.0
        %1500 = vmatprep.subr.mxu0 0.0
        %1501 = vmatpush2.msra.mxu0 0.0
        %1502 = vmatprep.subr.mxu0 0.0
        %1503 = vmatpush2.msra.mxu0 0.0
        %1504 = vmatprep.subr.mxu0 0.0
        %1505 = vmatpush2.msra.mxu0 0.0
        %1506 = vmatprep.subr.mxu0 0.0
        %1507 = vmatpush2.msra.mxu0 0.0
        %1508 = vmatprep.subr.mxu0 0.0
        %1509 = vmatpush2.msra.mxu0 0.0
        %1510 = vmatprep.subr.mxu0 0.0
        %1511 = vmatpush2.msra.mxu0 0.0
        %1512 = vmatprep.subr.mxu0 0.0
        %1513 = vmatpush2.msra.mxu0 0.0
        %1514 = vmatprep.subr.mxu0 0.0
        %1515 = vmatpush2.msra.mxu0 0.0
        %1516 = vmatprep.subr.mxu0 0.0
        %1517 = vmatpush2.msra.mxu0 0.0
        %1518 = vmatprep.subr.mxu0 0.0
        %1519 = vmatpush2.msra.mxu0 0.0
        %1520 = vmatprep.subr.mxu0 0.0
        %1521 = vmatpush2.msra.mxu0 0.0
        %1522 = vmatprep.mubr.f32.mxu0 0.0
        %1523 = vmatmul.mubr.f32.gmra.mxu0 %v1447
        %v1524 = vpop.f32.mrf.mxu0
        %v1525 = vadd.f32 %v1422, %v1524
        %v1526 = vpop.f32.mrf.mxu0
        %1527 = vmatprep.mubr.f32.mxu0 0.0
        %1528 = vmatmul.mubr.f32.gmra.mxu0 %v1450
        %v1529 = vpop.f32.mrf.mxu0
        %v1530 = vadd.f32 %v1427, %v1529
        %v1531 = vpop.f32.mrf.mxu0
        %1532 = vmatprep.mubr.f32.mxu0 0.0
        %1533 = vmatmul.mubr.f32.gmra.mxu0 %v1453
        %v1534 = vpop.f32.mrf.mxu0
        %v1535 = vadd.f32 %v1432, %v1534
        %v1536 = vpop.f32.mrf.mxu0
        %1537 = vmatprep.mubr.f32.mxu0 0.0
        %1538 = vmatmul.mubr.f32.gmra.mxu0 %v1456
        %v1539 = vpop.f32.mrf.mxu0
        %v1540 = vadd.f32 %v1437, %v1539
        %v1541 = vpop.f32.mrf.mxu0
        %1542 = vdwg.mxu0
        %s1543 = scalar_lea.vmem %s3, 64
        %v1544 = vld [vmem:[%s1543] sm:$0xff]
        %v1545 = vld [vmem:[%s1543 + $0x8] sm:$0xff]
        %v1546 = vld [vmem:[%s1543 + $0x10] sm:$0xff]
        %v1547 = vld [vmem:[%s1543 + $0x18] sm:$0xff]
        %1548 = vrot.lane.b32.xlu0 %v1324, 116
        %v1549 = vpop.permute.xlu0 %1548
        %1550 = vrot.lane.b32.xlu0 %v1325, 116
        %v1551 = vpop.permute.xlu0 %1550
        %v1555 = vsel %vm543, %v1544, 0
        %v1558 = vsel %vm543, %v1545, 0
        %v1561 = vsel %vm543, %v1546, 0
        %v1564 = vsel %vm543, %v1547, 0
        %1566 = vmatprep.subr.mxu0 0.0
        %1567 = vmatpush1.msra.mxu0 0.0
        %1568 = vmatprep.subr.mxu0 0.0
        %1569 = vmatpush1.msra.mxu0 0.0
        %1570 = vmatprep.subr.mxu0 0.0
        %1571 = vmatpush1.msra.mxu0 0.0
        %1572 = vmatprep.subr.mxu0 0.0
        %1573 = vmatpush1.msra.mxu0 0.0
        %1574 = vmatprep.subr.mxu0 0.0
        %1575 = vmatpush1.msra.mxu0 0.0
        %1576 = vmatprep.subr.mxu0 0.0
        %1577 = vmatpush1.msra.mxu0 0.0
        %1578 = vmatprep.subr.mxu0 0.0
        %1579 = vmatpush1.msra.mxu0 0.0
        %1580 = vmatprep.subr.mxu0 0.0
        %1581 = vmatpush1.msra.mxu0 0.0
        %1582 = vmatprep.subr.mxu0 0.0
        %1583 = vmatpush1.msra.mxu0 0.0
        %1584 = vmatprep.subr.mxu0 0.0
        %1585 = vmatpush1.msra.mxu0 0.0
        %1586 = vmatprep.subr.mxu0 0.0
        %1587 = vmatpush1.msra.mxu0 0.0
        %1588 = vmatprep.subr.mxu0 0.0
        %1589 = vmatpush1.msra.mxu0 0.0
        %1590 = vmatprep.subr.mxu0 0.0
        %1591 = vmatpush1.msra.mxu0 0.0
        %1592 = vmatprep.subr.mxu0 0.0
        %1593 = vmatpush1.msra.mxu0 0.0
        %1594 = vmatprep.subr.mxu0 0.0
        %1595 = vmatpush1.msra.mxu0 %v1551
        %1596 = vmatprep.subr.mxu0 0.0
        %1597 = vmatpush1.msra.mxu0 %v1549
        %1598 = vmatprep.subr.mxu0 0.0
        %1599 = vmatpush2.msra.mxu0 0.0
        %1600 = vmatprep.subr.mxu0 0.0
        %1601 = vmatpush2.msra.mxu0 0.0
        %1602 = vmatprep.subr.mxu0 0.0
        %1603 = vmatpush2.msra.mxu0 0.0
        %1604 = vmatprep.subr.mxu0 0.0
        %1605 = vmatpush2.msra.mxu0 0.0
        %1606 = vmatprep.subr.mxu0 0.0
        %1607 = vmatpush2.msra.mxu0 0.0
        %1608 = vmatprep.subr.mxu0 0.0
        %1609 = vmatpush2.msra.mxu0 0.0
        %1610 = vmatprep.subr.mxu0 0.0
        %1611 = vmatpush2.msra.mxu0 0.0
        %1612 = vmatprep.subr.mxu0 0.0
        %1613 = vmatpush2.msra.mxu0 0.0
        %1614 = vmatprep.subr.mxu0 0.0
        %1615 = vmatpush2.msra.mxu0 0.0
        %1616 = vmatprep.subr.mxu0 0.0
        %1617 = vmatpush2.msra.mxu0 0.0
        %1618 = vmatprep.subr.mxu0 0.0
        %1619 = vmatpush2.msra.mxu0 0.0
        %1620 = vmatprep.subr.mxu0 0.0
        %1621 = vmatpush2.msra.mxu0 0.0
        %1622 = vmatprep.subr.mxu0 0.0
        %1623 = vmatpush2.msra.mxu0 0.0
        %1624 = vmatprep.subr.mxu0 0.0
        %1625 = vmatpush2.msra.mxu0 0.0
        %1626 = vmatprep.subr.mxu0 0.0
        %1627 = vmatpush2.msra.mxu0 0.0
        %1628 = vmatprep.subr.mxu0 0.0
        %1629 = vmatpush2.msra.mxu0 0.0
        %1630 = vmatprep.mubr.f32.mxu0 0.0
        %1631 = vmatmul.mubr.f32.gmra.mxu0 %v1555
        %v1632 = vpop.f32.mrf.mxu0
        %v1633 = vadd.f32 0.0, %v1632
        %v1634 = vpop.f32.mrf.mxu0
        %1635 = vmatprep.mubr.f32.mxu0 0.0
        %1636 = vmatmul.mubr.f32.gmra.mxu0 %v1558
        %v1637 = vpop.f32.mrf.mxu0
        %v1638 = vadd.f32 0.0, %v1637
        %v1639 = vpop.f32.mrf.mxu0
        %1640 = vmatprep.mubr.f32.mxu0 0.0
        %1641 = vmatmul.mubr.f32.gmra.mxu0 %v1561
        %v1642 = vpop.f32.mrf.mxu0
        %v1643 = vadd.f32 0.0, %v1642
        %v1644 = vpop.f32.mrf.mxu0
        %1645 = vmatprep.mubr.f32.mxu0 0.0
        %1646 = vmatmul.mubr.f32.gmra.mxu0 %v1564
        %v1647 = vpop.f32.mrf.mxu0
        %v1648 = vadd.f32 0.0, %v1647
        %v1649 = vpop.f32.mrf.mxu0
        %1650 = vdwg.mxu0
        %v1651 = vadd.f32 %v1525, %v1633
        %v1652 = vadd.f32 %v1530, %v1638
        %v1653 = vadd.f32 %v1535, %v1643
        %v1654 = vadd.f32 %v1540, %v1648
        %s1655 = scalar_lea.vmem %s3, 96
        %v1656 = vld [vmem:[%s1655] sm:$0xff]
        %v1657 = vld [vmem:[%s1655 + $0x8] sm:$0xff]
        %v1658 = vld [vmem:[%s1655 + $0x10] sm:$0xff]
        %v1659 = vld [vmem:[%s1655 + $0x18] sm:$0xff]
        %1660 = vrot.lane.b32.xlu0 %v1324, 114
        %v1661 = vpop.permute.xlu0 %1660
        %1662 = vrot.lane.b32.xlu0 %v1325, 114
        %v1663 = vpop.permute.xlu0 %1662
        %v1667 = vsel %vm543, %v1656, 0
        %v1670 = vsel %vm543, %v1657, 0
        %v1673 = vsel %vm543, %v1658, 0
        %v1676 = vsel %vm543, %v1659, 0
        %1678 = vmatprep.subr.mxu0 0.0
        %1679 = vmatpush1.msra.mxu0 0.0
        %1680 = vmatprep.subr.mxu0 0.0
        %1681 = vmatpush1.msra.mxu0 0.0
        %1682 = vmatprep.subr.mxu0 0.0
        %1683 = vmatpush1.msra.mxu0 0.0
        %1684 = vmatprep.subr.mxu0 0.0
        %1685 = vmatpush1.msra.mxu0 0.0
        %1686 = vmatprep.subr.mxu0 0.0
        %1687 = vmatpush1.msra.mxu0 0.0
        %1688 = vmatprep.subr.mxu0 0.0
        %1689 = vmatpush1.msra.mxu0 0.0
        %1690 = vmatprep.subr.mxu0 0.0
        %1691 = vmatpush1.msra.mxu0 0.0
        %1692 = vmatprep.subr.mxu0 0.0
        %1693 = vmatpush1.msra.mxu0 0.0
        %1694 = vmatprep.subr.mxu0 0.0
        %1695 = vmatpush1.msra.mxu0 0.0
        %1696 = vmatprep.subr.mxu0 0.0
        %1697 = vmatpush1.msra.mxu0 0.0
        %1698 = vmatprep.subr.mxu0 0.0
        %1699 = vmatpush1.msra.mxu0 0.0
        %1700 = vmatprep.subr.mxu0 0.0
        %1701 = vmatpush1.msra.mxu0 0.0
        %1702 = vmatprep.subr.mxu0 0.0
        %1703 = vmatpush1.msra.mxu0 0.0
        %1704 = vmatprep.subr.mxu0 0.0
        %1705 = vmatpush1.msra.mxu0 0.0
        %1706 = vmatprep.subr.mxu0 0.0
        %1707 = vmatpush1.msra.mxu0 %v1663
        %1708 = vmatprep.subr.mxu0 0.0
        %1709 = vmatpush1.msra.mxu0 %v1661
        %1710 = vmatprep.subr.mxu0 0.0
        %1711 = vmatpush2.msra.mxu0 0.0
        %1712 = vmatprep.subr.mxu0 0.0
        %1713 = vmatpush2.msra.mxu0 0.0
        %1714 = vmatprep.subr.mxu0 0.0
        %1715 = vmatpush2.msra.mxu0 0.0
        %1716 = vmatprep.subr.mxu0 0.0
        %1717 = vmatpush2.msra.mxu0 0.0
        %1718 = vmatprep.subr.mxu0 0.0
        %1719 = vmatpush2.msra.mxu0 0.0
        %1720 = vmatprep.subr.mxu0 0.0
        %1721 = vmatpush2.msra.mxu0 0.0
        %1722 = vmatprep.subr.mxu0 0.0
        %1723 = vmatpush2.msra.mxu0 0.0
        %1724 = vmatprep.subr.mxu0 0.0
        %1725 = vmatpush2.msra.mxu0 0.0
        %1726 = vmatprep.subr.mxu0 0.0
        %1727 = vmatpush2.msra.mxu0 0.0
        %1728 = vmatprep.subr.mxu0 0.0
        %1729 = vmatpush2.msra.mxu0 0.0
        %1730 = vmatprep.subr.mxu0 0.0
        %1731 = vmatpush2.msra.mxu0 0.0
        %1732 = vmatprep.subr.mxu0 0.0
        %1733 = vmatpush2.msra.mxu0 0.0
        %1734 = vmatprep.subr.mxu0 0.0
        %1735 = vmatpush2.msra.mxu0 0.0
        %1736 = vmatprep.subr.mxu0 0.0
        %1737 = vmatpush2.msra.mxu0 0.0
        %1738 = vmatprep.subr.mxu0 0.0
        %1739 = vmatpush2.msra.mxu0 0.0
        %1740 = vmatprep.subr.mxu0 0.0
        %1741 = vmatpush2.msra.mxu0 0.0
        %1742 = vmatprep.mubr.f32.mxu0 0.0
        %1743 = vmatmul.mubr.f32.gmra.mxu0 %v1667
        %v1744 = vpop.f32.mrf.mxu0
        %v1745 = vadd.f32 0.0, %v1744
        %v1746 = vpop.f32.mrf.mxu0
        %1747 = vmatprep.mubr.f32.mxu0 0.0
        %1748 = vmatmul.mubr.f32.gmra.mxu0 %v1670
        %v1749 = vpop.f32.mrf.mxu0
        %v1750 = vadd.f32 0.0, %v1749
        %v1751 = vpop.f32.mrf.mxu0
        %1752 = vmatprep.mubr.f32.mxu0 0.0
        %1753 = vmatmul.mubr.f32.gmra.mxu0 %v1673
        %v1754 = vpop.f32.mrf.mxu0
        %v1755 = vadd.f32 0.0, %v1754
        %v1756 = vpop.f32.mrf.mxu0
        %1757 = vmatprep.mubr.f32.mxu0 0.0
        %1758 = vmatmul.mubr.f32.gmra.mxu0 %v1676
        %v1759 = vpop.f32.mrf.mxu0
        %v1760 = vadd.f32 0.0, %v1759
        %v1761 = vpop.f32.mrf.mxu0
        %1762 = vdwg.mxu0
        %v1763 = vadd.f32 %v1651, %v1745
        %v1764 = vadd.f32 %v1652, %v1750
        %v1765 = vadd.f32 %v1653, %v1755
        %v1766 = vadd.f32 %v1654, %v1760
        %v1767 = vld [vmem:[%s4] sm:$0xff]
        %v1768 = vld [vmem:[%s4 + $0x8] sm:$0xff]
        %v1769 = vld [vmem:[%s4 + $0x10] sm:$0xff]
        %v1770 = vld [vmem:[%s4 + $0x18] sm:$0xff]
        %1772 = vset.pattern.permute.xlu0 0
        %1773 = vperm.xlu0 %1772, %v1767
        %v1774 = vpop.permute.xlu0 %1773
        %1777 = vset.pattern.permute.xlu0 0
        %1778 = vperm.xlu0 %1777, %v1768
        %v1779 = vpop.permute.xlu0 %1778
        %1782 = vset.pattern.permute.xlu0 0
        %1783 = vperm.xlu0 %1782, %v1769
        %v1784 = vpop.permute.xlu0 %1783
        %1787 = vset.pattern.permute.xlu0 0
        %1788 = vperm.xlu0 %1787, %v1770
        %v1789 = vpop.permute.xlu0 %1788
        %v1791 = vadd.f32 %v1763, %v1774
        %v1792 = vadd.f32 %v1764, %v1779
        %v1793 = vadd.f32 %v1765, %v1784
        %v1794 = vadd.f32 %v1766, %v1789
        %v1795 = vld [vmem:[#allocation4] sm:$0xff]
        %v1796 = vld [vmem:[#allocation4 + $0x8] sm:$0xff]
        %v1797 = vld [vmem:[#allocation4 + $0x10] sm:$0xff]
        %v1798 = vld [vmem:[#allocation4 + $0x18] sm:$0xff]
        %v1799 = vmul.f32 %v1795, 0.2
        %v1800 = vmul.f32 %v1796, 0.2
        %v1801 = vmul.f32 %v1797, 0.2
        %v1802 = vmul.f32 %v1798, 0.2
        %v1803 = vld [vmem:[#allocation5] sm:$0xff]
        %v1804 = vld [vmem:[#allocation5 + $0x8] sm:$0xff]
        %v1805 = vld [vmem:[#allocation5 + $0x10] sm:$0xff]
        %v1806 = vld [vmem:[#allocation5 + $0x18] sm:$0xff]
        %v1807 = vsub.f32 1.0, %v1803
        %v1808 = vsub.f32 1.0, %v1804
        %v1809 = vsub.f32 1.0, %v1805
        %v1810 = vsub.f32 1.0, %v1806
        %v1811 = vmul.f32 %v1799, %v1807
        %v1812 = vmul.f32 %v1800, %v1808
        %v1813 = vmul.f32 %v1801, %v1809
        %v1814 = vmul.f32 %v1802, %v1810
        %v1815 = vadd.f32 %v1811, %v1791
        %v1816 = vadd.f32 %v1812, %v1792
        %v1817 = vadd.f32 %v1813, %v1793
        %v1818 = vadd.f32 %v1814, %v1794
        %vm1819 = vcmp.gt.f32.partialorder %v1815, 0.5
        %vm1820 = vcmp.gt.f32.partialorder %v1816, 0.5
        %vm1821 = vcmp.gt.f32.partialorder %v1817, 0.5
        %vm1822 = vcmp.gt.f32.partialorder %v1818, 0.5
        %v1823 = vsel %vm1819, 1, 0
        %v1824 = vsel %vm1820, 1, 0
        %v1825 = vsel %vm1821, 1, 0
        %v1826 = vsel %vm1822, 1, 0
        %v1827 = vcvt.s32.f32 %v1823
        %v1828 = vcvt.s32.f32 %v1824
        %v1829 = vcvt.s32.f32 %v1825
        %v1830 = vcvt.s32.f32 %v1826
        %vm1831 = vcmask 15360
        %1832 = vst.msk [vmem:[#allocation4] sm:$0xff] %vm1831, %v1815
        %1833 = vst.msk [vmem:[#allocation4 + $0x8] sm:$0xff] %vm1831, %v1816
        %1834 = vst.msk [vmem:[#allocation4 + $0x10] sm:$0xff] %vm1831, %v1817
        %1835 = vst.msk [vmem:[#allocation4 + $0x18] sm:$0xff] %vm1831, %v1818
        %1836 = vst.msk [vmem:[#allocation5] sm:$0xff] %vm1831, %v1827
        %1837 = vst.msk [vmem:[#allocation5 + $0x8] sm:$0xff] %vm1831, %v1828
        %1838 = vst.msk [vmem:[#allocation5 + $0x10] sm:$0xff] %vm1831, %v1829
        %1839 = vst.msk [vmem:[#allocation5 + $0x18] sm:$0xff] %vm1831, %v1830
        %v1840 = vld [vmem:[%s5] sm:$0xff]
        %v1841 = vld [vmem:[%s5 + $0x8] sm:$0xff]
        %v1842 = vld [vmem:[%s5 + $0x10] sm:$0xff]
        %v1843 = vld [vmem:[%s5 + $0x18] sm:$0xff]
        %1845 = vset.pattern.permute.xlu0 0
        %1846 = vperm.xlu0 %1845, %v1840
        %v1847 = vpop.permute.xlu0 %1846
        %1850 = vset.pattern.permute.xlu0 0
        %1851 = vperm.xlu0 %1850, %v1841
        %v1852 = vpop.permute.xlu0 %1851
        %1855 = vset.pattern.permute.xlu0 0
        %1856 = vperm.xlu0 %1855, %v1842
        %v1857 = vpop.permute.xlu0 %1856
        %1860 = vset.pattern.permute.xlu0 0
        %1861 = vperm.xlu0 %1860, %v1843
        %v1862 = vpop.permute.xlu0 %1861
        %v1864 = vmul.f32 %v1827, %v1847
        %v1865 = vmul.f32 %v1828, %v1852
        %v1866 = vmul.f32 %v1829, %v1857
        %v1867 = vmul.f32 %v1830, %v1862
        %v1868 = vsel %vm1831, %v1864, 0.0
        %v1869 = vsel %vm1831, %v1865, 0.0
        %v1870 = vadd.f32 %v1868, %v1869
        %v1871 = vsel %vm1831, %v1866, 0.0
        %v1872 = vadd.f32 %v1870, %v1871
        %v1873 = vsel %vm1831, %v1867, 0.0
        %v1874 = vadd.f32 %v1872, %v1873
        %v1875 = vrot.slane %v1874, 4
        %v1876 = vadd.f32 %v1874, %v1875
        %v1877 = vrot.slane %v1876, 2
        %v1878 = vadd.f32 %v1876, %v1877
        %v1879 = vrot.slane %v1878, 1
        %v1880 = vadd.f32 %v1878, %v1879
        %v1881 = vld [vmem:[#allocation6] sm:$0x1]
        %1883 = vset.pattern.permute.xlu0 0
        %1884 = vperm.xlu0 %1883, %v1881
        %v1885 = vpop.permute.xlu0 %1884
        %v1887 = vlaneseq
        %v1888 = vshrl.u32 %v1887, 7
        %v1889 = vsub.s32 0, %v1888
        %v1890 = vrot.slane %v1885, %v1889
        %v1891 = vadd.f32 %v1880, %v1890
        %v1892 = vld [vmem:[#allocation7] sm:$0x1]
        %v1893 = vadd.f32 %v1892, %v1891
        %vm1894 = vcmask 8192
        %1895 = vst.msk [vmem:[#allocation7] sm:$0x1] %vm1894, %v1893
        // Predicated region
        $region53: #{ssiamese_forward.3} parent=47 // pred_check
          %p1896 = pneg %p186
        $region54: #{ssiamese_forward.3} parent=47 // pred_check_branch
          %1898 = sbr.rel (%p1896) target = $region56
        $region55: #{ssiamese_forward.3} parent=47 // pred_region
          %s1900 = ssub.s32 16, 16
          %1901 = vsyncadd [#allocation8], %s1900
          %s1903 = sshll.u32 [#allocation7], 4
          %s1904 = int_to_ptr.vmem [resolvable:$true] %s1903
          %1906 = dma.vmem_to_hbm [thread:$0]  %s1904, 16, %s7, [#allocation8]
        $region56: #{ssiamese_forward.3} parent=47 // pred_fallthru
          _
        // Predicated region
        $region57: #{ssiamese_forward.3} parent=47 // pred_check
          %p1907 = pneg %p186
        $region58: #{ssiamese_forward.3} parent=47 // pred_check_branch
          %1909 = sbr.rel (%p1907) target = $region60
        $region59: #{ssiamese_forward.3} parent=47 // pred_region
          %1910 = dma.done [#allocation8], 16
        $region60: #{ssiamese_forward.3} parent=47 // pred_fallthru
          _
      $region48: #{ssiamese_forward.3} parent=5 // pred_fallthru
        _
      %p1911 = scmp.le.s32.totalorder 2, %s16
      // Predicated region
      $region61: #{ssiamese_forward.3} parent=5 // pred_check
        %p1912 = pneg %p1911
      $region62: #{ssiamese_forward.3} parent=5 // pred_check_branch
        %1914 = sbr.rel (%p1912) target = $region64
      $region63: #{ssiamese_forward.3} parent=5 // pred_region
        %s1915 = ssub.s32 %s16, 2
      $region64: #{ssiamese_forward.3} parent=5 // pred_fallthru
        _
    $region6: #{ssiamese_forward.3} parent=1 // loop_footer
      %s20 = sadd.s32 1, %s16
    $region7: #{ssiamese_forward.3} parent=1 // loop_footer_branch
      %15 = sbr.rel target = $region3
    $region8: #{ssiamese_forward.3} parent=1 // loop_exit
      _
    %1916 = vsyncpa [#allocation8], 1
    %s1917 = scalar_lea.sflag [#allocation8], 1
    %1918 = vsyncpa %s1917, 1

</llo_original>
